<compile_context>
chip_gen: v5e
topology: v5e:2x2
jax: 0.10.0
libtpu: 0.0.40
codegen_flags: <defaults>
</compile_context>

<pallas_src>
import jax
import jax.numpy as jnp
from jax.experimental import pallas as pl
from jax.experimental.pallas import tpu as pltpu


def _round_up(a: int, m: int) -> int:
    return (a + m - 1) // m * m


_OFFSETS = tuple((dy, dx) for dy in (-1, 0, 1) for dx in (-1, 0, 1))


def _make_film_kernel(H, W, Cin, cin_p, tco, weight_resident):
    HW = H * W
    Wp = W + 2

    def kernel(x_ref, c_ref, w_ref, o_ref, col_ref):
        # x_ref  : (1, tco, HW)             x tile, natural layout (lane p = y*W + x)
        # c_ref  : (1, cin_p, (H+2)*(W+2))  zero-padded condition slab (per batch elem)
        # w_ref  : (n_w, 2*tco, 9*cin_p)    fused [gain; bias] im2col weight (+bias col)
        # o_ref  : (1, tco, HW)
        # col_ref: (9*cin_p, HW) f32        im2col tap slab (VMEM scratch)
        ct = pl.program_id(1)

        # Build the tap slab once per batch element; reused by every cout tile.
        @pl.when(ct == 0)
        def _fill_tap_slab():
            # TODO(synk): this static unroll is O(9*H) statements and keeps the whole
            # condition/tap slab VMEM-resident; for very large H*W add halo-aware
            # spatial (lane) tiling and a fori_loop-based fill.
            for k, (dy, dx) in enumerate(_OFFSETS):
                dst = k * cin_p
                for y in range(H):
                    src = (y + 1 + dy) * Wp + (1 + dx)
                    col_ref[pl.ds(dst, cin_p), pl.ds(y * W, W)] = (
                        c_ref[0, :, pl.ds(src, W)].astype(jnp.float32))
            # Constant-one row pairing with the conv-bias weight column (k=0, ci=Cin).
            col_ref[pl.ds(Cin, 1), :] = jnp.ones((1, HW), jnp.float32)

        w_tile = (w_ref[ct] if weight_resident else w_ref[0]).astype(jnp.float32)
        # Single MXU dot; gain rows [0:tco], bias rows [tco:2*tco]; conv bias folded in.
        # Default MXU precision for f32 inputs (bf16 passes) — covered by test tol.
        res = jnp.dot(w_tile, col_ref[...], preferred_element_type=jnp.float32)
        gain = res[:tco, :]
        bias = res[tco:, :]
        xv = x_ref[0].astype(jnp.float32)
        o_ref[0] = (xv * gain + bias).astype(o_ref.dtype)

    return kernel


def film(x, condition, weight, bias):
    """FiLM.forward: x * gain + bias with (gain, bias) = conv3x3(condition).chunk(2, 1).

    x         : (B, Cout, H, W)
    condition : (B, Cin,  H, W)
    weight    : (2*Cout, Cin, 3, 3)   nn.Conv2d weight (OIHW)
    bias      : (2*Cout,)             nn.Conv2d bias
    """
    B, Cout, H, W = x.shape
    Bc, Cin, Hc, Wc = condition.shape
    assert (Bc, Hc, Wc) == (B, H, W)
    assert weight.shape == (2 * Cout, Cin, 3, 3)
    assert bias.shape == (2 * Cout,)

    HW = H * W
    CP = (H + 2) * (W + 2)
    cin_p = _round_up(Cin + 1, 8)            # +1 row reserved for the folded conv bias
    K = 9 * cin_p

    x_item = jnp.dtype(x.dtype).itemsize
    c_item = jnp.dtype(condition.dtype).itemsize
    sublane = {4: 8, 2: 16, 1: 32}.get(x_item, 8)

    # ---- generation-aware VMEM budget ---------------------------------------
    try:
        vmem_cap = int(pltpu.get_tpu_info().vmem_capacity_bytes)
        if vmem_cap <= 0:
            raise ValueError
    except Exception:
        vmem_cap = 64 * 1024 * 1024          # conservative (v7x-sized) fallback
    budget = int(vmem_cap * 0.55)

    HW_l = _round_up(max(HW, 128), 128)      # internal lane footprints (estimates)
    CP_l = _round_up(max(CP, 128), 128)
    w_bytes = 2 * Cout * K * 4
    fixed = (2 * cin_p * CP_l * c_item       # condition slab, double-buffered
             + K * HW_l * 4                  # im2col tap slab (f32 scratch)
             + 2 * w_bytes)                  # fused weight (counted double-buffered)
    per_row = HW_l * (4 * x_item + 4 * 4)    # x/out double buffers + f32 temporaries
    budget_rows = max(sublane, (budget - fixed) // per_row)

    if Cout <= budget_rows:
        tco = Cout                           # single cout tile; no (8,128) constraint
    else:
        tco = None
        t = (min(budget_rows, Cout) // sublane) * sublane
        while t >= sublane:
            if Cout % t == 0:
                tco = t
                break
            t -= sublane
        if tco is None:
            # No sublane-aligned divisor of Cout fits the budget; fall back to one tile.
            tco = Cout
    n_ct = Cout // tco

    weight_resident = (n_ct * 2 * tco * K * 4) <= 8 * 1024 * 1024

    # ---- layout plumbing (no HBM passes over x / out) ------------------------
    x2 = x.reshape(B, Cout, HW)                                          # free reshape

    c2 = jnp.pad(condition, ((0, 0), (0, cin_p - Cin), (1, 1), (1, 1)))
    c2 = c2.reshape(B, cin_p, CP)

    # Fused im2col weight: columns ordered (tap k, in-channel ci); rows per cout tile
    # are [gain rows ; bias rows]. Conv bias folded into column (k=0, ci=Cin).
    w_taps = jnp.transpose(weight.reshape(2 * Cout, Cin, 9), (0, 2, 1))  # (2Cout,9,Cin)
    w_taps = jnp.pad(w_taps, ((0, 0), (0, 0), (0, cin_p - Cin)))
    w_taps = w_taps.at[:, 0, Cin].set(bias)
    w_flat = w_taps.reshape(2 * Cout, K).astype(jnp.float32)
    w_tiled = jnp.concatenate(
        [w_flat[:Cout].reshape(n_ct, tco, K), w_flat[Cout:].reshape(n_ct, tco, K)],
        axis=1)                                                          # (n_ct,2tco,K)

    if weight_resident:
        w_spec = pl.BlockSpec((n_ct, 2 * tco, K), lambda b, c: (0, 0, 0))
    else:
        w_spec = pl.BlockSpec((1, 2 * tco, K), lambda b, c: (c, 0, 0))

    kernel = _make_film_kernel(H, W, Cin, cin_p, tco, weight_resident)

    out = pl.pallas_call(
        kernel,
        out_shape=jax.ShapeDtypeStruct((B, Cout, HW), x.dtype),
        grid_spec=pltpu.PrefetchScalarGridSpec(
            num_scalar_prefetch=0,
            grid=(B, n_ct),
            in_specs=[
                pl.BlockSpec((1, tco, HW), lambda b, c: (b, c, 0)),      # x tile
                pl.BlockSpec((1, cin_p, CP), lambda b, c: (b, 0, 0)),    # condition slab
                w_spec,                                                  # fused weight
            ],
            out_specs=pl.BlockSpec((1, tco, HW), lambda b, c: (b, c, 0)),
            scratch_shapes=[pltpu.VMEM((K, HW), jnp.float32)],
        ),
        compiler_params=pltpu.CompilerParams(
            # Batch axis feeds both v7x TensorCores; cout axis must be sequential
            # because the tap slab is filled at ct == 0 and reused across tiles.
            dimension_semantics=("parallel", "arbitrary"),
            vmem_limit_bytes=int(vmem_cap * 0.85),
        ),
    )(x2, c2, w_tiled)

    return out.reshape(B, Cout, H, W)


if __name__ == "__main__":
    key = jax.random.PRNGKey(0)
    kx, kc, kw, kb = jax.random.split(key, 4)

    B, Cin, Cout, H, W = 2, 3, 4, 16, 16
    x = jax.random.normal(kx, (B, Cout, H, W), dtype=jnp.float32)
    condition = jax.random.normal(kc, (B, Cin, H, W), dtype=jnp.float32)
    # nn.Conv2d(in_channels=Cin, out_channels=2*Cout, kernel_size=3, padding=1) params
    weight = 0.1 * jax.random.normal(kw, (2 * Cout, Cin, 3, 3), dtype=jnp.float32)
    bias = 0.1 * jax.random.normal(kb, (2 * Cout,), dtype=jnp.float32)

    y = jax.block_until_ready(jax.jit(film)(x, condition, weight, bias))

    # Pure-JAX reference matching the PyTorch module.
    conv = jax.lax.conv_general_dilated(
        condition, weight, window_strides=(1, 1), padding=((1, 1), (1, 1)),
        dimension_numbers=("NCHW", "OIHW", "NCHW"),
        precision=jax.lax.Precision.HIGHEST)
    conv = conv + bias[None, :, None, None]
    gain_ref, bias_ref = jnp.split(conv, 2, axis=1)
    ref = x * gain_ref + bias_ref

    assert y.shape == ref.shape, (y.shape, ref.shape)
    err = float(jnp.max(jnp.abs(y - ref)))
    # Tolerance covers the default (bf16-pass) MXU precision of the in-kernel f32 dot;
    # any stencil/indexing bug produces O(0.1) errors and is still caught.
    assert err < 1e-2, f"max abs error {err}"
    print("KERNEL_OK")
</pallas_src>

<mosaic_0001>
module attributes {stable_mosaic.version = 11 : i64} {
  func.func @kernel(%arg0: i32, %arg1: i32, %arg2: memref<1x4x256xf32, #tpu.memory_space<vmem>>, %arg3: memref<1x8x324xf32, #tpu.memory_space<vmem>>, %arg4: memref<1x8x72xf32, #tpu.memory_space<vmem>>, %arg5: memref<1x4x256xf32, #tpu.memory_space<vmem>>, %arg6: memref<72x256xf32, #tpu.memory_space<vmem>>) attributes {dimension_semantics = [#tpu.dimension_semantics<parallel>, #tpu.dimension_semantics<arbitrary>], iteration_bounds = array<i64: 2, 1>, scalar_prefetch = 0 : i64, scratch_operands = 1 : i64, tpu.core_type = #tpu.core_type<tc>, window_params = [{transform_indices = @transform_0, window_bounds = array<i64: 1, 4, 256>}, {transform_indices = @transform_1, window_bounds = array<i64: 1, 8, 324>}, {pipeline_mode = #tpu.pipeline_mode<synchronous>, transform_indices = @transform_2, window_bounds = array<i64: 1, 8, 72>}, {transform_indices = @transform_3, window_bounds = array<i64: 1, 4, 256>}]} {
    %c0_i32 = arith.constant 0 : i32
    %0 = arith.cmpi eq, %arg1, %c0_i32 : i32
    %1 = arith.extui %0 : i1 to i32
    %c0_i32_0 = arith.constant 0 : i32
    %2 = arith.cmpi ne, %1, %c0_i32_0 : i32
    scf.if %2 {
      %c0_10 = arith.constant 0 : index
      %c0_11 = arith.constant 0 : index
      %c0_12 = arith.constant 0 : index
      %17 = vector.load %arg3[%c0_10, %c0_11, %c0_12] : memref<1x8x324xf32, #tpu.memory_space<vmem>>, vector<1x8x16xf32>
      %18 = vector.shape_cast %17 : vector<1x8x16xf32> to vector<8x16xf32>
      %c0_13 = arith.constant 0 : index
      %c0_14 = arith.constant 0 : index
      %19 = vector.load %arg6[%c0_13, %c0_14] : memref<72x256xf32, #tpu.memory_space<vmem>>, vector<8x16xf32>
      tpu.vector_store %arg6[%c0_13, %c0_14], %18 {strides = array<i32>} : memref<72x256xf32, #tpu.memory_space<vmem>>, vector<8x16xf32>,
      %c0_15 = arith.constant 0 : index
      %c0_16 = arith.constant 0 : index
      %c18 = arith.constant 18 : index
      %20 = vector.load %arg3[%c0_15, %c0_16, %c18] : memref<1x8x324xf32, #tpu.memory_space<vmem>>, vector<1x8x16xf32>
      %21 = vector.shape_cast %20 : vector<1x8x16xf32> to vector<8x16xf32>
      %c0_17 = arith.constant 0 : index
      %c16 = arith.constant 16 : index
      %22 = vector.load %arg6[%c0_17, %c16] : memref<72x256xf32, #tpu.memory_space<vmem>>, vector<8x16xf32>
      tpu.vector_store %arg6[%c0_17, %c16], %21 {strides = array<i32>} : memref<72x256xf32, #tpu.memory_space<vmem>>, vector<8x16xf32>,
      %c0_18 = arith.constant 0 : index
      %c0_19 = arith.constant 0 : index
      %c36 = arith.constant 36 : index
      %23 = vector.load %arg3[%c0_18, %c0_19, %c36] : memref<1x8x324xf32, #tpu.memory_space<vmem>>, vector<1x8x16xf32>
      %24 = vector.shape_cast %23 : vector<1x8x16xf32> to vector<8x16xf32>
      %c0_20 = arith.constant 0 : index
      %c32 = arith.constant 32 : index
      %25 = vector.load %arg6[%c0_20, %c32] : memref<72x256xf32, #tpu.memory_space<vmem>>, vector<8x16xf32>
      tpu.vector_store %arg6[%c0_20, %c32], %24 {strides = array<i32>} : memref<72x256xf32, #tpu.memory_space<vmem>>, vector<8x16xf32>,
      %c0_21 = arith.constant 0 : index
      %c0_22 = arith.constant 0 : index
      %c54 = arith.constant 54 : index
      %26 = vector.load %arg3[%c0_21, %c0_22, %c54] : memref<1x8x324xf32, #tpu.memory_space<vmem>>, vector<1x8x16xf32>
      %27 = vector.shape_cast %26 : vector<1x8x16xf32> to vector<8x16xf32>
      %c0_23 = arith.constant 0 : index
      %c48 = arith.constant 48 : index
      %28 = vector.load %arg6[%c0_23, %c48] : memref<72x256xf32, #tpu.memory_space<vmem>>, vector<8x16xf32>
      tpu.vector_store %arg6[%c0_23, %c48], %27 {strides = array<i32>} : memref<72x256xf32, #tpu.memory_space<vmem>>, vector<8x16xf32>,
      %c0_24 = arith.constant 0 : index
      %c0_25 = arith.constant 0 : index
      %c72 = arith.constant 72 : index
      %29 = vector.load %arg3[%c0_24, %c0_25, %c72] : memref<1x8x324xf32, #tpu.memory_space<vmem>>, vector<1x8x16xf32>
      %30 = vector.shape_cast %29 : vector<1x8x16xf32> to vector<8x16xf32>
      %c0_26 = arith.constant 0 : index
      %c64 = arith.constant 64 : index
      %31 = vector.load %arg6[%c0_26, %c64] : memref<72x256xf32, #tpu.memory_space<vmem>>, vector<8x16xf32>
      tpu.vector_store %arg6[%c0_26, %c64], %30 {strides = array<i32>} : memref<72x256xf32, #tpu.memory_space<vmem>>, vector<8x16xf32>,
      %c0_27 = arith.constant 0 : index
      %c0_28 = arith.constant 0 : index
      %c90 = arith.constant 90 : index
      %32 = vector.load %arg3[%c0_27, %c0_28, %c90] : memref<1x8x324xf32, #tpu.memory_space<vmem>>, vector<1x8x16xf32>
      %33 = vector.shape_cast %32 : vector<1x8x16xf32> to vector<8x16xf32>
      %c0_29 = arith.constant 0 : index
      %c80 = arith.constant 80 : index
      %34 = vector.load %arg6[%c0_29, %c80] : memref<72x256xf32, #tpu.memory_space<vmem>>, vector<8x16xf32>
      tpu.vector_store %arg6[%c0_29, %c80], %33 {strides = array<i32>} : memref<72x256xf32, #tpu.memory_space<vmem>>, vector<8x16xf32>,
      %c0_30 = arith.constant 0 : index
      %c0_31 = arith.constant 0 : index
      %c108 = arith.constant 108 : index
      %35 = vector.load %arg3[%c0_30, %c0_31, %c108] : memref<1x8x324xf32, #tpu.memory_space<vmem>>, vector<1x8x16xf32>
      %36 = vector.shape_cast %35 : vector<1x8x16xf32> to vector<8x16xf32>
      %c0_32 = arith.constant 0 : index
      %c96 = arith.constant 96 : index
      %37 = vector.load %arg6[%c0_32, %c96] : memref<72x256xf32, #tpu.memory_space<vmem>>, vector<8x16xf32>
      tpu.vector_store %arg6[%c0_32, %c96], %36 {strides = array<i32>} : memref<72x256xf32, #tpu.memory_space<vmem>>, vector<8x16xf32>,
      %c0_33 = arith.constant 0 : index
      %c0_34 = arith.constant 0 : index
      %c126 = arith.constant 126 : index
      %38 = vector.load %arg3[%c0_33, %c0_34, %c126] : memref<1x8x324xf32, #tpu.memory_space<vmem>>, vector<1x8x16xf32>
      %39 = vector.shape_cast %38 : vector<1x8x16xf32> to vector<8x16xf32>
      %c0_35 = arith.constant 0 : index
      %c112 = arith.constant 112 : index
      %40 = vector.load %arg6[%c0_35, %c112] : memref<72x256xf32, #tpu.memory_space<vmem>>, vector<8x16xf32>
      tpu.vector_store %arg6[%c0_35, %c112], %39 {strides = array<i32>} : memref<72x256xf32, #tpu.memory_space<vmem>>, vector<8x16xf32>,
      %c0_36 = arith.constant 0 : index
      %c0_37 = arith.constant 0 : index
      %c144 = arith.constant 144 : index
      %41 = vector.load %arg3[%c0_36, %c0_37, %c144] : memref<1x8x324xf32, #tpu.memory_space<vmem>>, vector<1x8x16xf32>
      %42 = vector.shape_cast %41 : vector<1x8x16xf32> to vector<8x16xf32>
      %c0_38 = arith.constant 0 : index
      %c128 = arith.constant 128 : index
      %43 = vector.load %arg6[%c0_38, %c128] : memref<72x256xf32, #tpu.memory_space<vmem>>, vector<8x16xf32>
      tpu.vector_store %arg6[%c0_38, %c128], %42 {strides = array<i32>} : memref<72x256xf32, #tpu.memory_space<vmem>>, vector<8x16xf32>,
      %c0_39 = arith.constant 0 : index
      %c0_40 = arith.constant 0 : index
      %c162 = arith.constant 162 : index
      %44 = vector.load %arg3[%c0_39, %c0_40, %c162] : memref<1x8x324xf32, #tpu.memory_space<vmem>>, vector<1x8x16xf32>
      %45 = vector.shape_cast %44 : vector<1x8x16xf32> to vector<8x16xf32>
      %c0_41 = arith.constant 0 : index
      %c144_42 = arith.constant 144 : index
      %46 = vector.load %arg6[%c0_41, %c144_42] : memref<72x256xf32, #tpu.memory_space<vmem>>, vector<8x16xf32>
      tpu.vector_store %arg6[%c0_41, %c144_42], %45 {strides = array<i32>} : memref<72x256xf32, #tpu.memory_space<vmem>>, vector<8x16xf32>,
      %c0_43 = arith.constant 0 : index
      %c0_44 = arith.constant 0 : index
      %c180 = arith.constant 180 : index
      %47 = vector.load %arg3[%c0_43, %c0_44, %c180] : memref<1x8x324xf32, #tpu.memory_space<vmem>>, vector<1x8x16xf32>
      %48 = vector.shape_cast %47 : vector<1x8x16xf32> to vector<8x16xf32>
      %c0_45 = arith.constant 0 : index
      %c160 = arith.constant 160 : index
      %49 = vector.load %arg6[%c0_45, %c160] : memref<72x256xf32, #tpu.memory_space<vmem>>, vector<8x16xf32>
      tpu.vector_store %arg6[%c0_45, %c160], %48 {strides = array<i32>} : memref<72x256xf32, #tpu.memory_space<vmem>>, vector<8x16xf32>,
      %c0_46 = arith.constant 0 : index
      %c0_47 = arith.constant 0 : index
      %c198 = arith.constant 198 : index
      %50 = vector.load %arg3[%c0_46, %c0_47, %c198] : memref<1x8x324xf32, #tpu.memory_space<vmem>>, vector<1x8x16xf32>
      %51 = vector.shape_cast %50 : vector<1x8x16xf32> to vector<8x16xf32>
      %c0_48 = arith.constant 0 : index
      %c176 = arith.constant 176 : index
      %52 = vector.load %arg6[%c0_48, %c176] : memref<72x256xf32, #tpu.memory_space<vmem>>, vector<8x16xf32>
      tpu.vector_store %arg6[%c0_48, %c176], %51 {strides = array<i32>} : memref<72x256xf32, #tpu.memory_space<vmem>>, vector<8x16xf32>,
      %c0_49 = arith.constant 0 : index
      %c0_50 = arith.constant 0 : index
      %c216 = arith.constant 216 : index
      %53 = vector.load %arg3[%c0_49, %c0_50, %c216] : memref<1x8x324xf32, #tpu.memory_space<vmem>>, vector<1x8x16xf32>
      %54 = vector.shape_cast %53 : vector<1x8x16xf32> to vector<8x16xf32>
      %c0_51 = arith.constant 0 : index
      %c192 = arith.constant 192 : index
      %55 = vector.load %arg6[%c0_51, %c192] : memref<72x256xf32, #tpu.memory_space<vmem>>, vector<8x16xf32>
      tpu.vector_store %arg6[%c0_51, %c192], %54 {strides = array<i32>} : memref<72x256xf32, #tpu.memory_space<vmem>>, vector<8x16xf32>,
      %c0_52 = arith.constant 0 : index
      %c0_53 = arith.constant 0 : index
      %c234 = arith.constant 234 : index
      %56 = vector.load %arg3[%c0_52, %c0_53, %c234] : memref<1x8x324xf32, #tpu.memory_space<vmem>>, vector<1x8x16xf32>
      %57 = vector.shape_cast %56 : vector<1x8x16xf32> to vector<8x16xf32>
      %c0_54 = arith.constant 0 : index
      %c208 = arith.constant 208 : index
      %58 = vector.load %arg6[%c0_54, %c208] : memref<72x256xf32, #tpu.memory_space<vmem>>, vector<8x16xf32>
      tpu.vector_store %arg6[%c0_54, %c208], %57 {strides = array<i32>} : memref<72x256xf32, #tpu.memory_space<vmem>>, vector<8x16xf32>,
      %c0_55 = arith.constant 0 : index
      %c0_56 = arith.constant 0 : index
      %c252 = arith.constant 252 : index
      %59 = vector.load %arg3[%c0_55, %c0_56, %c252] : memref<1x8x324xf32, #tpu.memory_space<vmem>>, vector<1x8x16xf32>
      %60 = vector.shape_cast %59 : vector<1x8x16xf32> to vector<8x16xf32>
      %c0_57 = arith.constant 0 : index
      %c224 = arith.constant 224 : index
      %61 = vector.load %arg6[%c0_57, %c224] : memref<72x256xf32, #tpu.memory_space<vmem>>, vector<8x16xf32>
      tpu.vector_store %arg6[%c0_57, %c224], %60 {strides = array<i32>} : memref<72x256xf32, #tpu.memory_space<vmem>>, vector<8x16xf32>,
      %c0_58 = arith.constant 0 : index
      %c0_59 = arith.constant 0 : index
      %c270 = arith.constant 270 : index
      %62 = vector.load %arg3[%c0_58, %c0_59, %c270] : memref<1x8x324xf32, #tpu.memory_space<vmem>>, vector<1x8x16xf32>
      %63 = vector.shape_cast %62 : vector<1x8x16xf32> to vector<8x16xf32>
      %c0_60 = arith.constant 0 : index
      %c240 = arith.constant 240 : index
      %64 = vector.load %arg6[%c0_60, %c240] : memref<72x256xf32, #tpu.memory_space<vmem>>, vector<8x16xf32>
      tpu.vector_store %arg6[%c0_60, %c240], %63 {strides = array<i32>} : memref<72x256xf32, #tpu.memory_space<vmem>>, vector<8x16xf32>,
      %c0_61 = arith.constant 0 : index
      %c0_62 = arith.constant 0 : index
      %c1 = arith.constant 1 : index
      %65 = vector.load %arg3[%c0_61, %c0_62, %c1] : memref<1x8x324xf32, #tpu.memory_space<vmem>>, vector<1x8x16xf32>
      %66 = vector.shape_cast %65 : vector<1x8x16xf32> to vector<8x16xf32>
      %c8 = arith.constant 8 : index
      %c0_63 = arith.constant 0 : index
      %67 = vector.load %arg6[%c8, %c0_63] : memref<72x256xf32, #tpu.memory_space<vmem>>, vector<8x16xf32>
      tpu.vector_store %arg6[%c8, %c0_63], %66 {strides = array<i32>} : memref<72x256xf32, #tpu.memory_space<vmem>>, vector<8x16xf32>,
      %c0_64 = arith.constant 0 : index
      %c0_65 = arith.constant 0 : index
      %c19 = arith.constant 19 : index
      %68 = vector.load %arg3[%c0_64, %c0_65, %c19] : memref<1x8x324xf32, #tpu.memory_space<vmem>>, vector<1x8x16xf32>
      %69 = vector.shape_cast %68 : vector<1x8x16xf32> to vector<8x16xf32>
      %c8_66 = arith.constant 8 : index
      %c16_67 = arith.constant 16 : index
      %70 = vector.load %arg6[%c8_66, %c16_67] : memref<72x256xf32, #tpu.memory_space<vmem>>, vector<8x16xf32>
      tpu.vector_store %arg6[%c8_66, %c16_67], %69 {strides = array<i32>} : memref<72x256xf32, #tpu.memory_space<vmem>>, vector<8x16xf32>,
      %c0_68 = arith.constant 0 : index
      %c0_69 = arith.constant 0 : index
      %c37 = arith.constant 37 : index
      %71 = vector.load %arg3[%c0_68, %c0_69, %c37] : memref<1x8x324xf32, #tpu.memory_space<vmem>>, vector<1x8x16xf32>
      %72 = vector.shape_cast %71 : vector<1x8x16xf32> to vector<8x16xf32>
      %c8_70 = arith.constant 8 : index
      %c32_71 = arith.constant 32 : index
      %73 = vector.load %arg6[%c8_70, %c32_71] : memref<72x256xf32, #tpu.memory_space<vmem>>, vector<8x16xf32>
      tpu.vector_store %arg6[%c8_70, %c32_71], %72 {strides = array<i32>} : memref<72x256xf32, #tpu.memory_space<vmem>>, vector<8x16xf32>,
      %c0_72 = arith.constant 0 : index
      %c0_73 = arith.constant 0 : index
      %c55 = arith.constant 55 : index
      %74 = vector.load %arg3[%c0_72, %c0_73, %c55] : memref<1x8x324xf32, #tpu.memory_space<vmem>>, vector<1x8x16xf32>
      %75 = vector.shape_cast %74 : vector<1x8x16xf32> to vector<8x16xf32>
      %c8_74 = arith.constant 8 : index
      %c48_75 = arith.constant 48 : index
      %76 = vector.load %arg6[%c8_74, %c48_75] : memref<72x256xf32, #tpu.memory_space<vmem>>, vector<8x16xf32>
      tpu.vector_store %arg6[%c8_74, %c48_75], %75 {strides = array<i32>} : memref<72x256xf32, #tpu.memory_space<vmem>>, vector<8x16xf32>,
      %c0_76 = arith.constant 0 : index
      %c0_77 = arith.constant 0 : index
      %c73 = arith.constant 73 : index
      %77 = vector.load %arg3[%c0_76, %c0_77, %c73] : memref<1x8x324xf32, #tpu.memory_space<vmem>>, vector<1x8x16xf32>
      %78 = vector.shape_cast %77 : vector<1x8x16xf32> to vector<8x16xf32>
      %c8_78 = arith.constant 8 : index
      %c64_79 = arith.constant 64 : index
      %79 = vector.load %arg6[%c8_78, %c64_79] : memref<72x256xf32, #tpu.memory_space<vmem>>, vector<8x16xf32>
      tpu.vector_store %arg6[%c8_78, %c64_79], %78 {strides = array<i32>} : memref<72x256xf32, #tpu.memory_space<vmem>>, vector<8x16xf32>,
      %c0_80 = arith.constant 0 : index
      %c0_81 = arith.constant 0 : index
      %c91 = arith.constant 91 : index
      %80 = vector.load %arg3[%c0_80, %c0_81, %c91] : memref<1x8x324xf32, #tpu.memory_space<vmem>>, vector<1x8x16xf32>
      %81 = vector.shape_cast %80 : vector<1x8x16xf32> to vector<8x16xf32>
      %c8_82 = arith.constant 8 : index
      %c80_83 = arith.constant 80 : index
      %82 = vector.load %arg6[%c8_82, %c80_83] : memref<72x256xf32, #tpu.memory_space<vmem>>, vector<8x16xf32>
      tpu.vector_store %arg6[%c8_82, %c80_83], %81 {strides = array<i32>} : memref<72x256xf32, #tpu.memory_space<vmem>>, vector<8x16xf32>,
      %c0_84 = arith.constant 0 : index
      %c0_85 = arith.constant 0 : index
      %c109 = arith.constant 109 : index
      %83 = vector.load %arg3[%c0_84, %c0_85, %c109] : memref<1x8x324xf32, #tpu.memory_space<vmem>>, vector<1x8x16xf32>
      %84 = vector.shape_cast %83 : vector<1x8x16xf32> to vector<8x16xf32>
      %c8_86 = arith.constant 8 : index
      %c96_87 = arith.constant 96 : index
      %85 = vector.load %arg6[%c8_86, %c96_87] : memref<72x256xf32, #tpu.memory_space<vmem>>, vector<8x16xf32>
      tpu.vector_store %arg6[%c8_86, %c96_87], %84 {strides = array<i32>} : memref<72x256xf32, #tpu.memory_space<vmem>>, vector<8x16xf32>,
      %c0_88 = arith.constant 0 : index
      %c0_89 = arith.constant 0 : index
      %c127 = arith.constant 127 : index
      %86 = vector.load %arg3[%c0_88, %c0_89, %c127] : memref<1x8x324xf32, #tpu.memory_space<vmem>>, vector<1x8x16xf32>
      %87 = vector.shape_cast %86 : vector<1x8x16xf32> to vector<8x16xf32>
      %c8_90 = arith.constant 8 : index
      %c112_91 = arith.constant 112 : index
      %88 = vector.load %arg6[%c8_90, %c112_91] : memref<72x256xf32, #tpu.memory_space<vmem>>, vector<8x16xf32>
      tpu.vector_store %arg6[%c8_90, %c112_91], %87 {strides = array<i32>} : memref<72x256xf32, #tpu.memory_space<vmem>>, vector<8x16xf32>,
      %c0_92 = arith.constant 0 : index
      %c0_93 = arith.constant 0 : index
      %c145 = arith.constant 145 : index
      %89 = vector.load %arg3[%c0_92, %c0_93, %c145] : memref<1x8x324xf32, #tpu.memory_space<vmem>>, vector<1x8x16xf32>
      %90 = vector.shape_cast %89 : vector<1x8x16xf32> to vector<8x16xf32>
      %c8_94 = arith.constant 8 : index
      %c128_95 = arith.constant 128 : index
      %91 = vector.load %arg6[%c8_94, %c128_95] : memref<72x256xf32, #tpu.memory_space<vmem>>, vector<8x16xf32>
      tpu.vector_store %arg6[%c8_94, %c128_95], %90 {strides = array<i32>} : memref<72x256xf32, #tpu.memory_space<vmem>>, vector<8x16xf32>,
      %c0_96 = arith.constant 0 : index
      %c0_97 = arith.constant 0 : index
      %c163 = arith.constant 163 : index
      %92 = vector.load %arg3[%c0_96, %c0_97, %c163] : memref<1x8x324xf32, #tpu.memory_space<vmem>>, vector<1x8x16xf32>
      %93 = vector.shape_cast %92 : vector<1x8x16xf32> to vector<8x16xf32>
      %c8_98 = arith.constant 8 : index
      %c144_99 = arith.constant 144 : index
      %94 = vector.load %arg6[%c8_98, %c144_99] : memref<72x256xf32, #tpu.memory_space<vmem>>, vector<8x16xf32>
      tpu.vector_store %arg6[%c8_98, %c144_99], %93 {strides = array<i32>} : memref<72x256xf32, #tpu.memory_space<vmem>>, vector<8x16xf32>,
      %c0_100 = arith.constant 0 : index
      %c0_101 = arith.constant 0 : index
      %c181 = arith.constant 181 : index
      %95 = vector.load %arg3[%c0_100, %c0_101, %c181] : memref<1x8x324xf32, #tpu.memory_space<vmem>>, vector<1x8x16xf32>
      %96 = vector.shape_cast %95 : vector<1x8x16xf32> to vector<8x16xf32>
      %c8_102 = arith.constant 8 : index
      %c160_103 = arith.constant 160 : index
      %97 = vector.load %arg6[%c8_102, %c160_103] : memref<72x256xf32, #tpu.memory_space<vmem>>, vector<8x16xf32>
      tpu.vector_store %arg6[%c8_102, %c160_103], %96 {strides = array<i32>} : memref<72x256xf32, #tpu.memory_space<vmem>>, vector<8x16xf32>,
      %c0_104 = arith.constant 0 : index
      %c0_105 = arith.constant 0 : index
      %c199 = arith.constant 199 : index
      %98 = vector.load %arg3[%c0_104, %c0_105, %c199] : memref<1x8x324xf32, #tpu.memory_space<vmem>>, vector<1x8x16xf32>
      %99 = vector.shape_cast %98 : vector<1x8x16xf32> to vector<8x16xf32>
      %c8_106 = arith.constant 8 : index
      %c176_107 = arith.constant 176 : index
      %100 = vector.load %arg6[%c8_106, %c176_107] : memref<72x256xf32, #tpu.memory_space<vmem>>, vector<8x16xf32>
      tpu.vector_store %arg6[%c8_106, %c176_107], %99 {strides = array<i32>} : memref<72x256xf32, #tpu.memory_space<vmem>>, vector<8x16xf32>,
      %c0_108 = arith.constant 0 : index
      %c0_109 = arith.constant 0 : index
      %c217 = arith.constant 217 : index
      %101 = vector.load %arg3[%c0_108, %c0_109, %c217] : memref<1x8x324xf32, #tpu.memory_space<vmem>>, vector<1x8x16xf32>
      %102 = vector.shape_cast %101 : vector<1x8x16xf32> to vector<8x16xf32>
      %c8_110 = arith.constant 8 : index
      %c192_111 = arith.constant 192 : index
      %103 = vector.load %arg6[%c8_110, %c192_111] : memref<72x256xf32, #tpu.memory_space<vmem>>, vector<8x16xf32>
      tpu.vector_store %arg6[%c8_110, %c192_111], %102 {strides = array<i32>} : memref<72x256xf32, #tpu.memory_space<vmem>>, vector<8x16xf32>,
      %c0_112 = arith.constant 0 : index
      %c0_113 = arith.constant 0 : index
      %c235 = arith.constant 235 : index
      %104 = vector.load %arg3[%c0_112, %c0_113, %c235] : memref<1x8x324xf32, #tpu.memory_space<vmem>>, vector<1x8x16xf32>
      %105 = vector.shape_cast %104 : vector<1x8x16xf32> to vector<8x16xf32>
      %c8_114 = arith.constant 8 : index
      %c208_115 = arith.constant 208 : index
      %106 = vector.load %arg6[%c8_114, %c208_115] : memref<72x256xf32, #tpu.memory_space<vmem>>, vector<8x16xf32>
      tpu.vector_store %arg6[%c8_114, %c208_115], %105 {strides = array<i32>} : memref<72x256xf32, #tpu.memory_space<vmem>>, vector<8x16xf32>,
      %c0_116 = arith.constant 0 : index
      %c0_117 = arith.constant 0 : index
      %c253 = arith.constant 253 : index
      %107 = vector.load %arg3[%c0_116, %c0_117, %c253] : memref<1x8x324xf32, #tpu.memory_space<vmem>>, vector<1x8x16xf32>
      %108 = vector.shape_cast %107 : vector<1x8x16xf32> to vector<8x16xf32>
      %c8_118 = arith.constant 8 : index
      %c224_119 = arith.constant 224 : index
      %109 = vector.load %arg6[%c8_118, %c224_119] : memref<72x256xf32, #tpu.memory_space<vmem>>, vector<8x16xf32>
      tpu.vector_store %arg6[%c8_118, %c224_119], %108 {strides = array<i32>} : memref<72x256xf32, #tpu.memory_space<vmem>>, vector<8x16xf32>,
      %c0_120 = arith.constant 0 : index
      %c0_121 = arith.constant 0 : index
      %c271 = arith.constant 271 : index
      %110 = vector.load %arg3[%c0_120, %c0_121, %c271] : memref<1x8x324xf32, #tpu.memory_space<vmem>>, vector<1x8x16xf32>
      %111 = vector.shape_cast %110 : vector<1x8x16xf32> to vector<8x16xf32>
      %c8_122 = arith.constant 8 : index
      %c240_123 = arith.constant 240 : index
      %112 = vector.load %arg6[%c8_122, %c240_123] : memref<72x256xf32, #tpu.memory_space<vmem>>, vector<8x16xf32>
      tpu.vector_store %arg6[%c8_122, %c240_123], %111 {strides = array<i32>} : memref<72x256xf32, #tpu.memory_space<vmem>>, vector<8x16xf32>,
      %c0_124 = arith.constant 0 : index
      %c0_125 = arith.constant 0 : index
      %c2 = arith.constant 2 : index
      %113 = vector.load %arg3[%c0_124, %c0_125, %c2] : memref<1x8x324xf32, #tpu.memory_space<vmem>>, vector<1x8x16xf32>
      %114 = vector.shape_cast %113 : vector<1x8x16xf32> to vector<8x16xf32>
      %c16_126 = arith.constant 16 : index
      %c0_127 = arith.constant 0 : index
      %115 = vector.load %arg6[%c16_126, %c0_127] : memref<72x256xf32, #tpu.memory_space<vmem>>, vector<8x16xf32>
      tpu.vector_store %arg6[%c16_126, %c0_127], %114 {strides = array<i32>} : memref<72x256xf32, #tpu.memory_space<vmem>>, vector<8x16xf32>,
      %c0_128 = arith.constant 0 : index
      %c0_129 = arith.constant 0 : index
      %c20 = arith.constant 20 : index
      %116 = vector.load %arg3[%c0_128, %c0_129, %c20] : memref<1x8x324xf32, #tpu.memory_space<vmem>>, vector<1x8x16xf32>
      %117 = vector.shape_cast %116 : vector<1x8x16xf32> to vector<8x16xf32>
      %c16_130 = arith.constant 16 : index
      %c16_131 = arith.constant 16 : index
      %118 = vector.load %arg6[%c16_130, %c16_131] : memref<72x256xf32, #tpu.memory_space<vmem>>, vector<8x16xf32>
      tpu.vector_store %arg6[%c16_130, %c16_131], %117 {strides = array<i32>} : memref<72x256xf32, #tpu.memory_space<vmem>>, vector<8x16xf32>,
      %c0_132 = arith.constant 0 : index
      %c0_133 = arith.constant 0 : index
      %c38 = arith.constant 38 : index
      %119 = vector.load %arg3[%c0_132, %c0_133, %c38] : memref<1x8x324xf32, #tpu.memory_space<vmem>>, vector<1x8x16xf32>
      %120 = vector.shape_cast %119 : vector<1x8x16xf32> to vector<8x16xf32>
      %c16_134 = arith.constant 16 : index
      %c32_135 = arith.constant 32 : index
      %121 = vector.load %arg6[%c16_134, %c32_135] : memref<72x256xf32, #tpu.memory_space<vmem>>, vector<8x16xf32>
      tpu.vector_store %arg6[%c16_134, %c32_135], %120 {strides = array<i32>} : memref<72x256xf32, #tpu.memory_space<vmem>>, vector<8x16xf32>,
      %c0_136 = arith.constant 0 : index
      %c0_137 = arith.constant 0 : index
      %c56 = arith.constant 56 : index
      %122 = vector.load %arg3[%c0_136, %c0_137, %c56] : memref<1x8x324xf32, #tpu.memory_space<vmem>>, vector<1x8x16xf32>
      %123 = vector.shape_cast %122 : vector<1x8x16xf32> to vector<8x16xf32>
      %c16_138 = arith.constant 16 : index
      %c48_139 = arith.constant 48 : index
      %124 = vector.load %arg6[%c16_138, %c48_139] : memref<72x256xf32, #tpu.memory_space<vmem>>, vector<8x16xf32>
      tpu.vector_store %arg6[%c16_138, %c48_139], %123 {strides = array<i32>} : memref<72x256xf32, #tpu.memory_space<vmem>>, vector<8x16xf32>,
      %c0_140 = arith.constant 0 : index
      %c0_141 = arith.constant 0 : index
      %c74 = arith.constant 74 : index
      %125 = vector.load %arg3[%c0_140, %c0_141, %c74] : memref<1x8x324xf32, #tpu.memory_space<vmem>>, vector<1x8x16xf32>
      %126 = vector.shape_cast %125 : vector<1x8x16xf32> to vector<8x16xf32>
      %c16_142 = arith.constant 16 : index
      %c64_143 = arith.constant 64 : index
      %127 = vector.load %arg6[%c16_142, %c64_143] : memref<72x256xf32, #tpu.memory_space<vmem>>, vector<8x16xf32>
      tpu.vector_store %arg6[%c16_142, %c64_143], %126 {strides = array<i32>} : memref<72x256xf32, #tpu.memory_space<vmem>>, vector<8x16xf32>,
      %c0_144 = arith.constant 0 : index
      %c0_145 = arith.constant 0 : index
      %c92 = arith.constant 92 : index
      %128 = vector.load %arg3[%c0_144, %c0_145, %c92] : memref<1x8x324xf32, #tpu.memory_space<vmem>>, vector<1x8x16xf32>
      %129 = vector.shape_cast %128 : vector<1x8x16xf32> to vector<8x16xf32>
      %c16_146 = arith.constant 16 : index
      %c80_147 = arith.constant 80 : index
      %130 = vector.load %arg6[%c16_146, %c80_147] : memref<72x256xf32, #tpu.memory_space<vmem>>, vector<8x16xf32>
      tpu.vector_store %arg6[%c16_146, %c80_147], %129 {strides = array<i32>} : memref<72x256xf32, #tpu.memory_space<vmem>>, vector<8x16xf32>,
      %c0_148 = arith.constant 0 : index
      %c0_149 = arith.constant 0 : index
      %c110 = arith.constant 110 : index
      %131 = vector.load %arg3[%c0_148, %c0_149, %c110] : memref<1x8x324xf32, #tpu.memory_space<vmem>>, vector<1x8x16xf32>
      %132 = vector.shape_cast %131 : vector<1x8x16xf32> to vector<8x16xf32>
      %c16_150 = arith.constant 16 : index
      %c96_151 = arith.constant 96 : index
      %133 = vector.load %arg6[%c16_150, %c96_151] : memref<72x256xf32, #tpu.memory_space<vmem>>, vector<8x16xf32>
      tpu.vector_store %arg6[%c16_150, %c96_151], %132 {strides = array<i32>} : memref<72x256xf32, #tpu.memory_space<vmem>>, vector<8x16xf32>,
      %c0_152 = arith.constant 0 : index
      %c0_153 = arith.constant 0 : index
      %c128_154 = arith.constant 128 : index
      %134 = vector.load %arg3[%c0_152, %c0_153, %c128_154] : memref<1x8x324xf32, #tpu.memory_space<vmem>>, vector<1x8x16xf32>
      %135 = vector.shape_cast %134 : vector<1x8x16xf32> to vector<8x16xf32>
      %c16_155 = arith.constant 16 : index
      %c112_156 = arith.constant 112 : index
      %136 = vector.load %arg6[%c16_155, %c112_156] : memref<72x256xf32, #tpu.memory_space<vmem>>, vector<8x16xf32>
      tpu.vector_store %arg6[%c16_155, %c112_156], %135 {strides = array<i32>} : memref<72x256xf32, #tpu.memory_space<vmem>>, vector<8x16xf32>,
      %c0_157 = arith.constant 0 : index
      %c0_158 = arith.constant 0 : index
      %c146 = arith.constant 146 : index
      %137 = vector.load %arg3[%c0_157, %c0_158, %c146] : memref<1x8x324xf32, #tpu.memory_space<vmem>>, vector<1x8x16xf32>
      %138 = vector.shape_cast %137 : vector<1x8x16xf32> to vector<8x16xf32>
      %c16_159 = arith.constant 16 : index
      %c128_160 = arith.constant 128 : index
      %139 = vector.load %arg6[%c16_159, %c128_160] : memref<72x256xf32, #tpu.memory_space<vmem>>, vector<8x16xf32>
      tpu.vector_store %arg6[%c16_159, %c128_160], %138 {strides = array<i32>} : memref<72x256xf32, #tpu.memory_space<vmem>>, vector<8x16xf32>,
      %c0_161 = arith.constant 0 : index
      %c0_162 = arith.constant 0 : index
      %c164 = arith.constant 164 : index
      %140 = vector.load %arg3[%c0_161, %c0_162, %c164] : memref<1x8x324xf32, #tpu.memory_space<vmem>>, vector<1x8x16xf32>
      %141 = vector.shape_cast %140 : vector<1x8x16xf32> to vector<8x16xf32>
      %c16_163 = arith.constant 16 : index
      %c144_164 = arith.constant 144 : index
      %142 = vector.load %arg6[%c16_163, %c144_164] : memref<72x256xf32, #tpu.memory_space<vmem>>, vector<8x16xf32>
      tpu.vector_store %arg6[%c16_163, %c144_164], %141 {strides = array<i32>} : memref<72x256xf32, #tpu.memory_space<vmem>>, vector<8x16xf32>,
      %c0_165 = arith.constant 0 : index
      %c0_166 = arith.constant 0 : index
      %c182 = arith.constant 182 : index
      %143 = vector.load %arg3[%c0_165, %c0_166, %c182] : memref<1x8x324xf32, #tpu.memory_space<vmem>>, vector<1x8x16xf32>
      %144 = vector.shape_cast %143 : vector<1x8x16xf32> to vector<8x16xf32>
      %c16_167 = arith.constant 16 : index
      %c160_168 = arith.constant 160 : index
      %145 = vector.load %arg6[%c16_167, %c160_168] : memref<72x256xf32, #tpu.memory_space<vmem>>, vector<8x16xf32>
      tpu.vector_store %arg6[%c16_167, %c160_168], %144 {strides = array<i32>} : memref<72x256xf32, #tpu.memory_space<vmem>>, vector<8x16xf32>,
      %c0_169 = arith.constant 0 : index
      %c0_170 = arith.constant 0 : index
      %c200 = arith.constant 200 : index
      %146 = vector.load %arg3[%c0_169, %c0_170, %c200] : memref<1x8x324xf32, #tpu.memory_space<vmem>>, vector<1x8x16xf32>
      %147 = vector.shape_cast %146 : vector<1x8x16xf32> to vector<8x16xf32>
      %c16_171 = arith.constant 16 : index
      %c176_172 = arith.constant 176 : index
      %148 = vector.load %arg6[%c16_171, %c176_172] : memref<72x256xf32, #tpu.memory_space<vmem>>, vector<8x16xf32>
      tpu.vector_store %arg6[%c16_171, %c176_172], %147 {strides = array<i32>} : memref<72x256xf32, #tpu.memory_space<vmem>>, vector<8x16xf32>,
      %c0_173 = arith.constant 0 : index
      %c0_174 = arith.constant 0 : index
      %c218 = arith.constant 218 : index
      %149 = vector.load %arg3[%c0_173, %c0_174, %c218] : memref<1x8x324xf32, #tpu.memory_space<vmem>>, vector<1x8x16xf32>
      %150 = vector.shape_cast %149 : vector<1x8x16xf32> to vector<8x16xf32>
      %c16_175 = arith.constant 16 : index
      %c192_176 = arith.constant 192 : index
      %151 = vector.load %arg6[%c16_175, %c192_176] : memref<72x256xf32, #tpu.memory_space<vmem>>, vector<8x16xf32>
      tpu.vector_store %arg6[%c16_175, %c192_176], %150 {strides = array<i32>} : memref<72x256xf32, #tpu.memory_space<vmem>>, vector<8x16xf32>,
      %c0_177 = arith.constant 0 : index
      %c0_178 = arith.constant 0 : index
      %c236 = arith.constant 236 : index
      %152 = vector.load %arg3[%c0_177, %c0_178, %c236] : memref<1x8x324xf32, #tpu.memory_space<vmem>>, vector<1x8x16xf32>
      %153 = vector.shape_cast %152 : vector<1x8x16xf32> to vector<8x16xf32>
      %c16_179 = arith.constant 16 : index
      %c208_180 = arith.constant 208 : index
      %154 = vector.load %arg6[%c16_179, %c208_180] : memref<72x256xf32, #tpu.memory_space<vmem>>, vector<8x16xf32>
      tpu.vector_store %arg6[%c16_179, %c208_180], %153 {strides = array<i32>} : memref<72x256xf32, #tpu.memory_space<vmem>>, vector<8x16xf32>,
      %c0_181 = arith.constant 0 : index
      %c0_182 = arith.constant 0 : index
      %c254 = arith.constant 254 : index
      %155 = vector.load %arg3[%c0_181, %c0_182, %c254] : memref<1x8x324xf32, #tpu.memory_space<vmem>>, vector<1x8x16xf32>
      %156 = vector.shape_cast %155 : vector<1x8x16xf32> to vector<8x16xf32>
      %c16_183 = arith.constant 16 : index
      %c224_184 = arith.constant 224 : index
      %157 = vector.load %arg6[%c16_183, %c224_184] : memref<72x256xf32, #tpu.memory_space<vmem>>, vector<8x16xf32>
      tpu.vector_store %arg6[%c16_183, %c224_184], %156 {strides = array<i32>} : memref<72x256xf32, #tpu.memory_space<vmem>>, vector<8x16xf32>,
      %c0_185 = arith.constant 0 : index
      %c0_186 = arith.constant 0 : index
      %c272 = arith.constant 272 : index
      %158 = vector.load %arg3[%c0_185, %c0_186, %c272] : memref<1x8x324xf32, #tpu.memory_space<vmem>>, vector<1x8x16xf32>
      %159 = vector.shape_cast %158 : vector<1x8x16xf32> to vector<8x16xf32>
      %c16_187 = arith.constant 16 : index
      %c240_188 = arith.constant 240 : index
      %160 = vector.load %arg6[%c16_187, %c240_188] : memref<72x256xf32, #tpu.memory_space<vmem>>, vector<8x16xf32>
      tpu.vector_store %arg6[%c16_187, %c240_188], %159 {strides = array<i32>} : memref<72x256xf32, #tpu.memory_space<vmem>>, vector<8x16xf32>,
      %c0_189 = arith.constant 0 : index
      %c0_190 = arith.constant 0 : index
      %c18_191 = arith.constant 18 : index
      %161 = vector.load %arg3[%c0_189, %c0_190, %c18_191] : memref<1x8x324xf32, #tpu.memory_space<vmem>>, vector<1x8x16xf32>
      %162 = vector.shape_cast %161 : vector<1x8x16xf32> to vector<8x16xf32>
      %c24 = arith.constant 24 : index
      %c0_192 = arith.constant 0 : index
      %163 = vector.load %arg6[%c24, %c0_192] : memref<72x256xf32, #tpu.memory_space<vmem>>, vector<8x16xf32>
      tpu.vector_store %arg6[%c24, %c0_192], %162 {strides = array<i32>} : memref<72x256xf32, #tpu.memory_space<vmem>>, vector<8x16xf32>,
      %c0_193 = arith.constant 0 : index
      %c0_194 = arith.constant 0 : index
      %c36_195 = arith.constant 36 : index
      %164 = vector.load %arg3[%c0_193, %c0_194, %c36_195] : memref<1x8x324xf32, #tpu.memory_space<vmem>>, vector<1x8x16xf32>
      %165 = vector.shape_cast %164 : vector<1x8x16xf32> to vector<8x16xf32>
      %c24_196 = arith.constant 24 : index
      %c16_197 = arith.constant 16 : index
      %166 = vector.load %arg6[%c24_196, %c16_197] : memref<72x256xf32, #tpu.memory_space<vmem>>, vector<8x16xf32>
      tpu.vector_store %arg6[%c24_196, %c16_197], %165 {strides = array<i32>} : memref<72x256xf32, #tpu.memory_space<vmem>>, vector<8x16xf32>,
      %c0_198 = arith.constant 0 : index
      %c0_199 = arith.constant 0 : index
      %c54_200 = arith.constant 54 : index
      %167 = vector.load %arg3[%c0_198, %c0_199, %c54_200] : memref<1x8x324xf32, #tpu.memory_space<vmem>>, vector<1x8x16xf32>
      %168 = vector.shape_cast %167 : vector<1x8x16xf32> to vector<8x16xf32>
      %c24_201 = arith.constant 24 : index
      %c32_202 = arith.constant 32 : index
      %169 = vector.load %arg6[%c24_201, %c32_202] : memref<72x256xf32, #tpu.memory_space<vmem>>, vector<8x16xf32>
      tpu.vector_store %arg6[%c24_201, %c32_202], %168 {strides = array<i32>} : memref<72x256xf32, #tpu.memory_space<vmem>>, vector<8x16xf32>,
      %c0_203 = arith.constant 0 : index
      %c0_204 = arith.constant 0 : index
      %c72_205 = arith.constant 72 : index
      %170 = vector.load %arg3[%c0_203, %c0_204, %c72_205] : memref<1x8x324xf32, #tpu.memory_space<vmem>>, vector<1x8x16xf32>
      %171 = vector.shape_cast %170 : vector<1x8x16xf32> to vector<8x16xf32>
      %c24_206 = arith.constant 24 : index
      %c48_207 = arith.constant 48 : index
      %172 = vector.load %arg6[%c24_206, %c48_207] : memref<72x256xf32, #tpu.memory_space<vmem>>, vector<8x16xf32>
      tpu.vector_store %arg6[%c24_206, %c48_207], %171 {strides = array<i32>} : memref<72x256xf32, #tpu.memory_space<vmem>>, vector<8x16xf32>,
      %c0_208 = arith.constant 0 : index
      %c0_209 = arith.constant 0 : index
      %c90_210 = arith.constant 90 : index
      %173 = vector.load %arg3[%c0_208, %c0_209, %c90_210] : memref<1x8x324xf32, #tpu.memory_space<vmem>>, vector<1x8x16xf32>
      %174 = vector.shape_cast %173 : vector<1x8x16xf32> to vector<8x16xf32>
      %c24_211 = arith.constant 24 : index
      %c64_212 = arith.constant 64 : index
      %175 = vector.load %arg6[%c24_211, %c64_212] : memref<72x256xf32, #tpu.memory_space<vmem>>, vector<8x16xf32>
      tpu.vector_store %arg6[%c24_211, %c64_212], %174 {strides = array<i32>} : memref<72x256xf32, #tpu.memory_space<vmem>>, vector<8x16xf32>,
      %c0_213 = arith.constant 0 : index
      %c0_214 = arith.constant 0 : index
      %c108_215 = arith.constant 108 : index
      %176 = vector.load %arg3[%c0_213, %c0_214, %c108_215] : memref<1x8x324xf32, #tpu.memory_space<vmem>>, vector<1x8x16xf32>
      %177 = vector.shape_cast %176 : vector<1x8x16xf32> to vector<8x16xf32>
      %c24_216 = arith.constant 24 : index
      %c80_217 = arith.constant 80 : index
      %178 = vector.load %arg6[%c24_216, %c80_217] : memref<72x256xf32, #tpu.memory_space<vmem>>, vector<8x16xf32>
      tpu.vector_store %arg6[%c24_216, %c80_217], %177 {strides = array<i32>} : memref<72x256xf32, #tpu.memory_space<vmem>>, vector<8x16xf32>,
      %c0_218 = arith.constant 0 : index
      %c0_219 = arith.constant 0 : index
      %c126_220 = arith.constant 126 : index
      %179 = vector.load %arg3[%c0_218, %c0_219, %c126_220] : memref<1x8x324xf32, #tpu.memory_space<vmem>>, vector<1x8x16xf32>
      %180 = vector.shape_cast %179 : vector<1x8x16xf32> to vector<8x16xf32>
      %c24_221 = arith.constant 24 : index
      %c96_222 = arith.constant 96 : index
      %181 = vector.load %arg6[%c24_221, %c96_222] : memref<72x256xf32, #tpu.memory_space<vmem>>, vector<8x16xf32>
      tpu.vector_store %arg6[%c24_221, %c96_222], %180 {strides = array<i32>} : memref<72x256xf32, #tpu.memory_space<vmem>>, vector<8x16xf32>,
      %c0_223 = arith.constant 0 : index
      %c0_224 = arith.constant 0 : index
      %c144_225 = arith.constant 144 : index
      %182 = vector.load %arg3[%c0_223, %c0_224, %c144_225] : memref<1x8x324xf32, #tpu.memory_space<vmem>>, vector<1x8x16xf32>
      %183 = vector.shape_cast %182 : vector<1x8x16xf32> to vector<8x16xf32>
      %c24_226 = arith.constant 24 : index
      %c112_227 = arith.constant 112 : index
      %184 = vector.load %arg6[%c24_226, %c112_227] : memref<72x256xf32, #tpu.memory_space<vmem>>, vector<8x16xf32>
      tpu.vector_store %arg6[%c24_226, %c112_227], %183 {strides = array<i32>} : memref<72x256xf32, #tpu.memory_space<vmem>>, vector<8x16xf32>,
      %c0_228 = arith.constant 0 : index
      %c0_229 = arith.constant 0 : index
      %c162_230 = arith.constant 162 : index
      %185 = vector.load %arg3[%c0_228, %c0_229, %c162_230] : memref<1x8x324xf32, #tpu.memory_space<vmem>>, vector<1x8x16xf32>
      %186 = vector.shape_cast %185 : vector<1x8x16xf32> to vector<8x16xf32>
      %c24_231 = arith.constant 24 : index
      %c128_232 = arith.constant 128 : index
      %187 = vector.load %arg6[%c24_231, %c128_232] : memref<72x256xf32, #tpu.memory_space<vmem>>, vector<8x16xf32>
      tpu.vector_store %arg6[%c24_231, %c128_232], %186 {strides = array<i32>} : memref<72x256xf32, #tpu.memory_space<vmem>>, vector<8x16xf32>,
      %c0_233 = arith.constant 0 : index
      %c0_234 = arith.constant 0 : index
      %c180_235 = arith.constant 180 : index
      %188 = vector.load %arg3[%c0_233, %c0_234, %c180_235] : memref<1x8x324xf32, #tpu.memory_space<vmem>>, vector<1x8x16xf32>
      %189 = vector.shape_cast %188 : vector<1x8x16xf32> to vector<8x16xf32>
      %c24_236 = arith.constant 24 : index
      %c144_237 = arith.constant 144 : index
      %190 = vector.load %arg6[%c24_236, %c144_237] : memref<72x256xf32, #tpu.memory_space<vmem>>, vector<8x16xf32>
      tpu.vector_store %arg6[%c24_236, %c144_237], %189 {strides = array<i32>} : memref<72x256xf32, #tpu.memory_space<vmem>>, vector<8x16xf32>,
      %c0_238 = arith.constant 0 : index
      %c0_239 = arith.constant 0 : index
      %c198_240 = arith.constant 198 : index
      %191 = vector.load %arg3[%c0_238, %c0_239, %c198_240] : memref<1x8x324xf32, #tpu.memory_space<vmem>>, vector<1x8x16xf32>
      %192 = vector.shape_cast %191 : vector<1x8x16xf32> to vector<8x16xf32>
      %c24_241 = arith.constant 24 : index
      %c160_242 = arith.constant 160 : index
      %193 = vector.load %arg6[%c24_241, %c160_242] : memref<72x256xf32, #tpu.memory_space<vmem>>, vector<8x16xf32>
      tpu.vector_store %arg6[%c24_241, %c160_242], %192 {strides = array<i32>} : memref<72x256xf32, #tpu.memory_space<vmem>>, vector<8x16xf32>,
      %c0_243 = arith.constant 0 : index
      %c0_244 = arith.constant 0 : index
      %c216_245 = arith.constant 216 : index
      %194 = vector.load %arg3[%c0_243, %c0_244, %c216_245] : memref<1x8x324xf32, #tpu.memory_space<vmem>>, vector<1x8x16xf32>
      %195 = vector.shape_cast %194 : vector<1x8x16xf32> to vector<8x16xf32>
      %c24_246 = arith.constant 24 : index
      %c176_247 = arith.constant 176 : index
      %196 = vector.load %arg6[%c24_246, %c176_247] : memref<72x256xf32, #tpu.memory_space<vmem>>, vector<8x16xf32>
      tpu.vector_store %arg6[%c24_246, %c176_247], %195 {strides = array<i32>} : memref<72x256xf32, #tpu.memory_space<vmem>>, vector<8x16xf32>,
      %c0_248 = arith.constant 0 : index
      %c0_249 = arith.constant 0 : index
      %c234_250 = arith.constant 234 : index
      %197 = vector.load %arg3[%c0_248, %c0_249, %c234_250] : memref<1x8x324xf32, #tpu.memory_space<vmem>>, vector<1x8x16xf32>
      %198 = vector.shape_cast %197 : vector<1x8x16xf32> to vector<8x16xf32>
      %c24_251 = arith.constant 24 : index
      %c192_252 = arith.constant 192 : index
      %199 = vector.load %arg6[%c24_251, %c192_252] : memref<72x256xf32, #tpu.memory_space<vmem>>, vector<8x16xf32>
      tpu.vector_store %arg6[%c24_251, %c192_252], %198 {strides = array<i32>} : memref<72x256xf32, #tpu.memory_space<vmem>>, vector<8x16xf32>,
      %c0_253 = arith.constant 0 : index
      %c0_254 = arith.constant 0 : index
      %c252_255 = arith.constant 252 : index
      %200 = vector.load %arg3[%c0_253, %c0_254, %c252_255] : memref<1x8x324xf32, #tpu.memory_space<vmem>>, vector<1x8x16xf32>
      %201 = vector.shape_cast %200 : vector<1x8x16xf32> to vector<8x16xf32>
      %c24_256 = arith.constant 24 : index
      %c208_257 = arith.constant 208 : index
      %202 = vector.load %arg6[%c24_256, %c208_257] : memref<72x256xf32, #tpu.memory_space<vmem>>, vector<8x16xf32>
      tpu.vector_store %arg6[%c24_256, %c208_257], %201 {strides = array<i32>} : memref<72x256xf32, #tpu.memory_space<vmem>>, vector<8x16xf32>,
      %c0_258 = arith.constant 0 : index
      %c0_259 = arith.constant 0 : index
      %c270_260 = arith.constant 270 : index
      %203 = vector.load %arg3[%c0_258, %c0_259, %c270_260] : memref<1x8x324xf32, #tpu.memory_space<vmem>>, vector<1x8x16xf32>
      %204 = vector.shape_cast %203 : vector<1x8x16xf32> to vector<8x16xf32>
      %c24_261 = arith.constant 24 : index
      %c224_262 = arith.constant 224 : index
      %205 = vector.load %arg6[%c24_261, %c224_262] : memref<72x256xf32, #tpu.memory_space<vmem>>, vector<8x16xf32>
      tpu.vector_store %arg6[%c24_261, %c224_262], %204 {strides = array<i32>} : memref<72x256xf32, #tpu.memory_space<vmem>>, vector<8x16xf32>,
      %c0_263 = arith.constant 0 : index
      %c0_264 = arith.constant 0 : index
      %c288 = arith.constant 288 : index
      %206 = vector.load %arg3[%c0_263, %c0_264, %c288] : memref<1x8x324xf32, #tpu.memory_space<vmem>>, vector<1x8x16xf32>
      %207 = vector.shape_cast %206 : vector<1x8x16xf32> to vector<8x16xf32>
      %c24_265 = arith.constant 24 : index
      %c240_266 = arith.constant 240 : index
      %208 = vector.load %arg6[%c24_265, %c240_266] : memref<72x256xf32, #tpu.memory_space<vmem>>, vector<8x16xf32>
      tpu.vector_store %arg6[%c24_265, %c240_266], %207 {strides = array<i32>} : memref<72x256xf32, #tpu.memory_space<vmem>>, vector<8x16xf32>,
      %c0_267 = arith.constant 0 : index
      %c0_268 = arith.constant 0 : index
      %c19_269 = arith.constant 19 : index
      %209 = vector.load %arg3[%c0_267, %c0_268, %c19_269] : memref<1x8x324xf32, #tpu.memory_space<vmem>>, vector<1x8x16xf32>
      %210 = vector.shape_cast %209 : vector<1x8x16xf32> to vector<8x16xf32>
      %c32_270 = arith.constant 32 : index
      %c0_271 = arith.constant 0 : index
      %211 = vector.load %arg6[%c32_270, %c0_271] : memref<72x256xf32, #tpu.memory_space<vmem>>, vector<8x16xf32>
      tpu.vector_store %arg6[%c32_270, %c0_271], %210 {strides = array<i32>} : memref<72x256xf32, #tpu.memory_space<vmem>>, vector<8x16xf32>,
      %c0_272 = arith.constant 0 : index
      %c0_273 = arith.constant 0 : index
      %c37_274 = arith.constant 37 : index
      %212 = vector.load %arg3[%c0_272, %c0_273, %c37_274] : memref<1x8x324xf32, #tpu.memory_space<vmem>>, vector<1x8x16xf32>
      %213 = vector.shape_cast %212 : vector<1x8x16xf32> to vector<8x16xf32>
      %c32_275 = arith.constant 32 : index
      %c16_276 = arith.constant 16 : index
      %214 = vector.load %arg6[%c32_275, %c16_276] : memref<72x256xf32, #tpu.memory_space<vmem>>, vector<8x16xf32>
      tpu.vector_store %arg6[%c32_275, %c16_276], %213 {strides = array<i32>} : memref<72x256xf32, #tpu.memory_space<vmem>>, vector<8x16xf32>,
      %c0_277 = arith.constant 0 : index
      %c0_278 = arith.constant 0 : index
      %c55_279 = arith.constant 55 : index
      %215 = vector.load %arg3[%c0_277, %c0_278, %c55_279] : memref<1x8x324xf32, #tpu.memory_space<vmem>>, vector<1x8x16xf32>
      %216 = vector.shape_cast %215 : vector<1x8x16xf32> to vector<8x16xf32>
      %c32_280 = arith.constant 32 : index
      %c32_281 = arith.constant 32 : index
      %217 = vector.load %arg6[%c32_280, %c32_281] : memref<72x256xf32, #tpu.memory_space<vmem>>, vector<8x16xf32>
      tpu.vector_store %arg6[%c32_280, %c32_281], %216 {strides = array<i32>} : memref<72x256xf32, #tpu.memory_space<vmem>>, vector<8x16xf32>,
      %c0_282 = arith.constant 0 : index
      %c0_283 = arith.constant 0 : index
      %c73_284 = arith.constant 73 : index
      %218 = vector.load %arg3[%c0_282, %c0_283, %c73_284] : memref<1x8x324xf32, #tpu.memory_space<vmem>>, vector<1x8x16xf32>
      %219 = vector.shape_cast %218 : vector<1x8x16xf32> to vector<8x16xf32>
      %c32_285 = arith.constant 32 : index
      %c48_286 = arith.constant 48 : index
      %220 = vector.load %arg6[%c32_285, %c48_286] : memref<72x256xf32, #tpu.memory_space<vmem>>, vector<8x16xf32>
      tpu.vector_store %arg6[%c32_285, %c48_286], %219 {strides = array<i32>} : memref<72x256xf32, #tpu.memory_space<vmem>>, vector<8x16xf32>,
      %c0_287 = arith.constant 0 : index
      %c0_288 = arith.constant 0 : index
      %c91_289 = arith.constant 91 : index
      %221 = vector.load %arg3[%c0_287, %c0_288, %c91_289] : memref<1x8x324xf32, #tpu.memory_space<vmem>>, vector<1x8x16xf32>
      %222 = vector.shape_cast %221 : vector<1x8x16xf32> to vector<8x16xf32>
      %c32_290 = arith.constant 32 : index
      %c64_291 = arith.constant 64 : index
      %223 = vector.load %arg6[%c32_290, %c64_291] : memref<72x256xf32, #tpu.memory_space<vmem>>, vector<8x16xf32>
      tpu.vector_store %arg6[%c32_290, %c64_291], %222 {strides = array<i32>} : memref<72x256xf32, #tpu.memory_space<vmem>>, vector<8x16xf32>,
      %c0_292 = arith.constant 0 : index
      %c0_293 = arith.constant 0 : index
      %c109_294 = arith.constant 109 : index
      %224 = vector.load %arg3[%c0_292, %c0_293, %c109_294] : memref<1x8x324xf32, #tpu.memory_space<vmem>>, vector<1x8x16xf32>
      %225 = vector.shape_cast %224 : vector<1x8x16xf32> to vector<8x16xf32>
      %c32_295 = arith.constant 32 : index
      %c80_296 = arith.constant 80 : index
      %226 = vector.load %arg6[%c32_295, %c80_296] : memref<72x256xf32, #tpu.memory_space<vmem>>, vector<8x16xf32>
      tpu.vector_store %arg6[%c32_295, %c80_296], %225 {strides = array<i32>} : memref<72x256xf32, #tpu.memory_space<vmem>>, vector<8x16xf32>,
      %c0_297 = arith.constant 0 : index
      %c0_298 = arith.constant 0 : index
      %c127_299 = arith.constant 127 : index
      %227 = vector.load %arg3[%c0_297, %c0_298, %c127_299] : memref<1x8x324xf32, #tpu.memory_space<vmem>>, vector<1x8x16xf32>
      %228 = vector.shape_cast %227 : vector<1x8x16xf32> to vector<8x16xf32>
      %c32_300 = arith.constant 32 : index
      %c96_301 = arith.constant 96 : index
      %229 = vector.load %arg6[%c32_300, %c96_301] : memref<72x256xf32, #tpu.memory_space<vmem>>, vector<8x16xf32>
      tpu.vector_store %arg6[%c32_300, %c96_301], %228 {strides = array<i32>} : memref<72x256xf32, #tpu.memory_space<vmem>>, vector<8x16xf32>,
      %c0_302 = arith.constant 0 : index
      %c0_303 = arith.constant 0 : index
      %c145_304 = arith.constant 145 : index
      %230 = vector.load %arg3[%c0_302, %c0_303, %c145_304] : memref<1x8x324xf32, #tpu.memory_space<vmem>>, vector<1x8x16xf32>
      %231 = vector.shape_cast %230 : vector<1x8x16xf32> to vector<8x16xf32>
      %c32_305 = arith.constant 32 : index
      %c112_306 = arith.constant 112 : index
      %232 = vector.load %arg6[%c32_305, %c112_306] : memref<72x256xf32, #tpu.memory_space<vmem>>, vector<8x16xf32>
      tpu.vector_store %arg6[%c32_305, %c112_306], %231 {strides = array<i32>} : memref<72x256xf32, #tpu.memory_space<vmem>>, vector<8x16xf32>,
      %c0_307 = arith.constant 0 : index
      %c0_308 = arith.constant 0 : index
      %c163_309 = arith.constant 163 : index
      %233 = vector.load %arg3[%c0_307, %c0_308, %c163_309] : memref<1x8x324xf32, #tpu.memory_space<vmem>>, vector<1x8x16xf32>
      %234 = vector.shape_cast %233 : vector<1x8x16xf32> to vector<8x16xf32>
      %c32_310 = arith.constant 32 : index
      %c128_311 = arith.constant 128 : index
      %235 = vector.load %arg6[%c32_310, %c128_311] : memref<72x256xf32, #tpu.memory_space<vmem>>, vector<8x16xf32>
      tpu.vector_store %arg6[%c32_310, %c128_311], %234 {strides = array<i32>} : memref<72x256xf32, #tpu.memory_space<vmem>>, vector<8x16xf32>,
      %c0_312 = arith.constant 0 : index
      %c0_313 = arith.constant 0 : index
      %c181_314 = arith.constant 181 : index
      %236 = vector.load %arg3[%c0_312, %c0_313, %c181_314] : memref<1x8x324xf32, #tpu.memory_space<vmem>>, vector<1x8x16xf32>
      %237 = vector.shape_cast %236 : vector<1x8x16xf32> to vector<8x16xf32>
      %c32_315 = arith.constant 32 : index
      %c144_316 = arith.constant 144 : index
      %238 = vector.load %arg6[%c32_315, %c144_316] : memref<72x256xf32, #tpu.memory_space<vmem>>, vector<8x16xf32>
      tpu.vector_store %arg6[%c32_315, %c144_316], %237 {strides = array<i32>} : memref<72x256xf32, #tpu.memory_space<vmem>>, vector<8x16xf32>,
      %c0_317 = arith.constant 0 : index
      %c0_318 = arith.constant 0 : index
      %c199_319 = arith.constant 199 : index
      %239 = vector.load %arg3[%c0_317, %c0_318, %c199_319] : memref<1x8x324xf32, #tpu.memory_space<vmem>>, vector<1x8x16xf32>
      %240 = vector.shape_cast %239 : vector<1x8x16xf32> to vector<8x16xf32>
      %c32_320 = arith.constant 32 : index
      %c160_321 = arith.constant 160 : index
      %241 = vector.load %arg6[%c32_320, %c160_321] : memref<72x256xf32, #tpu.memory_space<vmem>>, vector<8x16xf32>
      tpu.vector_store %arg6[%c32_320, %c160_321], %240 {strides = array<i32>} : memref<72x256xf32, #tpu.memory_space<vmem>>, vector<8x16xf32>,
      %c0_322 = arith.constant 0 : index
      %c0_323 = arith.constant 0 : index
      %c217_324 = arith.constant 217 : index
      %242 = vector.load %arg3[%c0_322, %c0_323, %c217_324] : memref<1x8x324xf32, #tpu.memory_space<vmem>>, vector<1x8x16xf32>
      %243 = vector.shape_cast %242 : vector<1x8x16xf32> to vector<8x16xf32>
      %c32_325 = arith.constant 32 : index
      %c176_326 = arith.constant 176 : index
      %244 = vector.load %arg6[%c32_325, %c176_326] : memref<72x256xf32, #tpu.memory_space<vmem>>, vector<8x16xf32>
      tpu.vector_store %arg6[%c32_325, %c176_326], %243 {strides = array<i32>} : memref<72x256xf32, #tpu.memory_space<vmem>>, vector<8x16xf32>,
      %c0_327 = arith.constant 0 : index
      %c0_328 = arith.constant 0 : index
      %c235_329 = arith.constant 235 : index
      %245 = vector.load %arg3[%c0_327, %c0_328, %c235_329] : memref<1x8x324xf32, #tpu.memory_space<vmem>>, vector<1x8x16xf32>
      %246 = vector.shape_cast %245 : vector<1x8x16xf32> to vector<8x16xf32>
      %c32_330 = arith.constant 32 : index
      %c192_331 = arith.constant 192 : index
      %247 = vector.load %arg6[%c32_330, %c192_331] : memref<72x256xf32, #tpu.memory_space<vmem>>, vector<8x16xf32>
      tpu.vector_store %arg6[%c32_330, %c192_331], %246 {strides = array<i32>} : memref<72x256xf32, #tpu.memory_space<vmem>>, vector<8x16xf32>,
      %c0_332 = arith.constant 0 : index
      %c0_333 = arith.constant 0 : index
      %c253_334 = arith.constant 253 : index
      %248 = vector.load %arg3[%c0_332, %c0_333, %c253_334] : memref<1x8x324xf32, #tpu.memory_space<vmem>>, vector<1x8x16xf32>
      %249 = vector.shape_cast %248 : vector<1x8x16xf32> to vector<8x16xf32>
      %c32_335 = arith.constant 32 : index
      %c208_336 = arith.constant 208 : index
      %250 = vector.load %arg6[%c32_335, %c208_336] : memref<72x256xf32, #tpu.memory_space<vmem>>, vector<8x16xf32>
      tpu.vector_store %arg6[%c32_335, %c208_336], %249 {strides = array<i32>} : memref<72x256xf32, #tpu.memory_space<vmem>>, vector<8x16xf32>,
      %c0_337 = arith.constant 0 : index
      %c0_338 = arith.constant 0 : index
      %c271_339 = arith.constant 271 : index
      %251 = vector.load %arg3[%c0_337, %c0_338, %c271_339] : memref<1x8x324xf32, #tpu.memory_space<vmem>>, vector<1x8x16xf32>
      %252 = vector.shape_cast %251 : vector<1x8x16xf32> to vector<8x16xf32>
      %c32_340 = arith.constant 32 : index
      %c224_341 = arith.constant 224 : index
      %253 = vector.load %arg6[%c32_340, %c224_341] : memref<72x256xf32, #tpu.memory_space<vmem>>, vector<8x16xf32>
      tpu.vector_store %arg6[%c32_340, %c224_341], %252 {strides = array<i32>} : memref<72x256xf32, #tpu.memory_space<vmem>>, vector<8x16xf32>,
      %c0_342 = arith.constant 0 : index
      %c0_343 = arith.constant 0 : index
      %c289 = arith.constant 289 : index
      %254 = vector.load %arg3[%c0_342, %c0_343, %c289] : memref<1x8x324xf32, #tpu.memory_space<vmem>>, vector<1x8x16xf32>
      %255 = vector.shape_cast %254 : vector<1x8x16xf32> to vector<8x16xf32>
      %c32_344 = arith.constant 32 : index
      %c240_345 = arith.constant 240 : index
      %256 = vector.load %arg6[%c32_344, %c240_345] : memref<72x256xf32, #tpu.memory_space<vmem>>, vector<8x16xf32>
      tpu.vector_store %arg6[%c32_344, %c240_345], %255 {strides = array<i32>} : memref<72x256xf32, #tpu.memory_space<vmem>>, vector<8x16xf32>,
      %c0_346 = arith.constant 0 : index
      %c0_347 = arith.constant 0 : index
      %c20_348 = arith.constant 20 : index
      %257 = vector.load %arg3[%c0_346, %c0_347, %c20_348] : memref<1x8x324xf32, #tpu.memory_space<vmem>>, vector<1x8x16xf32>
      %258 = vector.shape_cast %257 : vector<1x8x16xf32> to vector<8x16xf32>
      %c40 = arith.constant 40 : index
      %c0_349 = arith.constant 0 : index
      %259 = vector.load %arg6[%c40, %c0_349] : memref<72x256xf32, #tpu.memory_space<vmem>>, vector<8x16xf32>
      tpu.vector_store %arg6[%c40, %c0_349], %258 {strides = array<i32>} : memref<72x256xf32, #tpu.memory_space<vmem>>, vector<8x16xf32>,
      %c0_350 = arith.constant 0 : index
      %c0_351 = arith.constant 0 : index
      %c38_352 = arith.constant 38 : index
      %260 = vector.load %arg3[%c0_350, %c0_351, %c38_352] : memref<1x8x324xf32, #tpu.memory_space<vmem>>, vector<1x8x16xf32>
      %261 = vector.shape_cast %260 : vector<1x8x16xf32> to vector<8x16xf32>
      %c40_353 = arith.constant 40 : index
      %c16_354 = arith.constant 16 : index
      %262 = vector.load %arg6[%c40_353, %c16_354] : memref<72x256xf32, #tpu.memory_space<vmem>>, vector<8x16xf32>
      tpu.vector_store %arg6[%c40_353, %c16_354], %261 {strides = array<i32>} : memref<72x256xf32, #tpu.memory_space<vmem>>, vector<8x16xf32>,
      %c0_355 = arith.constant 0 : index
      %c0_356 = arith.constant 0 : index
      %c56_357 = arith.constant 56 : index
      %263 = vector.load %arg3[%c0_355, %c0_356, %c56_357] : memref<1x8x324xf32, #tpu.memory_space<vmem>>, vector<1x8x16xf32>
      %264 = vector.shape_cast %263 : vector<1x8x16xf32> to vector<8x16xf32>
      %c40_358 = arith.constant 40 : index
      %c32_359 = arith.constant 32 : index
      %265 = vector.load %arg6[%c40_358, %c32_359] : memref<72x256xf32, #tpu.memory_space<vmem>>, vector<8x16xf32>
      tpu.vector_store %arg6[%c40_358, %c32_359], %264 {strides = array<i32>} : memref<72x256xf32, #tpu.memory_space<vmem>>, vector<8x16xf32>,
      %c0_360 = arith.constant 0 : index
      %c0_361 = arith.constant 0 : index
      %c74_362 = arith.constant 74 : index
      %266 = vector.load %arg3[%c0_360, %c0_361, %c74_362] : memref<1x8x324xf32, #tpu.memory_space<vmem>>, vector<1x8x16xf32>
      %267 = vector.shape_cast %266 : vector<1x8x16xf32> to vector<8x16xf32>
      %c40_363 = arith.constant 40 : index
      %c48_364 = arith.constant 48 : index
      %268 = vector.load %arg6[%c40_363, %c48_364] : memref<72x256xf32, #tpu.memory_space<vmem>>, vector<8x16xf32>
      tpu.vector_store %arg6[%c40_363, %c48_364], %267 {strides = array<i32>} : memref<72x256xf32, #tpu.memory_space<vmem>>, vector<8x16xf32>,
      %c0_365 = arith.constant 0 : index
      %c0_366 = arith.constant 0 : index
      %c92_367 = arith.constant 92 : index
      %269 = vector.load %arg3[%c0_365, %c0_366, %c92_367] : memref<1x8x324xf32, #tpu.memory_space<vmem>>, vector<1x8x16xf32>
      %270 = vector.shape_cast %269 : vector<1x8x16xf32> to vector<8x16xf32>
      %c40_368 = arith.constant 40 : index
      %c64_369 = arith.constant 64 : index
      %271 = vector.load %arg6[%c40_368, %c64_369] : memref<72x256xf32, #tpu.memory_space<vmem>>, vector<8x16xf32>
      tpu.vector_store %arg6[%c40_368, %c64_369], %270 {strides = array<i32>} : memref<72x256xf32, #tpu.memory_space<vmem>>, vector<8x16xf32>,
      %c0_370 = arith.constant 0 : index
      %c0_371 = arith.constant 0 : index
      %c110_372 = arith.constant 110 : index
      %272 = vector.load %arg3[%c0_370, %c0_371, %c110_372] : memref<1x8x324xf32, #tpu.memory_space<vmem>>, vector<1x8x16xf32>
      %273 = vector.shape_cast %272 : vector<1x8x16xf32> to vector<8x16xf32>
      %c40_373 = arith.constant 40 : index
      %c80_374 = arith.constant 80 : index
      %274 = vector.load %arg6[%c40_373, %c80_374] : memref<72x256xf32, #tpu.memory_space<vmem>>, vector<8x16xf32>
      tpu.vector_store %arg6[%c40_373, %c80_374], %273 {strides = array<i32>} : memref<72x256xf32, #tpu.memory_space<vmem>>, vector<8x16xf32>,
      %c0_375 = arith.constant 0 : index
      %c0_376 = arith.constant 0 : index
      %c128_377 = arith.constant 128 : index
      %275 = vector.load %arg3[%c0_375, %c0_376, %c128_377] : memref<1x8x324xf32, #tpu.memory_space<vmem>>, vector<1x8x16xf32>
      %276 = vector.shape_cast %275 : vector<1x8x16xf32> to vector<8x16xf32>
      %c40_378 = arith.constant 40 : index
      %c96_379 = arith.constant 96 : index
      %277 = vector.load %arg6[%c40_378, %c96_379] : memref<72x256xf32, #tpu.memory_space<vmem>>, vector<8x16xf32>
      tpu.vector_store %arg6[%c40_378, %c96_379], %276 {strides = array<i32>} : memref<72x256xf32, #tpu.memory_space<vmem>>, vector<8x16xf32>,
      %c0_380 = arith.constant 0 : index
      %c0_381 = arith.constant 0 : index
      %c146_382 = arith.constant 146 : index
      %278 = vector.load %arg3[%c0_380, %c0_381, %c146_382] : memref<1x8x324xf32, #tpu.memory_space<vmem>>, vector<1x8x16xf32>
      %279 = vector.shape_cast %278 : vector<1x8x16xf32> to vector<8x16xf32>
      %c40_383 = arith.constant 40 : index
      %c112_384 = arith.constant 112 : index
      %280 = vector.load %arg6[%c40_383, %c112_384] : memref<72x256xf32, #tpu.memory_space<vmem>>, vector<8x16xf32>
      tpu.vector_store %arg6[%c40_383, %c112_384], %279 {strides = array<i32>} : memref<72x256xf32, #tpu.memory_space<vmem>>, vector<8x16xf32>,
      %c0_385 = arith.constant 0 : index
      %c0_386 = arith.constant 0 : index
      %c164_387 = arith.constant 164 : index
      %281 = vector.load %arg3[%c0_385, %c0_386, %c164_387] : memref<1x8x324xf32, #tpu.memory_space<vmem>>, vector<1x8x16xf32>
      %282 = vector.shape_cast %281 : vector<1x8x16xf32> to vector<8x16xf32>
      %c40_388 = arith.constant 40 : index
      %c128_389 = arith.constant 128 : index
      %283 = vector.load %arg6[%c40_388, %c128_389] : memref<72x256xf32, #tpu.memory_space<vmem>>, vector<8x16xf32>
      tpu.vector_store %arg6[%c40_388, %c128_389], %282 {strides = array<i32>} : memref<72x256xf32, #tpu.memory_space<vmem>>, vector<8x16xf32>,
      %c0_390 = arith.constant 0 : index
      %c0_391 = arith.constant 0 : index
      %c182_392 = arith.constant 182 : index
      %284 = vector.load %arg3[%c0_390, %c0_391, %c182_392] : memref<1x8x324xf32, #tpu.memory_space<vmem>>, vector<1x8x16xf32>
      %285 = vector.shape_cast %284 : vector<1x8x16xf32> to vector<8x16xf32>
      %c40_393 = arith.constant 40 : index
      %c144_394 = arith.constant 144 : index
      %286 = vector.load %arg6[%c40_393, %c144_394] : memref<72x256xf32, #tpu.memory_space<vmem>>, vector<8x16xf32>
      tpu.vector_store %arg6[%c40_393, %c144_394], %285 {strides = array<i32>} : memref<72x256xf32, #tpu.memory_space<vmem>>, vector<8x16xf32>,
      %c0_395 = arith.constant 0 : index
      %c0_396 = arith.constant 0 : index
      %c200_397 = arith.constant 200 : index
      %287 = vector.load %arg3[%c0_395, %c0_396, %c200_397] : memref<1x8x324xf32, #tpu.memory_space<vmem>>, vector<1x8x16xf32>
      %288 = vector.shape_cast %287 : vector<1x8x16xf32> to vector<8x16xf32>
      %c40_398 = arith.constant 40 : index
      %c160_399 = arith.constant 160 : index
      %289 = vector.load %arg6[%c40_398, %c160_399] : memref<72x256xf32, #tpu.memory_space<vmem>>, vector<8x16xf32>
      tpu.vector_store %arg6[%c40_398, %c160_399], %288 {strides = array<i32>} : memref<72x256xf32, #tpu.memory_space<vmem>>, vector<8x16xf32>,
      %c0_400 = arith.constant 0 : index
      %c0_401 = arith.constant 0 : index
      %c218_402 = arith.constant 218 : index
      %290 = vector.load %arg3[%c0_400, %c0_401, %c218_402] : memref<1x8x324xf32, #tpu.memory_space<vmem>>, vector<1x8x16xf32>
      %291 = vector.shape_cast %290 : vector<1x8x16xf32> to vector<8x16xf32>
      %c40_403 = arith.constant 40 : index
      %c176_404 = arith.constant 176 : index
      %292 = vector.load %arg6[%c40_403, %c176_404] : memref<72x256xf32, #tpu.memory_space<vmem>>, vector<8x16xf32>
      tpu.vector_store %arg6[%c40_403, %c176_404], %291 {strides = array<i32>} : memref<72x256xf32, #tpu.memory_space<vmem>>, vector<8x16xf32>,
      %c0_405 = arith.constant 0 : index
      %c0_406 = arith.constant 0 : index
      %c236_407 = arith.constant 236 : index
      %293 = vector.load %arg3[%c0_405, %c0_406, %c236_407] : memref<1x8x324xf32, #tpu.memory_space<vmem>>, vector<1x8x16xf32>
      %294 = vector.shape_cast %293 : vector<1x8x16xf32> to vector<8x16xf32>
      %c40_408 = arith.constant 40 : index
      %c192_409 = arith.constant 192 : index
      %295 = vector.load %arg6[%c40_408, %c192_409] : memref<72x256xf32, #tpu.memory_space<vmem>>, vector<8x16xf32>
      tpu.vector_store %arg6[%c40_408, %c192_409], %294 {strides = array<i32>} : memref<72x256xf32, #tpu.memory_space<vmem>>, vector<8x16xf32>,
      %c0_410 = arith.constant 0 : index
      %c0_411 = arith.constant 0 : index
      %c254_412 = arith.constant 254 : index
      %296 = vector.load %arg3[%c0_410, %c0_411, %c254_412] : memref<1x8x324xf32, #tpu.memory_space<vmem>>, vector<1x8x16xf32>
      %297 = vector.shape_cast %296 : vector<1x8x16xf32> to vector<8x16xf32>
      %c40_413 = arith.constant 40 : index
      %c208_414 = arith.constant 208 : index
      %298 = vector.load %arg6[%c40_413, %c208_414] : memref<72x256xf32, #tpu.memory_space<vmem>>, vector<8x16xf32>
      tpu.vector_store %arg6[%c40_413, %c208_414], %297 {strides = array<i32>} : memref<72x256xf32, #tpu.memory_space<vmem>>, vector<8x16xf32>,
      %c0_415 = arith.constant 0 : index
      %c0_416 = arith.constant 0 : index
      %c272_417 = arith.constant 272 : index
      %299 = vector.load %arg3[%c0_415, %c0_416, %c272_417] : memref<1x8x324xf32, #tpu.memory_space<vmem>>, vector<1x8x16xf32>
      %300 = vector.shape_cast %299 : vector<1x8x16xf32> to vector<8x16xf32>
      %c40_418 = arith.constant 40 : index
      %c224_419 = arith.constant 224 : index
      %301 = vector.load %arg6[%c40_418, %c224_419] : memref<72x256xf32, #tpu.memory_space<vmem>>, vector<8x16xf32>
      tpu.vector_store %arg6[%c40_418, %c224_419], %300 {strides = array<i32>} : memref<72x256xf32, #tpu.memory_space<vmem>>, vector<8x16xf32>,
      %c0_420 = arith.constant 0 : index
      %c0_421 = arith.constant 0 : index
      %c290 = arith.constant 290 : index
      %302 = vector.load %arg3[%c0_420, %c0_421, %c290] : memref<1x8x324xf32, #tpu.memory_space<vmem>>, vector<1x8x16xf32>
      %303 = vector.shape_cast %302 : vector<1x8x16xf32> to vector<8x16xf32>
      %c40_422 = arith.constant 40 : index
      %c240_423 = arith.constant 240 : index
      %304 = vector.load %arg6[%c40_422, %c240_423] : memref<72x256xf32, #tpu.memory_space<vmem>>, vector<8x16xf32>
      tpu.vector_store %arg6[%c40_422, %c240_423], %303 {strides = array<i32>} : memref<72x256xf32, #tpu.memory_space<vmem>>, vector<8x16xf32>,
      %c0_424 = arith.constant 0 : index
      %c0_425 = arith.constant 0 : index
      %c36_426 = arith.constant 36 : index
      %305 = vector.load %arg3[%c0_424, %c0_425, %c36_426] : memref<1x8x324xf32, #tpu.memory_space<vmem>>, vector<1x8x16xf32>
      %306 = vector.shape_cast %305 : vector<1x8x16xf32> to vector<8x16xf32>
      %c48_427 = arith.constant 48 : index
      %c0_428 = arith.constant 0 : index
      %307 = vector.load %arg6[%c48_427, %c0_428] : memref<72x256xf32, #tpu.memory_space<vmem>>, vector<8x16xf32>
      tpu.vector_store %arg6[%c48_427, %c0_428], %306 {strides = array<i32>} : memref<72x256xf32, #tpu.memory_space<vmem>>, vector<8x16xf32>,
      %c0_429 = arith.constant 0 : index
      %c0_430 = arith.constant 0 : index
      %c54_431 = arith.constant 54 : index
      %308 = vector.load %arg3[%c0_429, %c0_430, %c54_431] : memref<1x8x324xf32, #tpu.memory_space<vmem>>, vector<1x8x16xf32>
      %309 = vector.shape_cast %308 : vector<1x8x16xf32> to vector<8x16xf32>
      %c48_432 = arith.constant 48 : index
      %c16_433 = arith.constant 16 : index
      %310 = vector.load %arg6[%c48_432, %c16_433] : memref<72x256xf32, #tpu.memory_space<vmem>>, vector<8x16xf32>
      tpu.vector_store %arg6[%c48_432, %c16_433], %309 {strides = array<i32>} : memref<72x256xf32, #tpu.memory_space<vmem>>, vector<8x16xf32>,
      %c0_434 = arith.constant 0 : index
      %c0_435 = arith.constant 0 : index
      %c72_436 = arith.constant 72 : index
      %311 = vector.load %arg3[%c0_434, %c0_435, %c72_436] : memref<1x8x324xf32, #tpu.memory_space<vmem>>, vector<1x8x16xf32>
      %312 = vector.shape_cast %311 : vector<1x8x16xf32> to vector<8x16xf32>
      %c48_437 = arith.constant 48 : index
      %c32_438 = arith.constant 32 : index
      %313 = vector.load %arg6[%c48_437, %c32_438] : memref<72x256xf32, #tpu.memory_space<vmem>>, vector<8x16xf32>
      tpu.vector_store %arg6[%c48_437, %c32_438], %312 {strides = array<i32>} : memref<72x256xf32, #tpu.memory_space<vmem>>, vector<8x16xf32>,
      %c0_439 = arith.constant 0 : index
      %c0_440 = arith.constant 0 : index
      %c90_441 = arith.constant 90 : index
      %314 = vector.load %arg3[%c0_439, %c0_440, %c90_441] : memref<1x8x324xf32, #tpu.memory_space<vmem>>, vector<1x8x16xf32>
      %315 = vector.shape_cast %314 : vector<1x8x16xf32> to vector<8x16xf32>
      %c48_442 = arith.constant 48 : index
      %c48_443 = arith.constant 48 : index
      %316 = vector.load %arg6[%c48_442, %c48_443] : memref<72x256xf32, #tpu.memory_space<vmem>>, vector<8x16xf32>
      tpu.vector_store %arg6[%c48_442, %c48_443], %315 {strides = array<i32>} : memref<72x256xf32, #tpu.memory_space<vmem>>, vector<8x16xf32>,
      %c0_444 = arith.constant 0 : index
      %c0_445 = arith.constant 0 : index
      %c108_446 = arith.constant 108 : index
      %317 = vector.load %arg3[%c0_444, %c0_445, %c108_446] : memref<1x8x324xf32, #tpu.memory_space<vmem>>, vector<1x8x16xf32>
      %318 = vector.shape_cast %317 : vector<1x8x16xf32> to vector<8x16xf32>
      %c48_447 = arith.constant 48 : index
      %c64_448 = arith.constant 64 : index
      %319 = vector.load %arg6[%c48_447, %c64_448] : memref<72x256xf32, #tpu.memory_space<vmem>>, vector<8x16xf32>
      tpu.vector_store %arg6[%c48_447, %c64_448], %318 {strides = array<i32>} : memref<72x256xf32, #tpu.memory_space<vmem>>, vector<8x16xf32>,
      %c0_449 = arith.constant 0 : index
      %c0_450 = arith.constant 0 : index
      %c126_451 = arith.constant 126 : index
      %320 = vector.load %arg3[%c0_449, %c0_450, %c126_451] : memref<1x8x324xf32, #tpu.memory_space<vmem>>, vector<1x8x16xf32>
      %321 = vector.shape_cast %320 : vector<1x8x16xf32> to vector<8x16xf32>
      %c48_452 = arith.constant 48 : index
      %c80_453 = arith.constant 80 : index
      %322 = vector.load %arg6[%c48_452, %c80_453] : memref<72x256xf32, #tpu.memory_space<vmem>>, vector<8x16xf32>
      tpu.vector_store %arg6[%c48_452, %c80_453], %321 {strides = array<i32>} : memref<72x256xf32, #tpu.memory_space<vmem>>, vector<8x16xf32>,
      %c0_454 = arith.constant 0 : index
      %c0_455 = arith.constant 0 : index
      %c144_456 = arith.constant 144 : index
      %323 = vector.load %arg3[%c0_454, %c0_455, %c144_456] : memref<1x8x324xf32, #tpu.memory_space<vmem>>, vector<1x8x16xf32>
      %324 = vector.shape_cast %323 : vector<1x8x16xf32> to vector<8x16xf32>
      %c48_457 = arith.constant 48 : index
      %c96_458 = arith.constant 96 : index
      %325 = vector.load %arg6[%c48_457, %c96_458] : memref<72x256xf32, #tpu.memory_space<vmem>>, vector<8x16xf32>
      tpu.vector_store %arg6[%c48_457, %c96_458], %324 {strides = array<i32>} : memref<72x256xf32, #tpu.memory_space<vmem>>, vector<8x16xf32>,
      %c0_459 = arith.constant 0 : index
      %c0_460 = arith.constant 0 : index
      %c162_461 = arith.constant 162 : index
      %326 = vector.load %arg3[%c0_459, %c0_460, %c162_461] : memref<1x8x324xf32, #tpu.memory_space<vmem>>, vector<1x8x16xf32>
      %327 = vector.shape_cast %326 : vector<1x8x16xf32> to vector<8x16xf32>
      %c48_462 = arith.constant 48 : index
      %c112_463 = arith.constant 112 : index
      %328 = vector.load %arg6[%c48_462, %c112_463] : memref<72x256xf32, #tpu.memory_space<vmem>>, vector<8x16xf32>
      tpu.vector_store %arg6[%c48_462, %c112_463], %327 {strides = array<i32>} : memref<72x256xf32, #tpu.memory_space<vmem>>, vector<8x16xf32>,
      %c0_464 = arith.constant 0 : index
      %c0_465 = arith.constant 0 : index
      %c180_466 = arith.constant 180 : index
      %329 = vector.load %arg3[%c0_464, %c0_465, %c180_466] : memref<1x8x324xf32, #tpu.memory_space<vmem>>, vector<1x8x16xf32>
      %330 = vector.shape_cast %329 : vector<1x8x16xf32> to vector<8x16xf32>
      %c48_467 = arith.constant 48 : index
      %c128_468 = arith.constant 128 : index
      %331 = vector.load %arg6[%c48_467, %c128_468] : memref<72x256xf32, #tpu.memory_space<vmem>>, vector<8x16xf32>
      tpu.vector_store %arg6[%c48_467, %c128_468], %330 {strides = array<i32>} : memref<72x256xf32, #tpu.memory_space<vmem>>, vector<8x16xf32>,
      %c0_469 = arith.constant 0 : index
      %c0_470 = arith.constant 0 : index
      %c198_471 = arith.constant 198 : index
      %332 = vector.load %arg3[%c0_469, %c0_470, %c198_471] : memref<1x8x324xf32, #tpu.memory_space<vmem>>, vector<1x8x16xf32>
      %333 = vector.shape_cast %332 : vector<1x8x16xf32> to vector<8x16xf32>
      %c48_472 = arith.constant 48 : index
      %c144_473 = arith.constant 144 : index
      %334 = vector.load %arg6[%c48_472, %c144_473] : memref<72x256xf32, #tpu.memory_space<vmem>>, vector<8x16xf32>
      tpu.vector_store %arg6[%c48_472, %c144_473], %333 {strides = array<i32>} : memref<72x256xf32, #tpu.memory_space<vmem>>, vector<8x16xf32>,
      %c0_474 = arith.constant 0 : index
      %c0_475 = arith.constant 0 : index
      %c216_476 = arith.constant 216 : index
      %335 = vector.load %arg3[%c0_474, %c0_475, %c216_476] : memref<1x8x324xf32, #tpu.memory_space<vmem>>, vector<1x8x16xf32>
      %336 = vector.shape_cast %335 : vector<1x8x16xf32> to vector<8x16xf32>
      %c48_477 = arith.constant 48 : index
      %c160_478 = arith.constant 160 : index
      %337 = vector.load %arg6[%c48_477, %c160_478] : memref<72x256xf32, #tpu.memory_space<vmem>>, vector<8x16xf32>
      tpu.vector_store %arg6[%c48_477, %c160_478], %336 {strides = array<i32>} : memref<72x256xf32, #tpu.memory_space<vmem>>, vector<8x16xf32>,
      %c0_479 = arith.constant 0 : index
      %c0_480 = arith.constant 0 : index
      %c234_481 = arith.constant 234 : index
      %338 = vector.load %arg3[%c0_479, %c0_480, %c234_481] : memref<1x8x324xf32, #tpu.memory_space<vmem>>, vector<1x8x16xf32>
      %339 = vector.shape_cast %338 : vector<1x8x16xf32> to vector<8x16xf32>
      %c48_482 = arith.constant 48 : index
      %c176_483 = arith.constant 176 : index
      %340 = vector.load %arg6[%c48_482, %c176_483] : memref<72x256xf32, #tpu.memory_space<vmem>>, vector<8x16xf32>
      tpu.vector_store %arg6[%c48_482, %c176_483], %339 {strides = array<i32>} : memref<72x256xf32, #tpu.memory_space<vmem>>, vector<8x16xf32>,
      %c0_484 = arith.constant 0 : index
      %c0_485 = arith.constant 0 : index
      %c252_486 = arith.constant 252 : index
      %341 = vector.load %arg3[%c0_484, %c0_485, %c252_486] : memref<1x8x324xf32, #tpu.memory_space<vmem>>, vector<1x8x16xf32>
      %342 = vector.shape_cast %341 : vector<1x8x16xf32> to vector<8x16xf32>
      %c48_487 = arith.constant 48 : index
      %c192_488 = arith.constant 192 : index
      %343 = vector.load %arg6[%c48_487, %c192_488] : memref<72x256xf32, #tpu.memory_space<vmem>>, vector<8x16xf32>
      tpu.vector_store %arg6[%c48_487, %c192_488], %342 {strides = array<i32>} : memref<72x256xf32, #tpu.memory_space<vmem>>, vector<8x16xf32>,
      %c0_489 = arith.constant 0 : index
      %c0_490 = arith.constant 0 : index
      %c270_491 = arith.constant 270 : index
      %344 = vector.load %arg3[%c0_489, %c0_490, %c270_491] : memref<1x8x324xf32, #tpu.memory_space<vmem>>, vector<1x8x16xf32>
      %345 = vector.shape_cast %344 : vector<1x8x16xf32> to vector<8x16xf32>
      %c48_492 = arith.constant 48 : index
      %c208_493 = arith.constant 208 : index
      %346 = vector.load %arg6[%c48_492, %c208_493] : memref<72x256xf32, #tpu.memory_space<vmem>>, vector<8x16xf32>
      tpu.vector_store %arg6[%c48_492, %c208_493], %345 {strides = array<i32>} : memref<72x256xf32, #tpu.memory_space<vmem>>, vector<8x16xf32>,
      %c0_494 = arith.constant 0 : index
      %c0_495 = arith.constant 0 : index
      %c288_496 = arith.constant 288 : index
      %347 = vector.load %arg3[%c0_494, %c0_495, %c288_496] : memref<1x8x324xf32, #tpu.memory_space<vmem>>, vector<1x8x16xf32>
      %348 = vector.shape_cast %347 : vector<1x8x16xf32> to vector<8x16xf32>
      %c48_497 = arith.constant 48 : index
      %c224_498 = arith.constant 224 : index
      %349 = vector.load %arg6[%c48_497, %c224_498] : memref<72x256xf32, #tpu.memory_space<vmem>>, vector<8x16xf32>
      tpu.vector_store %arg6[%c48_497, %c224_498], %348 {strides = array<i32>} : memref<72x256xf32, #tpu.memory_space<vmem>>, vector<8x16xf32>,
      %c0_499 = arith.constant 0 : index
      %c0_500 = arith.constant 0 : index
      %c306 = arith.constant 306 : index
      %350 = vector.load %arg3[%c0_499, %c0_500, %c306] : memref<1x8x324xf32, #tpu.memory_space<vmem>>, vector<1x8x16xf32>
      %351 = vector.shape_cast %350 : vector<1x8x16xf32> to vector<8x16xf32>
      %c48_501 = arith.constant 48 : index
      %c240_502 = arith.constant 240 : index
      %352 = vector.load %arg6[%c48_501, %c240_502] : memref<72x256xf32, #tpu.memory_space<vmem>>, vector<8x16xf32>
      tpu.vector_store %arg6[%c48_501, %c240_502], %351 {strides = array<i32>} : memref<72x256xf32, #tpu.memory_space<vmem>>, vector<8x16xf32>,
      %c0_503 = arith.constant 0 : index
      %c0_504 = arith.constant 0 : index
      %c37_505 = arith.constant 37 : index
      %353 = vector.load %arg3[%c0_503, %c0_504, %c37_505] : memref<1x8x324xf32, #tpu.memory_space<vmem>>, vector<1x8x16xf32>
      %354 = vector.shape_cast %353 : vector<1x8x16xf32> to vector<8x16xf32>
      %c56_506 = arith.constant 56 : index
      %c0_507 = arith.constant 0 : index
      %355 = vector.load %arg6[%c56_506, %c0_507] : memref<72x256xf32, #tpu.memory_space<vmem>>, vector<8x16xf32>
      tpu.vector_store %arg6[%c56_506, %c0_507], %354 {strides = array<i32>} : memref<72x256xf32, #tpu.memory_space<vmem>>, vector<8x16xf32>,
      %c0_508 = arith.constant 0 : index
      %c0_509 = arith.constant 0 : index
      %c55_510 = arith.constant 55 : index
      %356 = vector.load %arg3[%c0_508, %c0_509, %c55_510] : memref<1x8x324xf32, #tpu.memory_space<vmem>>, vector<1x8x16xf32>
      %357 = vector.shape_cast %356 : vector<1x8x16xf32> to vector<8x16xf32>
      %c56_511 = arith.constant 56 : index
      %c16_512 = arith.constant 16 : index
      %358 = vector.load %arg6[%c56_511, %c16_512] : memref<72x256xf32, #tpu.memory_space<vmem>>, vector<8x16xf32>
      tpu.vector_store %arg6[%c56_511, %c16_512], %357 {strides = array<i32>} : memref<72x256xf32, #tpu.memory_space<vmem>>, vector<8x16xf32>,
      %c0_513 = arith.constant 0 : index
      %c0_514 = arith.constant 0 : index
      %c73_515 = arith.constant 73 : index
      %359 = vector.load %arg3[%c0_513, %c0_514, %c73_515] : memref<1x8x324xf32, #tpu.memory_space<vmem>>, vector<1x8x16xf32>
      %360 = vector.shape_cast %359 : vector<1x8x16xf32> to vector<8x16xf32>
      %c56_516 = arith.constant 56 : index
      %c32_517 = arith.constant 32 : index
      %361 = vector.load %arg6[%c56_516, %c32_517] : memref<72x256xf32, #tpu.memory_space<vmem>>, vector<8x16xf32>
      tpu.vector_store %arg6[%c56_516, %c32_517], %360 {strides = array<i32>} : memref<72x256xf32, #tpu.memory_space<vmem>>, vector<8x16xf32>,
      %c0_518 = arith.constant 0 : index
      %c0_519 = arith.constant 0 : index
      %c91_520 = arith.constant 91 : index
      %362 = vector.load %arg3[%c0_518, %c0_519, %c91_520] : memref<1x8x324xf32, #tpu.memory_space<vmem>>, vector<1x8x16xf32>
      %363 = vector.shape_cast %362 : vector<1x8x16xf32> to vector<8x16xf32>
      %c56_521 = arith.constant 56 : index
      %c48_522 = arith.constant 48 : index
      %364 = vector.load %arg6[%c56_521, %c48_522] : memref<72x256xf32, #tpu.memory_space<vmem>>, vector<8x16xf32>
      tpu.vector_store %arg6[%c56_521, %c48_522], %363 {strides = array<i32>} : memref<72x256xf32, #tpu.memory_space<vmem>>, vector<8x16xf32>,
      %c0_523 = arith.constant 0 : index
      %c0_524 = arith.constant 0 : index
      %c109_525 = arith.constant 109 : index
      %365 = vector.load %arg3[%c0_523, %c0_524, %c109_525] : memref<1x8x324xf32, #tpu.memory_space<vmem>>, vector<1x8x16xf32>
      %366 = vector.shape_cast %365 : vector<1x8x16xf32> to vector<8x16xf32>
      %c56_526 = arith.constant 56 : index
      %c64_527 = arith.constant 64 : index
      %367 = vector.load %arg6[%c56_526, %c64_527] : memref<72x256xf32, #tpu.memory_space<vmem>>, vector<8x16xf32>
      tpu.vector_store %arg6[%c56_526, %c64_527], %366 {strides = array<i32>} : memref<72x256xf32, #tpu.memory_space<vmem>>, vector<8x16xf32>,
      %c0_528 = arith.constant 0 : index
      %c0_529 = arith.constant 0 : index
      %c127_530 = arith.constant 127 : index
      %368 = vector.load %arg3[%c0_528, %c0_529, %c127_530] : memref<1x8x324xf32, #tpu.memory_space<vmem>>, vector<1x8x16xf32>
      %369 = vector.shape_cast %368 : vector<1x8x16xf32> to vector<8x16xf32>
      %c56_531 = arith.constant 56 : index
      %c80_532 = arith.constant 80 : index
      %370 = vector.load %arg6[%c56_531, %c80_532] : memref<72x256xf32, #tpu.memory_space<vmem>>, vector<8x16xf32>
      tpu.vector_store %arg6[%c56_531, %c80_532], %369 {strides = array<i32>} : memref<72x256xf32, #tpu.memory_space<vmem>>, vector<8x16xf32>,
      %c0_533 = arith.constant 0 : index
      %c0_534 = arith.constant 0 : index
      %c145_535 = arith.constant 145 : index
      %371 = vector.load %arg3[%c0_533, %c0_534, %c145_535] : memref<1x8x324xf32, #tpu.memory_space<vmem>>, vector<1x8x16xf32>
      %372 = vector.shape_cast %371 : vector<1x8x16xf32> to vector<8x16xf32>
      %c56_536 = arith.constant 56 : index
      %c96_537 = arith.constant 96 : index
      %373 = vector.load %arg6[%c56_536, %c96_537] : memref<72x256xf32, #tpu.memory_space<vmem>>, vector<8x16xf32>
      tpu.vector_store %arg6[%c56_536, %c96_537], %372 {strides = array<i32>} : memref<72x256xf32, #tpu.memory_space<vmem>>, vector<8x16xf32>,
      %c0_538 = arith.constant 0 : index
      %c0_539 = arith.constant 0 : index
      %c163_540 = arith.constant 163 : index
      %374 = vector.load %arg3[%c0_538, %c0_539, %c163_540] : memref<1x8x324xf32, #tpu.memory_space<vmem>>, vector<1x8x16xf32>
      %375 = vector.shape_cast %374 : vector<1x8x16xf32> to vector<8x16xf32>
      %c56_541 = arith.constant 56 : index
      %c112_542 = arith.constant 112 : index
      %376 = vector.load %arg6[%c56_541, %c112_542] : memref<72x256xf32, #tpu.memory_space<vmem>>, vector<8x16xf32>
      tpu.vector_store %arg6[%c56_541, %c112_542], %375 {strides = array<i32>} : memref<72x256xf32, #tpu.memory_space<vmem>>, vector<8x16xf32>,
      %c0_543 = arith.constant 0 : index
      %c0_544 = arith.constant 0 : index
      %c181_545 = arith.constant 181 : index
      %377 = vector.load %arg3[%c0_543, %c0_544, %c181_545] : memref<1x8x324xf32, #tpu.memory_space<vmem>>, vector<1x8x16xf32>
      %378 = vector.shape_cast %377 : vector<1x8x16xf32> to vector<8x16xf32>
      %c56_546 = arith.constant 56 : index
      %c128_547 = arith.constant 128 : index
      %379 = vector.load %arg6[%c56_546, %c128_547] : memref<72x256xf32, #tpu.memory_space<vmem>>, vector<8x16xf32>
      tpu.vector_store %arg6[%c56_546, %c128_547], %378 {strides = array<i32>} : memref<72x256xf32, #tpu.memory_space<vmem>>, vector<8x16xf32>,
      %c0_548 = arith.constant 0 : index
      %c0_549 = arith.constant 0 : index
      %c199_550 = arith.constant 199 : index
      %380 = vector.load %arg3[%c0_548, %c0_549, %c199_550] : memref<1x8x324xf32, #tpu.memory_space<vmem>>, vector<1x8x16xf32>
      %381 = vector.shape_cast %380 : vector<1x8x16xf32> to vector<8x16xf32>
      %c56_551 = arith.constant 56 : index
      %c144_552 = arith.constant 144 : index
      %382 = vector.load %arg6[%c56_551, %c144_552] : memref<72x256xf32, #tpu.memory_space<vmem>>, vector<8x16xf32>
      tpu.vector_store %arg6[%c56_551, %c144_552], %381 {strides = array<i32>} : memref<72x256xf32, #tpu.memory_space<vmem>>, vector<8x16xf32>,
      %c0_553 = arith.constant 0 : index
      %c0_554 = arith.constant 0 : index
      %c217_555 = arith.constant 217 : index
      %383 = vector.load %arg3[%c0_553, %c0_554, %c217_555] : memref<1x8x324xf32, #tpu.memory_space<vmem>>, vector<1x8x16xf32>
      %384 = vector.shape_cast %383 : vector<1x8x16xf32> to vector<8x16xf32>
      %c56_556 = arith.constant 56 : index
      %c160_557 = arith.constant 160 : index
      %385 = vector.load %arg6[%c56_556, %c160_557] : memref<72x256xf32, #tpu.memory_space<vmem>>, vector<8x16xf32>
      tpu.vector_store %arg6[%c56_556, %c160_557], %384 {strides = array<i32>} : memref<72x256xf32, #tpu.memory_space<vmem>>, vector<8x16xf32>,
      %c0_558 = arith.constant 0 : index
      %c0_559 = arith.constant 0 : index
      %c235_560 = arith.constant 235 : index
      %386 = vector.load %arg3[%c0_558, %c0_559, %c235_560] : memref<1x8x324xf32, #tpu.memory_space<vmem>>, vector<1x8x16xf32>
      %387 = vector.shape_cast %386 : vector<1x8x16xf32> to vector<8x16xf32>
      %c56_561 = arith.constant 56 : index
      %c176_562 = arith.constant 176 : index
      %388 = vector.load %arg6[%c56_561, %c176_562] : memref<72x256xf32, #tpu.memory_space<vmem>>, vector<8x16xf32>
      tpu.vector_store %arg6[%c56_561, %c176_562], %387 {strides = array<i32>} : memref<72x256xf32, #tpu.memory_space<vmem>>, vector<8x16xf32>,
      %c0_563 = arith.constant 0 : index
      %c0_564 = arith.constant 0 : index
      %c253_565 = arith.constant 253 : index
      %389 = vector.load %arg3[%c0_563, %c0_564, %c253_565] : memref<1x8x324xf32, #tpu.memory_space<vmem>>, vector<1x8x16xf32>
      %390 = vector.shape_cast %389 : vector<1x8x16xf32> to vector<8x16xf32>
      %c56_566 = arith.constant 56 : index
      %c192_567 = arith.constant 192 : index
      %391 = vector.load %arg6[%c56_566, %c192_567] : memref<72x256xf32, #tpu.memory_space<vmem>>, vector<8x16xf32>
      tpu.vector_store %arg6[%c56_566, %c192_567], %390 {strides = array<i32>} : memref<72x256xf32, #tpu.memory_space<vmem>>, vector<8x16xf32>,
      %c0_568 = arith.constant 0 : index
      %c0_569 = arith.constant 0 : index
      %c271_570 = arith.constant 271 : index
      %392 = vector.load %arg3[%c0_568, %c0_569, %c271_570] : memref<1x8x324xf32, #tpu.memory_space<vmem>>, vector<1x8x16xf32>
      %393 = vector.shape_cast %392 : vector<1x8x16xf32> to vector<8x16xf32>
      %c56_571 = arith.constant 56 : index
      %c208_572 = arith.constant 208 : index
      %394 = vector.load %arg6[%c56_571, %c208_572] : memref<72x256xf32, #tpu.memory_space<vmem>>, vector<8x16xf32>
      tpu.vector_store %arg6[%c56_571, %c208_572], %393 {strides = array<i32>} : memref<72x256xf32, #tpu.memory_space<vmem>>, vector<8x16xf32>,
      %c0_573 = arith.constant 0 : index
      %c0_574 = arith.constant 0 : index
      %c289_575 = arith.constant 289 : index
      %395 = vector.load %arg3[%c0_573, %c0_574, %c289_575] : memref<1x8x324xf32, #tpu.memory_space<vmem>>, vector<1x8x16xf32>
      %396 = vector.shape_cast %395 : vector<1x8x16xf32> to vector<8x16xf32>
      %c56_576 = arith.constant 56 : index
      %c224_577 = arith.constant 224 : index
      %397 = vector.load %arg6[%c56_576, %c224_577] : memref<72x256xf32, #tpu.memory_space<vmem>>, vector<8x16xf32>
      tpu.vector_store %arg6[%c56_576, %c224_577], %396 {strides = array<i32>} : memref<72x256xf32, #tpu.memory_space<vmem>>, vector<8x16xf32>,
      %c0_578 = arith.constant 0 : index
      %c0_579 = arith.constant 0 : index
      %c307 = arith.constant 307 : index
      %398 = vector.load %arg3[%c0_578, %c0_579, %c307] : memref<1x8x324xf32, #tpu.memory_space<vmem>>, vector<1x8x16xf32>
      %399 = vector.shape_cast %398 : vector<1x8x16xf32> to vector<8x16xf32>
      %c56_580 = arith.constant 56 : index
      %c240_581 = arith.constant 240 : index
      %400 = vector.load %arg6[%c56_580, %c240_581] : memref<72x256xf32, #tpu.memory_space<vmem>>, vector<8x16xf32>
      tpu.vector_store %arg6[%c56_580, %c240_581], %399 {strides = array<i32>} : memref<72x256xf32, #tpu.memory_space<vmem>>, vector<8x16xf32>,
      %c0_582 = arith.constant 0 : index
      %c0_583 = arith.constant 0 : index
      %c38_584 = arith.constant 38 : index
      %401 = vector.load %arg3[%c0_582, %c0_583, %c38_584] : memref<1x8x324xf32, #tpu.memory_space<vmem>>, vector<1x8x16xf32>
      %402 = vector.shape_cast %401 : vector<1x8x16xf32> to vector<8x16xf32>
      %c64_585 = arith.constant 64 : index
      %c0_586 = arith.constant 0 : index
      %403 = vector.load %arg6[%c64_585, %c0_586] : memref<72x256xf32, #tpu.memory_space<vmem>>, vector<8x16xf32>
      tpu.vector_store %arg6[%c64_585, %c0_586], %402 {strides = array<i32>} : memref<72x256xf32, #tpu.memory_space<vmem>>, vector<8x16xf32>,
      %c0_587 = arith.constant 0 : index
      %c0_588 = arith.constant 0 : index
      %c56_589 = arith.constant 56 : index
      %404 = vector.load %arg3[%c0_587, %c0_588, %c56_589] : memref<1x8x324xf32, #tpu.memory_space<vmem>>, vector<1x8x16xf32>
      %405 = vector.shape_cast %404 : vector<1x8x16xf32> to vector<8x16xf32>
      %c64_590 = arith.constant 64 : index
      %c16_591 = arith.constant 16 : index
      %406 = vector.load %arg6[%c64_590, %c16_591] : memref<72x256xf32, #tpu.memory_space<vmem>>, vector<8x16xf32>
      tpu.vector_store %arg6[%c64_590, %c16_591], %405 {strides = array<i32>} : memref<72x256xf32, #tpu.memory_space<vmem>>, vector<8x16xf32>,
      %c0_592 = arith.constant 0 : index
      %c0_593 = arith.constant 0 : index
      %c74_594 = arith.constant 74 : index
      %407 = vector.load %arg3[%c0_592, %c0_593, %c74_594] : memref<1x8x324xf32, #tpu.memory_space<vmem>>, vector<1x8x16xf32>
      %408 = vector.shape_cast %407 : vector<1x8x16xf32> to vector<8x16xf32>
      %c64_595 = arith.constant 64 : index
      %c32_596 = arith.constant 32 : index
      %409 = vector.load %arg6[%c64_595, %c32_596] : memref<72x256xf32, #tpu.memory_space<vmem>>, vector<8x16xf32>
      tpu.vector_store %arg6[%c64_595, %c32_596], %408 {strides = array<i32>} : memref<72x256xf32, #tpu.memory_space<vmem>>, vector<8x16xf32>,
      %c0_597 = arith.constant 0 : index
      %c0_598 = arith.constant 0 : index
      %c92_599 = arith.constant 92 : index
      %410 = vector.load %arg3[%c0_597, %c0_598, %c92_599] : memref<1x8x324xf32, #tpu.memory_space<vmem>>, vector<1x8x16xf32>
      %411 = vector.shape_cast %410 : vector<1x8x16xf32> to vector<8x16xf32>
      %c64_600 = arith.constant 64 : index
      %c48_601 = arith.constant 48 : index
      %412 = vector.load %arg6[%c64_600, %c48_601] : memref<72x256xf32, #tpu.memory_space<vmem>>, vector<8x16xf32>
      tpu.vector_store %arg6[%c64_600, %c48_601], %411 {strides = array<i32>} : memref<72x256xf32, #tpu.memory_space<vmem>>, vector<8x16xf32>,
      %c0_602 = arith.constant 0 : index
      %c0_603 = arith.constant 0 : index
      %c110_604 = arith.constant 110 : index
      %413 = vector.load %arg3[%c0_602, %c0_603, %c110_604] : memref<1x8x324xf32, #tpu.memory_space<vmem>>, vector<1x8x16xf32>
      %414 = vector.shape_cast %413 : vector<1x8x16xf32> to vector<8x16xf32>
      %c64_605 = arith.constant 64 : index
      %c64_606 = arith.constant 64 : index
      %415 = vector.load %arg6[%c64_605, %c64_606] : memref<72x256xf32, #tpu.memory_space<vmem>>, vector<8x16xf32>
      tpu.vector_store %arg6[%c64_605, %c64_606], %414 {strides = array<i32>} : memref<72x256xf32, #tpu.memory_space<vmem>>, vector<8x16xf32>,
      %c0_607 = arith.constant 0 : index
      %c0_608 = arith.constant 0 : index
      %c128_609 = arith.constant 128 : index
      %416 = vector.load %arg3[%c0_607, %c0_608, %c128_609] : memref<1x8x324xf32, #tpu.memory_space<vmem>>, vector<1x8x16xf32>
      %417 = vector.shape_cast %416 : vector<1x8x16xf32> to vector<8x16xf32>
      %c64_610 = arith.constant 64 : index
      %c80_611 = arith.constant 80 : index
      %418 = vector.load %arg6[%c64_610, %c80_611] : memref<72x256xf32, #tpu.memory_space<vmem>>, vector<8x16xf32>
      tpu.vector_store %arg6[%c64_610, %c80_611], %417 {strides = array<i32>} : memref<72x256xf32, #tpu.memory_space<vmem>>, vector<8x16xf32>,
      %c0_612 = arith.constant 0 : index
      %c0_613 = arith.constant 0 : index
      %c146_614 = arith.constant 146 : index
      %419 = vector.load %arg3[%c0_612, %c0_613, %c146_614] : memref<1x8x324xf32, #tpu.memory_space<vmem>>, vector<1x8x16xf32>
      %420 = vector.shape_cast %419 : vector<1x8x16xf32> to vector<8x16xf32>
      %c64_615 = arith.constant 64 : index
      %c96_616 = arith.constant 96 : index
      %421 = vector.load %arg6[%c64_615, %c96_616] : memref<72x256xf32, #tpu.memory_space<vmem>>, vector<8x16xf32>
      tpu.vector_store %arg6[%c64_615, %c96_616], %420 {strides = array<i32>} : memref<72x256xf32, #tpu.memory_space<vmem>>, vector<8x16xf32>,
      %c0_617 = arith.constant 0 : index
      %c0_618 = arith.constant 0 : index
      %c164_619 = arith.constant 164 : index
      %422 = vector.load %arg3[%c0_617, %c0_618, %c164_619] : memref<1x8x324xf32, #tpu.memory_space<vmem>>, vector<1x8x16xf32>
      %423 = vector.shape_cast %422 : vector<1x8x16xf32> to vector<8x16xf32>
      %c64_620 = arith.constant 64 : index
      %c112_621 = arith.constant 112 : index
      %424 = vector.load %arg6[%c64_620, %c112_621] : memref<72x256xf32, #tpu.memory_space<vmem>>, vector<8x16xf32>
      tpu.vector_store %arg6[%c64_620, %c112_621], %423 {strides = array<i32>} : memref<72x256xf32, #tpu.memory_space<vmem>>, vector<8x16xf32>,
      %c0_622 = arith.constant 0 : index
      %c0_623 = arith.constant 0 : index
      %c182_624 = arith.constant 182 : index
      %425 = vector.load %arg3[%c0_622, %c0_623, %c182_624] : memref<1x8x324xf32, #tpu.memory_space<vmem>>, vector<1x8x16xf32>
      %426 = vector.shape_cast %425 : vector<1x8x16xf32> to vector<8x16xf32>
      %c64_625 = arith.constant 64 : index
      %c128_626 = arith.constant 128 : index
      %427 = vector.load %arg6[%c64_625, %c128_626] : memref<72x256xf32, #tpu.memory_space<vmem>>, vector<8x16xf32>
      tpu.vector_store %arg6[%c64_625, %c128_626], %426 {strides = array<i32>} : memref<72x256xf32, #tpu.memory_space<vmem>>, vector<8x16xf32>,
      %c0_627 = arith.constant 0 : index
      %c0_628 = arith.constant 0 : index
      %c200_629 = arith.constant 200 : index
      %428 = vector.load %arg3[%c0_627, %c0_628, %c200_629] : memref<1x8x324xf32, #tpu.memory_space<vmem>>, vector<1x8x16xf32>
      %429 = vector.shape_cast %428 : vector<1x8x16xf32> to vector<8x16xf32>
      %c64_630 = arith.constant 64 : index
      %c144_631 = arith.constant 144 : index
      %430 = vector.load %arg6[%c64_630, %c144_631] : memref<72x256xf32, #tpu.memory_space<vmem>>, vector<8x16xf32>
      tpu.vector_store %arg6[%c64_630, %c144_631], %429 {strides = array<i32>} : memref<72x256xf32, #tpu.memory_space<vmem>>, vector<8x16xf32>,
      %c0_632 = arith.constant 0 : index
      %c0_633 = arith.constant 0 : index
      %c218_634 = arith.constant 218 : index
      %431 = vector.load %arg3[%c0_632, %c0_633, %c218_634] : memref<1x8x324xf32, #tpu.memory_space<vmem>>, vector<1x8x16xf32>
      %432 = vector.shape_cast %431 : vector<1x8x16xf32> to vector<8x16xf32>
      %c64_635 = arith.constant 64 : index
      %c160_636 = arith.constant 160 : index
      %433 = vector.load %arg6[%c64_635, %c160_636] : memref<72x256xf32, #tpu.memory_space<vmem>>, vector<8x16xf32>
      tpu.vector_store %arg6[%c64_635, %c160_636], %432 {strides = array<i32>} : memref<72x256xf32, #tpu.memory_space<vmem>>, vector<8x16xf32>,
      %c0_637 = arith.constant 0 : index
      %c0_638 = arith.constant 0 : index
      %c236_639 = arith.constant 236 : index
      %434 = vector.load %arg3[%c0_637, %c0_638, %c236_639] : memref<1x8x324xf32, #tpu.memory_space<vmem>>, vector<1x8x16xf32>
      %435 = vector.shape_cast %434 : vector<1x8x16xf32> to vector<8x16xf32>
      %c64_640 = arith.constant 64 : index
      %c176_641 = arith.constant 176 : index
      %436 = vector.load %arg6[%c64_640, %c176_641] : memref<72x256xf32, #tpu.memory_space<vmem>>, vector<8x16xf32>
      tpu.vector_store %arg6[%c64_640, %c176_641], %435 {strides = array<i32>} : memref<72x256xf32, #tpu.memory_space<vmem>>, vector<8x16xf32>,
      %c0_642 = arith.constant 0 : index
      %c0_643 = arith.constant 0 : index
      %c254_644 = arith.constant 254 : index
      %437 = vector.load %arg3[%c0_642, %c0_643, %c254_644] : memref<1x8x324xf32, #tpu.memory_space<vmem>>, vector<1x8x16xf32>
      %438 = vector.shape_cast %437 : vector<1x8x16xf32> to vector<8x16xf32>
      %c64_645 = arith.constant 64 : index
      %c192_646 = arith.constant 192 : index
      %439 = vector.load %arg6[%c64_645, %c192_646] : memref<72x256xf32, #tpu.memory_space<vmem>>, vector<8x16xf32>
      tpu.vector_store %arg6[%c64_645, %c192_646], %438 {strides = array<i32>} : memref<72x256xf32, #tpu.memory_space<vmem>>, vector<8x16xf32>,
      %c0_647 = arith.constant 0 : index
      %c0_648 = arith.constant 0 : index
      %c272_649 = arith.constant 272 : index
      %440 = vector.load %arg3[%c0_647, %c0_648, %c272_649] : memref<1x8x324xf32, #tpu.memory_space<vmem>>, vector<1x8x16xf32>
      %441 = vector.shape_cast %440 : vector<1x8x16xf32> to vector<8x16xf32>
      %c64_650 = arith.constant 64 : index
      %c208_651 = arith.constant 208 : index
      %442 = vector.load %arg6[%c64_650, %c208_651] : memref<72x256xf32, #tpu.memory_space<vmem>>, vector<8x16xf32>
      tpu.vector_store %arg6[%c64_650, %c208_651], %441 {strides = array<i32>} : memref<72x256xf32, #tpu.memory_space<vmem>>, vector<8x16xf32>,
      %c0_652 = arith.constant 0 : index
      %c0_653 = arith.constant 0 : index
      %c290_654 = arith.constant 290 : index
      %443 = vector.load %arg3[%c0_652, %c0_653, %c290_654] : memref<1x8x324xf32, #tpu.memory_space<vmem>>, vector<1x8x16xf32>
      %444 = vector.shape_cast %443 : vector<1x8x16xf32> to vector<8x16xf32>
      %c64_655 = arith.constant 64 : index
      %c224_656 = arith.constant 224 : index
      %445 = vector.load %arg6[%c64_655, %c224_656] : memref<72x256xf32, #tpu.memory_space<vmem>>, vector<8x16xf32>
      tpu.vector_store %arg6[%c64_655, %c224_656], %444 {strides = array<i32>} : memref<72x256xf32, #tpu.memory_space<vmem>>, vector<8x16xf32>,
      %c0_657 = arith.constant 0 : index
      %c0_658 = arith.constant 0 : index
      %c308 = arith.constant 308 : index
      %446 = vector.load %arg3[%c0_657, %c0_658, %c308] : memref<1x8x324xf32, #tpu.memory_space<vmem>>, vector<1x8x16xf32>
      %447 = vector.shape_cast %446 : vector<1x8x16xf32> to vector<8x16xf32>
      %c64_659 = arith.constant 64 : index
      %c240_660 = arith.constant 240 : index
      %448 = vector.load %arg6[%c64_659, %c240_660] : memref<72x256xf32, #tpu.memory_space<vmem>>, vector<8x16xf32>
      tpu.vector_store %arg6[%c64_659, %c240_660], %447 {strides = array<i32>} : memref<72x256xf32, #tpu.memory_space<vmem>>, vector<8x16xf32>,
      %cst_661 = arith.constant 1.000000e+00 : f32
      %449 = vector.broadcast %cst_661 : f32 to vector<1x256xf32>
      %c3 = arith.constant 3 : index
      %c0_662 = arith.constant 0 : index
      %450 = vector.load %arg6[%c3, %c0_662] : memref<72x256xf32, #tpu.memory_space<vmem>>, vector<1x256xf32>
      tpu.vector_store %arg6[%c3, %c0_662], %449 {strides = array<i32>} : memref<72x256xf32, #tpu.memory_space<vmem>>, vector<1x256xf32>,
    } else {
    }
    %3 = arith.index_cast %arg1 : i32 to index
    %c0 = arith.constant 0 : index
    %c0_1 = arith.constant 0 : index
    %4 = vector.load %arg4[%3, %c0, %c0_1] : memref<1x8x72xf32, #tpu.memory_space<vmem>>, vector<1x8x72xf32>
    %5 = vector.shape_cast %4 : vector<1x8x72xf32> to vector<8x72xf32>
    %c0_2 = arith.constant 0 : index
    %c0_3 = arith.constant 0 : index
    %6 = vector.load %arg6[%c0_2, %c0_3] : memref<72x256xf32, #tpu.memory_space<vmem>>, vector<72x256xf32>
    %cst = arith.constant dense<0.000000e+00> : vector<8x256xf32>
    %7 = tpu.matmul %5, %6, %cst {dimension_numbers = #tpu.dot_dimension_numbers<[1], [0], [0], [1], [0, 0, 1, 1], [], []>} : vector<8x72xf32>, vector<72x256xf32>, vector<8x256xf32> -> vector<8x256xf32>
    %8 = vector.extract_strided_slice %7 {offsets = [0, 0], sizes = [4, 256], strides = [1, 1]} : vector<8x256xf32> to vector<4x256xf32>
    %9 = vector.extract_strided_slice %7 {offsets = [4, 0], sizes = [4, 256], strides = [1, 1]} : vector<8x256xf32> to vector<4x256xf32>
    %c0_4 = arith.constant 0 : index
    %c0_5 = arith.constant 0 : index
    %c0_6 = arith.constant 0 : index
    %10 = vector.load %arg2[%c0_4, %c0_5, %c0_6] : memref<1x4x256xf32, #tpu.memory_space<vmem>>, vector<1x4x256xf32>
    %11 = vector.shape_cast %10 : vector<1x4x256xf32> to vector<4x256xf32>
    %12 = arith.mulf %11, %8 : vector<4x256xf32>
    %13 = arith.addf %12, %9 : vector<4x256xf32>
    %c0_7 = arith.constant 0 : index
    %c0_8 = arith.constant 0 : index
    %c0_9 = arith.constant 0 : index
    %14 = vector.load %arg5[%c0_7, %c0_8, %c0_9] : memref<1x4x256xf32, #tpu.memory_space<vmem>>, vector<1x4x256xf32>
    %15 = vector.shape_cast %14 : vector<1x4x256xf32> to vector<4x256xf32>
    %16 = vector.shape_cast %13 : vector<4x256xf32> to vector<1x4x256xf32>
    tpu.vector_store %arg5[%c0_7, %c0_8, %c0_9], %16 {strides = array<i32>} : memref<1x4x256xf32, #tpu.memory_space<vmem>>, vector<1x4x256xf32>,
    return
  }
  func.func @transform_0(%arg0: i32, %arg1: i32) -> (i32, i32, i32) {
    %c0_i32 = arith.constant 0 : i32
    %c0_i32_0 = arith.constant 0 : i32
    return %arg0, %arg1, %c0_i32 : i32, i32, i32
  }
  func.func @transform_1(%arg0: i32, %arg1: i32) -> (i32, i32, i32) {
    %c0_i32 = arith.constant 0 : i32
    %c0_i32_0 = arith.constant 0 : i32
    %c0_i32_1 = arith.constant 0 : i32
    return %arg0, %c0_i32, %c0_i32_0 : i32, i32, i32
  }
  func.func @transform_2(%arg0: i32, %arg1: i32) -> (i32, i32, i32) {
    %c0_i32 = arith.constant 0 : i32
    %c0_i32_0 = arith.constant 0 : i32
    %c0_i32_1 = arith.constant 0 : i32
    %c0_i32_2 = arith.constant 0 : i32
    return %c0_i32, %c0_i32_0, %c0_i32_1 : i32, i32, i32
  }
  func.func @transform_3(%arg0: i32, %arg1: i32) -> (i32, i32, i32) {
    %c0_i32 = arith.constant 0 : i32
    %c0_i32_0 = arith.constant 0 : i32
    return %arg0, %arg1, %c0_i32 : i32, i32, i32
  }
}

</mosaic_0001>

<llo_original>
// kernel: film.1
$region0: #{film.1}
  #allocation0 [shape = 'u32[]', space=smem, size = 0x4, offset = 0x4, fixed_abs, tag = 'smem constant byte address 0x4 - core index']
  #allocation1 [shape = 'u32[72,128]{1,0:T(1,128)}', space=vmem, size = 0x9000, scoped, tag = 'internal scratch']
  #allocation2 [shape = 'f32[72,256]{1,0:T(8,128)}', space=vmem, size = 0x12000, scoped, tag = 'scratch operand']
  %s0 = inlined_call_operand.vmem [shape: f32[2,4,256], index: 0, kind: input, shape index: {}]
  %s1 = inlined_call_operand.vmem [shape: f32[2,8,324], index: 1, kind: input, shape index: {}]
  %s2 = inlined_call_operand.vmem [shape: f32[1,8,72], index: 2, kind: input, shape index: {}]
  %s3 = inlined_call_operand.vmem [shape: f32[2,4,256], index: 3, kind: output, shape index: {}]
  %s4 = sld [smem:[#allocation0]]
  $region49: #{film.1} parent=0
    _
  %s6 = ssub.s32 1, %s4
  %s7 = scalar_select 0, %s6, %s4
  loop: start=0, step=1, limit=4
  $region2: #{film.1} parent=0 // loop_pre_header
    _
  $region3: #{film.1} parent=0 // loop_header
    %s9 = sphi 0, %s13
    %p10 = scmp.ge.s32.totalorder %s9, 4
    %s16 = sphi 0, %s28
    %s17 = sphi 0, %s24
    %s18 = sphi 0, %s16
    %s19 = sphi 0, %s17
    %s20 = sphi 0, %s18
    %s21 = sphi 0, %s19
    %s33 = sphi 0, %s35
    %s36 = sphi 0, %s33
    %s37 = sphi 0, %s36
    %s53 = sphi 0, %s37
    %s59 = sphi 0, %s61
    %s62 = sphi 0, %s59
    %s63 = sphi 0, %s62
    %s79 = sphi 0, %s63
    %s83 = sphi 0, %s83
    %s85 = sphi 0, %s83
    %s86 = sphi 0, %s85
    %s100 = sphi 0, %s86
    %s108 = sphi 0, %s110
    %s111 = sphi 0, %s108
    %s112 = sphi 0, %s111
    %s128 = sphi 0, %s112
  $region4: #{film.1} parent=0 // loop_header_branch
    %12 = sbr.rel (%p10) target = $region8
  $region5: #{film.1} parent=0 // loop_body
    %s14 = ssub.s32 %s9, 1
    %s15 = ssub.s32 %s9, 2
    %s22 = sadd.s32 1, %s17
    %p23 = scmp.ge.s32.totalorder %s22, 1
    %s24 = scalar_select %p23, 0, %s22
    %s25 = sadd.s32 1, %s16
    %s26 = scalar_select %p23, %s25, %s16
    %p27 = scmp.ge.s32.totalorder %s26, 2
    %s28 = scalar_select %p27, 0, %s26
    %s29 = ssub.s32 %s16, %s28
    %s30 = ssub.s32 %s17, %s24
    %s31 = sor.u32 %s29, %s30
    %p32 = scmp.eq.s32.totalorder %s31, 0
    %s34 = sadd.s32 %s33, 1
    %s35 = scalar_select %p32, %s33, %s34
    %p38 = pneg %p32
    %p39 = scmp.eq.s32.totalorder %s9, 1
    %p40 = por %p38, %p39
    %p41 = scmp.ne.s32.totalorder %s33, %s36
    %p42 = scmp.eq.s32.totalorder %s9, 0
    %p43 = por %p41, %p42
    %p44 = scmp.ne.s32.totalorder %s33, %s36
    %p45 = scmp.eq.s32.totalorder %s14, 1
    %p46 = por %p44, %p45
    %p47 = scmp.ne.s32.totalorder %s36, %s37
    %p48 = scmp.eq.s32.totalorder %s14, 0
    %p49 = por %p47, %p48
    %p50 = scmp.ne.s32.totalorder %s36, %s37
    %p51 = scmp.eq.s32.totalorder %s15, 1
    %p52 = por %p50, %p51
    %p54 = scmp.ne.s32.totalorder %s37, %s53
    %p55 = scmp.eq.s32.totalorder %s15, 0
    %p56 = por %p54, %p55
    %s57 = ssub.s32 %s16, %s28
    %p58 = scmp.eq.s32.totalorder %s57, 0
    %s60 = sadd.s32 %s59, 1
    %s61 = scalar_select %p58, %s59, %s60
    %p64 = pneg %p58
    %p65 = scmp.eq.s32.totalorder %s9, 1
    %p66 = por %p64, %p65
    %p67 = scmp.ne.s32.totalorder %s59, %s62
    %p68 = scmp.eq.s32.totalorder %s9, 0
    %p69 = por %p67, %p68
    %p70 = scmp.ne.s32.totalorder %s59, %s62
    %p71 = scmp.eq.s32.totalorder %s14, 1
    %p72 = por %p70, %p71
    %p73 = scmp.ne.s32.totalorder %s62, %s63
    %p74 = scmp.eq.s32.totalorder %s14, 0
    %p75 = por %p73, %p74
    %p76 = scmp.ne.s32.totalorder %s62, %s63
    %p77 = scmp.eq.s32.totalorder %s15, 1
    %p78 = por %p76, %p77
    %p80 = scmp.ne.s32.totalorder %s63, %s79
    %p81 = scmp.eq.s32.totalorder %s15, 0
    %p82 = por %p80, %p81
    %s84 = sadd.s32 %s83, 1
    %p87 = scmp.eq.s32.totalorder %s9, 1
    %p88 = scmp.ne.s32.totalorder %s83, %s85
    %p89 = scmp.eq.s32.totalorder %s9, 0
    %p90 = por %p88, %p89
    %p91 = scmp.ne.s32.totalorder %s83, %s85
    %p92 = scmp.eq.s32.totalorder %s14, 1
    %p93 = por %p91, %p92
    %p94 = scmp.ne.s32.totalorder %s85, %s86
    %p95 = scmp.eq.s32.totalorder %s14, 0
    %p96 = por %p94, %p95
    %p97 = scmp.ne.s32.totalorder %s85, %s86
    %p98 = scmp.eq.s32.totalorder %s15, 1
    %p99 = por %p97, %p98
    %p101 = scmp.ne.s32.totalorder %s86, %s100
    %p102 = scmp.eq.s32.totalorder %s15, 0
    %p103 = por %p101, %p102
    %s104 = ssub.s32 %s16, %s28
    %s105 = ssub.s32 %s17, %s24
    %s106 = sor.u32 %s104, %s105
    %p107 = scmp.eq.s32.totalorder %s106, 0
    %s109 = sadd.s32 %s108, 1
    %s110 = scalar_select %p107, %s108, %s109
    %p113 = pneg %p107
    %p114 = scmp.eq.s32.totalorder %s9, 1
    %p115 = por %p113, %p114
    %p116 = scmp.ne.s32.totalorder %s108, %s111
    %p117 = scmp.eq.s32.totalorder %s9, 0
    %p118 = por %p116, %p117
    %p119 = scmp.ne.s32.totalorder %s108, %s111
    %p120 = scmp.eq.s32.totalorder %s14, 1
    %p121 = por %p119, %p120
    %p122 = scmp.ne.s32.totalorder %s111, %s112
    %p123 = scmp.eq.s32.totalorder %s14, 0
    %p124 = por %p122, %p123
    %p125 = scmp.ne.s32.totalorder %s111, %s112
    %p126 = scmp.eq.s32.totalorder %s15, 1
    %p127 = por %p125, %p126
    %p129 = scmp.ne.s32.totalorder %s112, %s128
    %p130 = scmp.eq.s32.totalorder %s15, 0
    %p131 = por %p129, %p130
    %p132 = scmp.le.s32.totalorder 1, %s9
    %p133 = scmp.lt.s32.totalorder %s9, 3
    %p134 = pnand %p132, %p133
    %p135 = pneg %p134
    // Predicated region
    $region9: #{film.1} parent=5 // pred_check
      _
    $region10: #{film.1} parent=5 // pred_check_branch
      %137 = sbr.rel (%p134) target = $region12
    $region11: #{film.1} parent=5 // pred_region
      %s138 = ssub.s32 %s9, 1
      // Predicated region
      $region13: #{film.1} parent=11 // pred_check
        %p139 = pneg %p96
      $region14: #{film.1} parent=11 // pred_check_branch
        %141 = sbr.rel (%p139) target = $region16
      $region15: #{film.1} parent=11 // pred_region
        _
      $region16: #{film.1} parent=11 // pred_fallthru
        _
    $region12: #{film.1} parent=5 // pred_fallthru
      _
    %p142 = scmp.lt.s32.totalorder %s9, 2
    // Predicated region
    $region17: #{film.1} parent=5 // pred_check
      %p143 = pneg %p142
    $region18: #{film.1} parent=5 // pred_check_branch
      %145 = sbr.rel (%p143) target = $region20
    $region19: #{film.1} parent=5 // pred_region
      // Predicated region
      $region21: #{film.1} parent=19 // pred_check
        %p146 = pneg %p43
      $region22: #{film.1} parent=19 // pred_check_branch
        %148 = sbr.rel (%p146) target = $region24
      $region23: #{film.1} parent=19 // pred_region
        %p149 = scmp.lt.s32.totalorder %s16, 1
        %s150 = scalar_select %p149, %s16, 1
        %p151 = scmp.lt.s32.totalorder %s17, 0
        %s152 = scalar_select %p151, %s17, 0
        %s153 = smul.addr %s152, 2
        %s154 = smul.addr %s150, 2
        %s155 = sadd.s32 %s153, %s154
        %s156 = smul.addr %s155, 4
        %s157 = scalar_lea.vmem %s0, %s156
      $region24: #{film.1} parent=19 // pred_fallthru
        _
      // Predicated region
      $region25: #{film.1} parent=19 // pred_check
        %p158 = pneg %p69
      $region26: #{film.1} parent=19 // pred_check_branch
        %160 = sbr.rel (%p158) target = $region28
      $region27: #{film.1} parent=19 // pred_region
        %p161 = scmp.lt.s32.totalorder %s16, 1
        %s162 = scalar_select %p161, %s16, 1
        %s163 = smul.addr %s162, 3
        %s164 = smul.addr %s163, 8
        %s165 = scalar_lea.vmem %s1, %s164
      $region28: #{film.1} parent=19 // pred_fallthru
        _
    $region20: #{film.1} parent=5 // pred_fallthru
      _
    %p166 = scmp.le.s32.totalorder 1, %s9
    %p167 = scmp.lt.s32.totalorder %s9, 3
    %p168 = pnand %p166, %p167
    %p169 = pneg %p168
    // Predicated region
    $region29: #{film.1} parent=5 // pred_check
      _
    $region30: #{film.1} parent=5 // pred_check_branch
      %171 = sbr.rel (%p168) target = $region32
    $region31: #{film.1} parent=5 // pred_region
      %s172 = ssub.s32 %s9, 1
      %p173 = scmp.lt.s32.totalorder %s18, 1
      %s174 = scalar_select %p173, %s18, 1
      %p175 = scmp.lt.s32.totalorder %s19, 0
      %s176 = scalar_select %p175, %s19, 0
      %s177 = smul.addr %s176, 2
      %s178 = smul.addr %s174, 2
      %s179 = sadd.s32 %s177, %s178
      %s180 = smul.addr %s179, 4
      %s181 = scalar_lea.vmem %s0, %s180
      %p182 = pneg %p49
      %p183 = pneg %p46
      %p184 = scmp.lt.s32.totalorder %s18, 1
      %s185 = scalar_select %p184, %s18, 1
      %s186 = smul.addr %s185, 3
      %s187 = smul.addr %s186, 8
      %s188 = scalar_lea.vmem %s1, %s187
      %p189 = pneg %p75
      %p190 = pneg %p72
      %p191 = pneg %p96
      %p192 = pneg %p93
      %p193 = pneg %p124
      %p194 = pneg %p121
      %p195 = scmp.lt.s32.totalorder %s18, 1
      %s196 = scalar_select %p195, %s18, 1
      %p197 = scmp.lt.s32.totalorder %s19, 0
      %s198 = scalar_select %p197, %s19, 0
      %s199 = smul.addr %s198, 2
      %s200 = smul.addr %s196, 2
      %s201 = sadd.s32 %s199, %s200
      %s202 = smul.addr %s201, 4
      %s203 = scalar_lea.vmem %s3, %s202
      %p204 = scmp.lt.s32.totalorder %s18, 1
      %s205 = scalar_select %p204, %s18, 1
      %p206 = scmp.lt.s32.totalorder %s19, 0
      %s207 = scalar_select %p206, %s19, 0
      %s208 = smul.addr %s207, 2
      %s209 = smul.addr %s205, 2
      %s210 = sadd.s32 %s208, %s209
      %s211 = smul.addr %s210, 4
      %s212 = scalar_lea.vmem %s0, %s211
      %p213 = scmp.lt.s32.totalorder %s18, 1
      %s214 = scalar_select %p213, %s18, 1
      %s215 = smul.addr %s214, 3
      %s216 = smul.addr %s215, 8
      %s217 = scalar_lea.vmem %s1, %s216
      %p218 = scmp.lt.s32.totalorder %s18, 1
      %s219 = scalar_select %p218, %s18, 1
      %p220 = scmp.lt.s32.totalorder %s19, 0
      %s221 = scalar_select %p220, %s19, 0
      %s222 = smul.addr %s221, 2
      %s223 = smul.addr %s219, 2
      %s224 = sadd.s32 %s222, %s223
      %s225 = smul.addr %s224, 4
      %s226 = scalar_lea.vmem %s3, %s225
      %p227 = scmp.eq.s32.totalorder %s19, 0
      // Predicated region
      $region33: #{film.1} parent=31 // pred_check
        %p228 = pneg %p227
      $region34: #{film.1} parent=31 // pred_check_branch
        %230 = sbr.rel (%p228) target = $region36
      $region35: #{film.1} parent=31 // pred_region
        %v231 = vld [vmem:[%s217] sm:$0xff]
        %vm232 = vcmask 130048
        %233 = vst.msk [vmem:[#allocation2] sm:$0xff] %vm232, %v231
        %v234 = vld [vmem:[%s217] sm:$0xff]
        %236 = vrot.lane.b32.xlu0 %v234, 126
        %v237 = vpop.permute.xlu0 %236
        %vm239 = vcmask 261248
        %240 = vst.msk [vmem:[#allocation2] sm:$0xff] %vm239, %v237
        %v241 = vld [vmem:[%s217] sm:$0xff]
        %243 = vrot.lane.b32.xlu0 %v241, 124
        %v244 = vpop.permute.xlu0 %243
        %vm246 = vcmask 392448
        %247 = vst.msk [vmem:[#allocation2] sm:$0xff] %vm246, %v244
        %v248 = vld [vmem:[%s217] sm:$0xff]
        %250 = vrot.lane.b32.xlu0 %v248, 122
        %v251 = vpop.permute.xlu0 %250
        %vm253 = vcmask 523648
        %254 = vst.msk [vmem:[#allocation2] sm:$0xff] %vm253, %v251
        %v255 = vld [vmem:[%s217] sm:$0xff]
        %257 = vrot.lane.b32.xlu0 %v255, 120
        %v258 = vpop.permute.xlu0 %257
        %vm260 = vcmask 654848
        %261 = vst.msk [vmem:[#allocation2] sm:$0xff] %vm260, %v258
        %v262 = vld [vmem:[%s217] sm:$0xff]
        %264 = vrot.lane.b32.xlu0 %v262, 118
        %v265 = vpop.permute.xlu0 %264
        %vm267 = vcmask 786048
        %268 = vst.msk [vmem:[#allocation2] sm:$0xff] %vm267, %v265
        %v269 = vld [vmem:[%s217] sm:$0xff]
        %271 = vrot.lane.b32.xlu0 %v269, 116
        %v272 = vpop.permute.xlu0 %271
        %vm274 = vcmask 917248
        %275 = vst.msk [vmem:[#allocation2] sm:$0xff] %vm274, %v272
        %v276 = vld [vmem:[%s217] sm:$0xff]
        %v277 = vld [vmem:[%s217 + $0x8] sm:$0xff]
        %280 = vrot.lane.b32.xlu0 %v276, 114
        %v281 = vpop.permute.xlu0 %280
        %282 = vrot.lane.b32.xlu0 %v277, 114
        %v283 = vpop.permute.xlu0 %282
        %vm284 = vcmask 932864
        %v285 = vsel %vm284, %v281, %v283
        %vm287 = vcmask 1048448
        %288 = vst.msk [vmem:[#allocation2] sm:$0xff] %vm287, %v285
        %v289 = vld [vmem:[%s217 + $0x8] sm:$0xff]
        %291 = vrot.lane.b32.xlu0 %v289, 112
        %v292 = vpop.permute.xlu0 %291
        %294 = vst.msk [vmem:[#allocation2 + $0x8] sm:$0xff] %vm232, %v292
        %v295 = vld [vmem:[%s217 + $0x8] sm:$0xff]
        %297 = vrot.lane.b32.xlu0 %v295, 110
        %v298 = vpop.permute.xlu0 %297
        %300 = vst.msk [vmem:[#allocation2 + $0x8] sm:$0xff] %vm239, %v298
        %v301 = vld [vmem:[%s217 + $0x8] sm:$0xff]
        %303 = vrot.lane.b32.xlu0 %v301, 108
        %v304 = vpop.permute.xlu0 %303
        %306 = vst.msk [vmem:[#allocation2 + $0x8] sm:$0xff] %vm246, %v304
        %v307 = vld [vmem:[%s217 + $0x8] sm:$0xff]
        %309 = vrot.lane.b32.xlu0 %v307, 106
        %v310 = vpop.permute.xlu0 %309
        %312 = vst.msk [vmem:[#allocation2 + $0x8] sm:$0xff] %vm253, %v310
        %v313 = vld [vmem:[%s217 + $0x8] sm:$0xff]
        %315 = vrot.lane.b32.xlu0 %v313, 104
        %v316 = vpop.permute.xlu0 %315
        %318 = vst.msk [vmem:[#allocation2 + $0x8] sm:$0xff] %vm260, %v316
        %v319 = vld [vmem:[%s217 + $0x8] sm:$0xff]
        %321 = vrot.lane.b32.xlu0 %v319, 102
        %v322 = vpop.permute.xlu0 %321
        %324 = vst.msk [vmem:[#allocation2 + $0x8] sm:$0xff] %vm267, %v322
        %v325 = vld [vmem:[%s217 + $0x8] sm:$0xff]
        %v326 = vld [vmem:[%s217 + $0x10] sm:$0xff]
        %329 = vrot.lane.b32.xlu0 %v325, 100
        %v330 = vpop.permute.xlu0 %329
        %331 = vrot.lane.b32.xlu0 %v326, 100
        %v332 = vpop.permute.xlu0 %331
        %vm333 = vcmask 818176
        %v334 = vsel %vm333, %v330, %v332
        %336 = vst.msk [vmem:[#allocation2 + $0x8] sm:$0xff] %vm274, %v334
        %v337 = vld [vmem:[%s217 + $0x10] sm:$0xff]
        %339 = vrot.lane.b32.xlu0 %v337, 98
        %v340 = vpop.permute.xlu0 %339
        %342 = vst.msk [vmem:[#allocation2 + $0x8] sm:$0xff] %vm287, %v340
        %v343 = vld [vmem:[%s217] sm:$0xff]
        %345 = vrot.lane.b32.xlu0 %v343, 127
        %v346 = vpop.permute.xlu0 %345
        %348 = vst.msk [vmem:[#allocation2 + $0x10] sm:$0xff] %vm232, %v346
        %v349 = vld [vmem:[%s217] sm:$0xff]
        %351 = vrot.lane.b32.xlu0 %v349, 125
        %v352 = vpop.permute.xlu0 %351
        %354 = vst.msk [vmem:[#allocation2 + $0x10] sm:$0xff] %vm239, %v352
        %v355 = vld [vmem:[%s217] sm:$0xff]
        %357 = vrot.lane.b32.xlu0 %v355, 123
        %v358 = vpop.permute.xlu0 %357
        %360 = vst.msk [vmem:[#allocation2 + $0x10] sm:$0xff] %vm246, %v358
        %v361 = vld [vmem:[%s217] sm:$0xff]
        %363 = vrot.lane.b32.xlu0 %v361, 121
        %v364 = vpop.permute.xlu0 %363
        %366 = vst.msk [vmem:[#allocation2 + $0x10] sm:$0xff] %vm253, %v364
        %v367 = vld [vmem:[%s217] sm:$0xff]
        %369 = vrot.lane.b32.xlu0 %v367, 119
        %v370 = vpop.permute.xlu0 %369
        %372 = vst.msk [vmem:[#allocation2 + $0x10] sm:$0xff] %vm260, %v370
        %v373 = vld [vmem:[%s217] sm:$0xff]
        %375 = vrot.lane.b32.xlu0 %v373, 117
        %v376 = vpop.permute.xlu0 %375
        %378 = vst.msk [vmem:[#allocation2 + $0x10] sm:$0xff] %vm267, %v376
        %v379 = vld [vmem:[%s217] sm:$0xff]
        %381 = vrot.lane.b32.xlu0 %v379, 115
        %v382 = vpop.permute.xlu0 %381
        %384 = vst.msk [vmem:[#allocation2 + $0x10] sm:$0xff] %vm274, %v382
        %v385 = vld [vmem:[%s217] sm:$0xff]
        %v386 = vld [vmem:[%s217 + $0x8] sm:$0xff]
        %389 = vrot.lane.b32.xlu0 %v385, 113
        %v390 = vpop.permute.xlu0 %389
        %391 = vrot.lane.b32.xlu0 %v386, 113
        %v392 = vpop.permute.xlu0 %391
        %vm393 = vcmask 924672
        %v394 = vsel %vm393, %v390, %v392
        %396 = vst.msk [vmem:[#allocation2 + $0x10] sm:$0xff] %vm287, %v394
        %v397 = vld [vmem:[%s217 + $0x8] sm:$0xff]
        %399 = vrot.lane.b32.xlu0 %v397, 111
        %v400 = vpop.permute.xlu0 %399
        %402 = vst.msk [vmem:[#allocation2 + $0x18] sm:$0xff] %vm232, %v400
        %v403 = vld [vmem:[%s217 + $0x8] sm:$0xff]
        %405 = vrot.lane.b32.xlu0 %v403, 109
        %v406 = vpop.permute.xlu0 %405
        %408 = vst.msk [vmem:[#allocation2 + $0x18] sm:$0xff] %vm239, %v406
        %v409 = vld [vmem:[%s217 + $0x8] sm:$0xff]
        %411 = vrot.lane.b32.xlu0 %v409, 107
        %v412 = vpop.permute.xlu0 %411
        %414 = vst.msk [vmem:[#allocation2 + $0x18] sm:$0xff] %vm246, %v412
        %v415 = vld [vmem:[%s217 + $0x8] sm:$0xff]
        %417 = vrot.lane.b32.xlu0 %v415, 105
        %v418 = vpop.permute.xlu0 %417
        %420 = vst.msk [vmem:[#allocation2 + $0x18] sm:$0xff] %vm253, %v418
        %v421 = vld [vmem:[%s217 + $0x8] sm:$0xff]
        %423 = vrot.lane.b32.xlu0 %v421, 103
        %v424 = vpop.permute.xlu0 %423
        %426 = vst.msk [vmem:[#allocation2 + $0x18] sm:$0xff] %vm260, %v424
        %v427 = vld [vmem:[%s217 + $0x8] sm:$0xff]
        %429 = vrot.lane.b32.xlu0 %v427, 101
        %v430 = vpop.permute.xlu0 %429
        %432 = vst.msk [vmem:[#allocation2 + $0x18] sm:$0xff] %vm267, %v430
        %v433 = vld [vmem:[%s217 + $0x8] sm:$0xff]
        %v434 = vld [vmem:[%s217 + $0x10] sm:$0xff]
        %437 = vrot.lane.b32.xlu0 %v433, 99
        %v438 = vpop.permute.xlu0 %437
        %439 = vrot.lane.b32.xlu0 %v434, 99
        %v440 = vpop.permute.xlu0 %439
        %vm441 = vcmask 809984
        %v442 = vsel %vm441, %v438, %v440
        %444 = vst.msk [vmem:[#allocation2 + $0x18] sm:$0xff] %vm274, %v442
        %v445 = vld [vmem:[%s217 + $0x10] sm:$0xff]
        %447 = vrot.lane.b32.xlu0 %v445, 97
        %v448 = vpop.permute.xlu0 %447
        %450 = vst.msk [vmem:[#allocation2 + $0x18] sm:$0xff] %vm287, %v448
        %v451 = vld [vmem:[%s217] sm:$0xff]
        %453 = vrot.lane.b32.xlu0 %v451, 126
        %v454 = vpop.permute.xlu0 %453
        %456 = vst.msk [vmem:[#allocation2 + $0x20] sm:$0xff] %vm232, %v454
        %v457 = vld [vmem:[%s217] sm:$0xff]
        %459 = vrot.lane.b32.xlu0 %v457, 124
        %v460 = vpop.permute.xlu0 %459
        %462 = vst.msk [vmem:[#allocation2 + $0x20] sm:$0xff] %vm239, %v460
        %v463 = vld [vmem:[%s217] sm:$0xff]
        %465 = vrot.lane.b32.xlu0 %v463, 122
        %v466 = vpop.permute.xlu0 %465
        %468 = vst.msk [vmem:[#allocation2 + $0x20] sm:$0xff] %vm246, %v466
        %v469 = vld [vmem:[%s217] sm:$0xff]
        %471 = vrot.lane.b32.xlu0 %v469, 120
        %v472 = vpop.permute.xlu0 %471
        %474 = vst.msk [vmem:[#allocation2 + $0x20] sm:$0xff] %vm253, %v472
        %v475 = vld [vmem:[%s217] sm:$0xff]
        %477 = vrot.lane.b32.xlu0 %v475, 118
        %v478 = vpop.permute.xlu0 %477
        %480 = vst.msk [vmem:[#allocation2 + $0x20] sm:$0xff] %vm260, %v478
        %v481 = vld [vmem:[%s217] sm:$0xff]
        %483 = vrot.lane.b32.xlu0 %v481, 116
        %v484 = vpop.permute.xlu0 %483
        %486 = vst.msk [vmem:[#allocation2 + $0x20] sm:$0xff] %vm267, %v484
        %v487 = vld [vmem:[%s217] sm:$0xff]
        %489 = vrot.lane.b32.xlu0 %v487, 114
        %v490 = vpop.permute.xlu0 %489
        %492 = vst.msk [vmem:[#allocation2 + $0x20] sm:$0xff] %vm274, %v490
        %v493 = vld [vmem:[%s217 + $0x8] sm:$0xff]
        %495 = vrot.lane.b32.xlu0 %v493, 112
        %v496 = vpop.permute.xlu0 %495
        %498 = vst.msk [vmem:[#allocation2 + $0x20] sm:$0xff] %vm287, %v496
        %v499 = vld [vmem:[%s217 + $0x8] sm:$0xff]
        %501 = vrot.lane.b32.xlu0 %v499, 110
        %v502 = vpop.permute.xlu0 %501
        %504 = vst.msk [vmem:[#allocation2 + $0x28] sm:$0xff] %vm232, %v502
        %v505 = vld [vmem:[%s217 + $0x8] sm:$0xff]
        %507 = vrot.lane.b32.xlu0 %v505, 108
        %v508 = vpop.permute.xlu0 %507
        %510 = vst.msk [vmem:[#allocation2 + $0x28] sm:$0xff] %vm239, %v508
        %v511 = vld [vmem:[%s217 + $0x8] sm:$0xff]
        %513 = vrot.lane.b32.xlu0 %v511, 106
        %v514 = vpop.permute.xlu0 %513
        %516 = vst.msk [vmem:[#allocation2 + $0x28] sm:$0xff] %vm246, %v514
        %v517 = vld [vmem:[%s217 + $0x8] sm:$0xff]
        %519 = vrot.lane.b32.xlu0 %v517, 104
        %v520 = vpop.permute.xlu0 %519
        %522 = vst.msk [vmem:[#allocation2 + $0x28] sm:$0xff] %vm253, %v520
        %v523 = vld [vmem:[%s217 + $0x8] sm:$0xff]
        %525 = vrot.lane.b32.xlu0 %v523, 102
        %v526 = vpop.permute.xlu0 %525
        %528 = vst.msk [vmem:[#allocation2 + $0x28] sm:$0xff] %vm260, %v526
        %v529 = vld [vmem:[%s217 + $0x8] sm:$0xff]
        %531 = vrot.lane.b32.xlu0 %v529, 100
        %v532 = vpop.permute.xlu0 %531
        %534 = vst.msk [vmem:[#allocation2 + $0x28] sm:$0xff] %vm267, %v532
        %v535 = vld [vmem:[%s217 + $0x8] sm:$0xff]
        %v536 = vld [vmem:[%s217 + $0x10] sm:$0xff]
        %539 = vrot.lane.b32.xlu0 %v535, 98
        %v540 = vpop.permute.xlu0 %539
        %541 = vrot.lane.b32.xlu0 %v536, 98
        %v542 = vpop.permute.xlu0 %541
        %vm543 = vcmask 801792
        %v544 = vsel %vm543, %v540, %v542
        %546 = vst.msk [vmem:[#allocation2 + $0x28] sm:$0xff] %vm274, %v544
        %v547 = vld [vmem:[%s217 + $0x10] sm:$0xff]
        %549 = vrot.lane.b32.xlu0 %v547, 96
        %v550 = vpop.permute.xlu0 %549
        %552 = vst.msk [vmem:[#allocation2 + $0x28] sm:$0xff] %vm287, %v550
        %v553 = vld [vmem:[%s217] sm:$0xff]
        %555 = vrot.lane.b32.xlu0 %v553, 110
        %v556 = vpop.permute.xlu0 %555
        %558 = vst.msk [vmem:[#allocation2 + $0x30] sm:$0xff] %vm232, %v556
        %v559 = vld [vmem:[%s217] sm:$0xff]
        %561 = vrot.lane.b32.xlu0 %v559, 108
        %v562 = vpop.permute.xlu0 %561
        %564 = vst.msk [vmem:[#allocation2 + $0x30] sm:$0xff] %vm239, %v562
        %v565 = vld [vmem:[%s217] sm:$0xff]
        %567 = vrot.lane.b32.xlu0 %v565, 106
        %v568 = vpop.permute.xlu0 %567
        %570 = vst.msk [vmem:[#allocation2 + $0x30] sm:$0xff] %vm246, %v568
        %v571 = vld [vmem:[%s217] sm:$0xff]
        %573 = vrot.lane.b32.xlu0 %v571, 104
        %v574 = vpop.permute.xlu0 %573
        %576 = vst.msk [vmem:[#allocation2 + $0x30] sm:$0xff] %vm253, %v574
        %v577 = vld [vmem:[%s217] sm:$0xff]
        %579 = vrot.lane.b32.xlu0 %v577, 102
        %v580 = vpop.permute.xlu0 %579
        %582 = vst.msk [vmem:[#allocation2 + $0x30] sm:$0xff] %vm260, %v580
        %v583 = vld [vmem:[%s217] sm:$0xff]
        %585 = vrot.lane.b32.xlu0 %v583, 100
        %v586 = vpop.permute.xlu0 %585
        %588 = vst.msk [vmem:[#allocation2 + $0x30] sm:$0xff] %vm267, %v586
        %v589 = vld [vmem:[%s217] sm:$0xff]
        %v590 = vld [vmem:[%s217 + $0x8] sm:$0xff]
        %593 = vrot.lane.b32.xlu0 %v589, 98
        %v594 = vpop.permute.xlu0 %593
        %595 = vrot.lane.b32.xlu0 %v590, 98
        %v596 = vpop.permute.xlu0 %595
        %v597 = vsel %vm543, %v594, %v596
        %599 = vst.msk [vmem:[#allocation2 + $0x30] sm:$0xff] %vm274, %v597
        %v600 = vld [vmem:[%s217 + $0x8] sm:$0xff]
        %602 = vrot.lane.b32.xlu0 %v600, 96
        %v603 = vpop.permute.xlu0 %602
        %605 = vst.msk [vmem:[#allocation2 + $0x30] sm:$0xff] %vm287, %v603
        %v606 = vld [vmem:[%s217 + $0x8] sm:$0xff]
        %608 = vrot.lane.b32.xlu0 %v606, 94
        %v609 = vpop.permute.xlu0 %608
        %611 = vst.msk [vmem:[#allocation2 + $0x38] sm:$0xff] %vm232, %v609
        %v612 = vld [vmem:[%s217 + $0x8] sm:$0xff]
        %614 = vrot.lane.b32.xlu0 %v612, 92
        %v615 = vpop.permute.xlu0 %614
        %617 = vst.msk [vmem:[#allocation2 + $0x38] sm:$0xff] %vm239, %v615
        %v618 = vld [vmem:[%s217 + $0x8] sm:$0xff]
        %620 = vrot.lane.b32.xlu0 %v618, 90
        %v621 = vpop.permute.xlu0 %620
        %623 = vst.msk [vmem:[#allocation2 + $0x38] sm:$0xff] %vm246, %v621
        %v624 = vld [vmem:[%s217 + $0x8] sm:$0xff]
        %626 = vrot.lane.b32.xlu0 %v624, 88
        %v627 = vpop.permute.xlu0 %626
        %629 = vst.msk [vmem:[#allocation2 + $0x38] sm:$0xff] %vm253, %v627
        %v630 = vld [vmem:[%s217 + $0x8] sm:$0xff]
        %632 = vrot.lane.b32.xlu0 %v630, 86
        %v633 = vpop.permute.xlu0 %632
        %635 = vst.msk [vmem:[#allocation2 + $0x38] sm:$0xff] %vm260, %v633
        %v636 = vld [vmem:[%s217 + $0x8] sm:$0xff]
        %v637 = vld [vmem:[%s217 + $0x10] sm:$0xff]
        %640 = vrot.lane.b32.xlu0 %v636, 84
        %v641 = vpop.permute.xlu0 %640
        %642 = vrot.lane.b32.xlu0 %v637, 84
        %v643 = vpop.permute.xlu0 %642
        %vm644 = vcmask 687104
        %v645 = vsel %vm644, %v641, %v643
        %647 = vst.msk [vmem:[#allocation2 + $0x38] sm:$0xff] %vm267, %v645
        %v648 = vld [vmem:[%s217 + $0x10] sm:$0xff]
        %650 = vrot.lane.b32.xlu0 %v648, 82
        %v651 = vpop.permute.xlu0 %650
        %653 = vst.msk [vmem:[#allocation2 + $0x38] sm:$0xff] %vm274, %v651
        %v654 = vld [vmem:[%s217 + $0x10] sm:$0xff]
        %656 = vrot.lane.b32.xlu0 %v654, 80
        %v657 = vpop.permute.xlu0 %656
        %659 = vst.msk [vmem:[#allocation2 + $0x38] sm:$0xff] %vm287, %v657
        %v660 = vld [vmem:[%s217] sm:$0xff]
        %662 = vrot.lane.b32.xlu0 %v660, 109
        %v663 = vpop.permute.xlu0 %662
        %665 = vst.msk [vmem:[#allocation2 + $0x40] sm:$0xff] %vm232, %v663
        %v666 = vld [vmem:[%s217] sm:$0xff]
        %668 = vrot.lane.b32.xlu0 %v666, 107
        %v669 = vpop.permute.xlu0 %668
        %671 = vst.msk [vmem:[#allocation2 + $0x40] sm:$0xff] %vm239, %v669
        %v672 = vld [vmem:[%s217] sm:$0xff]
        %674 = vrot.lane.b32.xlu0 %v672, 105
        %v675 = vpop.permute.xlu0 %674
        %677 = vst.msk [vmem:[#allocation2 + $0x40] sm:$0xff] %vm246, %v675
        %v678 = vld [vmem:[%s217] sm:$0xff]
        %680 = vrot.lane.b32.xlu0 %v678, 103
        %v681 = vpop.permute.xlu0 %680
        %683 = vst.msk [vmem:[#allocation2 + $0x40] sm:$0xff] %vm253, %v681
        %v684 = vld [vmem:[%s217] sm:$0xff]
        %686 = vrot.lane.b32.xlu0 %v684, 101
        %v687 = vpop.permute.xlu0 %686
        %689 = vst.msk [vmem:[#allocation2 + $0x40] sm:$0xff] %vm260, %v687
        %v690 = vld [vmem:[%s217] sm:$0xff]
        %692 = vrot.lane.b32.xlu0 %v690, 99
        %v693 = vpop.permute.xlu0 %692
        %695 = vst.msk [vmem:[#allocation2 + $0x40] sm:$0xff] %vm267, %v693
        %v696 = vld [vmem:[%s217] sm:$0xff]
        %v697 = vld [vmem:[%s217 + $0x8] sm:$0xff]
        %700 = vrot.lane.b32.xlu0 %v696, 97
        %v701 = vpop.permute.xlu0 %700
        %702 = vrot.lane.b32.xlu0 %v697, 97
        %v703 = vpop.permute.xlu0 %702
        %vm704 = vcmask 793600
        %v705 = vsel %vm704, %v701, %v703
        %707 = vst.msk [vmem:[#allocation2 + $0x40] sm:$0xff] %vm274, %v705
        %v708 = vld [vmem:[%s217 + $0x8] sm:$0xff]
        %710 = vrot.lane.b32.xlu0 %v708, 95
        %v711 = vpop.permute.xlu0 %710
        %713 = vst.msk [vmem:[#allocation2 + $0x40] sm:$0xff] %vm287, %v711
        %v714 = vld [vmem:[%s217 + $0x8] sm:$0xff]
        %716 = vrot.lane.b32.xlu0 %v714, 93
        %v717 = vpop.permute.xlu0 %716
        %719 = vst.msk [vmem:[#allocation2 + $0x48] sm:$0xff] %vm232, %v717
        %v720 = vld [vmem:[%s217 + $0x8] sm:$0xff]
        %722 = vrot.lane.b32.xlu0 %v720, 91
        %v723 = vpop.permute.xlu0 %722
        %725 = vst.msk [vmem:[#allocation2 + $0x48] sm:$0xff] %vm239, %v723
        %v726 = vld [vmem:[%s217 + $0x8] sm:$0xff]
        %728 = vrot.lane.b32.xlu0 %v726, 89
        %v729 = vpop.permute.xlu0 %728
        %731 = vst.msk [vmem:[#allocation2 + $0x48] sm:$0xff] %vm246, %v729
        %v732 = vld [vmem:[%s217 + $0x8] sm:$0xff]
        %734 = vrot.lane.b32.xlu0 %v732, 87
        %v735 = vpop.permute.xlu0 %734
        %737 = vst.msk [vmem:[#allocation2 + $0x48] sm:$0xff] %vm253, %v735
        %v738 = vld [vmem:[%s217 + $0x8] sm:$0xff]
        %740 = vrot.lane.b32.xlu0 %v738, 85
        %v741 = vpop.permute.xlu0 %740
        %743 = vst.msk [vmem:[#allocation2 + $0x48] sm:$0xff] %vm260, %v741
        %v744 = vld [vmem:[%s217 + $0x8] sm:$0xff]
        %v745 = vld [vmem:[%s217 + $0x10] sm:$0xff]
        %748 = vrot.lane.b32.xlu0 %v744, 83
        %v749 = vpop.permute.xlu0 %748
        %750 = vrot.lane.b32.xlu0 %v745, 83
        %v751 = vpop.permute.xlu0 %750
        %vm752 = vcmask 678912
        %v753 = vsel %vm752, %v749, %v751
        %755 = vst.msk [vmem:[#allocation2 + $0x48] sm:$0xff] %vm267, %v753
        %v756 = vld [vmem:[%s217 + $0x10] sm:$0xff]
        %758 = vrot.lane.b32.xlu0 %v756, 81
        %v759 = vpop.permute.xlu0 %758
        %761 = vst.msk [vmem:[#allocation2 + $0x48] sm:$0xff] %vm274, %v759
        %v762 = vld [vmem:[%s217 + $0x10] sm:$0xff]
        %764 = vrot.lane.b32.xlu0 %v762, 79
        %v765 = vpop.permute.xlu0 %764
        %767 = vst.msk [vmem:[#allocation2 + $0x48] sm:$0xff] %vm287, %v765
        %v768 = vld [vmem:[%s217] sm:$0xff]
        %770 = vrot.lane.b32.xlu0 %v768, 108
        %v771 = vpop.permute.xlu0 %770
        %773 = vst.msk [vmem:[#allocation2 + $0x50] sm:$0xff] %vm232, %v771
        %v774 = vld [vmem:[%s217] sm:$0xff]
        %776 = vrot.lane.b32.xlu0 %v774, 106
        %v777 = vpop.permute.xlu0 %776
        %779 = vst.msk [vmem:[#allocation2 + $0x50] sm:$0xff] %vm239, %v777
        %v780 = vld [vmem:[%s217] sm:$0xff]
        %782 = vrot.lane.b32.xlu0 %v780, 104
        %v783 = vpop.permute.xlu0 %782
        %785 = vst.msk [vmem:[#allocation2 + $0x50] sm:$0xff] %vm246, %v783
        %v786 = vld [vmem:[%s217] sm:$0xff]
        %788 = vrot.lane.b32.xlu0 %v786, 102
        %v789 = vpop.permute.xlu0 %788
        %791 = vst.msk [vmem:[#allocation2 + $0x50] sm:$0xff] %vm253, %v789
        %v792 = vld [vmem:[%s217] sm:$0xff]
        %794 = vrot.lane.b32.xlu0 %v792, 100
        %v795 = vpop.permute.xlu0 %794
        %797 = vst.msk [vmem:[#allocation2 + $0x50] sm:$0xff] %vm260, %v795
        %v798 = vld [vmem:[%s217] sm:$0xff]
        %800 = vrot.lane.b32.xlu0 %v798, 98
        %v801 = vpop.permute.xlu0 %800
        %803 = vst.msk [vmem:[#allocation2 + $0x50] sm:$0xff] %vm267, %v801
        %v804 = vld [vmem:[%s217 + $0x8] sm:$0xff]
        %806 = vrot.lane.b32.xlu0 %v804, 96
        %v807 = vpop.permute.xlu0 %806
        %809 = vst.msk [vmem:[#allocation2 + $0x50] sm:$0xff] %vm274, %v807
        %v810 = vld [vmem:[%s217 + $0x8] sm:$0xff]
        %812 = vrot.lane.b32.xlu0 %v810, 94
        %v813 = vpop.permute.xlu0 %812
        %815 = vst.msk [vmem:[#allocation2 + $0x50] sm:$0xff] %vm287, %v813
        %v816 = vld [vmem:[%s217 + $0x8] sm:$0xff]
        %818 = vrot.lane.b32.xlu0 %v816, 92
        %v819 = vpop.permute.xlu0 %818
        %821 = vst.msk [vmem:[#allocation2 + $0x58] sm:$0xff] %vm232, %v819
        %v822 = vld [vmem:[%s217 + $0x8] sm:$0xff]
        %824 = vrot.lane.b32.xlu0 %v822, 90
        %v825 = vpop.permute.xlu0 %824
        %827 = vst.msk [vmem:[#allocation2 + $0x58] sm:$0xff] %vm239, %v825
        %v828 = vld [vmem:[%s217 + $0x8] sm:$0xff]
        %830 = vrot.lane.b32.xlu0 %v828, 88
        %v831 = vpop.permute.xlu0 %830
        %833 = vst.msk [vmem:[#allocation2 + $0x58] sm:$0xff] %vm246, %v831
        %v834 = vld [vmem:[%s217 + $0x8] sm:$0xff]
        %836 = vrot.lane.b32.xlu0 %v834, 86
        %v837 = vpop.permute.xlu0 %836
        %839 = vst.msk [vmem:[#allocation2 + $0x58] sm:$0xff] %vm253, %v837
        %v840 = vld [vmem:[%s217 + $0x8] sm:$0xff]
        %842 = vrot.lane.b32.xlu0 %v840, 84
        %v843 = vpop.permute.xlu0 %842
        %845 = vst.msk [vmem:[#allocation2 + $0x58] sm:$0xff] %vm260, %v843
        %v846 = vld [vmem:[%s217 + $0x8] sm:$0xff]
        %v847 = vld [vmem:[%s217 + $0x10] sm:$0xff]
        %850 = vrot.lane.b32.xlu0 %v846, 82
        %v851 = vpop.permute.xlu0 %850
        %852 = vrot.lane.b32.xlu0 %v847, 82
        %v853 = vpop.permute.xlu0 %852
        %vm854 = vcmask 670720
        %v855 = vsel %vm854, %v851, %v853
        %857 = vst.msk [vmem:[#allocation2 + $0x58] sm:$0xff] %vm267, %v855
        %v858 = vld [vmem:[%s217 + $0x10] sm:$0xff]
        %860 = vrot.lane.b32.xlu0 %v858, 80
        %v861 = vpop.permute.xlu0 %860
        %863 = vst.msk [vmem:[#allocation2 + $0x58] sm:$0xff] %vm274, %v861
        %v864 = vld [vmem:[%s217 + $0x10] sm:$0xff]
        %866 = vrot.lane.b32.xlu0 %v864, 78
        %v867 = vpop.permute.xlu0 %866
        %869 = vst.msk [vmem:[#allocation2 + $0x58] sm:$0xff] %vm287, %v867
        %v870 = vld [vmem:[%s217] sm:$0xff]
        %872 = vrot.lane.b32.xlu0 %v870, 92
        %v873 = vpop.permute.xlu0 %872
        %875 = vst.msk [vmem:[#allocation2 + $0x60] sm:$0xff] %vm232, %v873
        %v876 = vld [vmem:[%s217] sm:$0xff]
        %878 = vrot.lane.b32.xlu0 %v876, 90
        %v879 = vpop.permute.xlu0 %878
        %881 = vst.msk [vmem:[#allocation2 + $0x60] sm:$0xff] %vm239, %v879
        %v882 = vld [vmem:[%s217] sm:$0xff]
        %884 = vrot.lane.b32.xlu0 %v882, 88
        %v885 = vpop.permute.xlu0 %884
        %887 = vst.msk [vmem:[#allocation2 + $0x60] sm:$0xff] %vm246, %v885
        %v888 = vld [vmem:[%s217] sm:$0xff]
        %890 = vrot.lane.b32.xlu0 %v888, 86
        %v891 = vpop.permute.xlu0 %890
        %893 = vst.msk [vmem:[#allocation2 + $0x60] sm:$0xff] %vm253, %v891
        %v894 = vld [vmem:[%s217] sm:$0xff]
        %896 = vrot.lane.b32.xlu0 %v894, 84
        %v897 = vpop.permute.xlu0 %896
        %899 = vst.msk [vmem:[#allocation2 + $0x60] sm:$0xff] %vm260, %v897
        %v900 = vld [vmem:[%s217] sm:$0xff]
        %v901 = vld [vmem:[%s217 + $0x8] sm:$0xff]
        %904 = vrot.lane.b32.xlu0 %v900, 82
        %v905 = vpop.permute.xlu0 %904
        %906 = vrot.lane.b32.xlu0 %v901, 82
        %v907 = vpop.permute.xlu0 %906
        %v908 = vsel %vm854, %v905, %v907
        %910 = vst.msk [vmem:[#allocation2 + $0x60] sm:$0xff] %vm267, %v908
        %v911 = vld [vmem:[%s217 + $0x8] sm:$0xff]
        %913 = vrot.lane.b32.xlu0 %v911, 80
        %v914 = vpop.permute.xlu0 %913
        %916 = vst.msk [vmem:[#allocation2 + $0x60] sm:$0xff] %vm274, %v914
        %v917 = vld [vmem:[%s217 + $0x8] sm:$0xff]
        %919 = vrot.lane.b32.xlu0 %v917, 78
        %v920 = vpop.permute.xlu0 %919
        %922 = vst.msk [vmem:[#allocation2 + $0x60] sm:$0xff] %vm287, %v920
        %v923 = vld [vmem:[%s217 + $0x8] sm:$0xff]
        %925 = vrot.lane.b32.xlu0 %v923, 76
        %v926 = vpop.permute.xlu0 %925
        %928 = vst.msk [vmem:[#allocation2 + $0x68] sm:$0xff] %vm232, %v926
        %v929 = vld [vmem:[%s217 + $0x8] sm:$0xff]
        %931 = vrot.lane.b32.xlu0 %v929, 74
        %v932 = vpop.permute.xlu0 %931
        %934 = vst.msk [vmem:[#allocation2 + $0x68] sm:$0xff] %vm239, %v932
        %v935 = vld [vmem:[%s217 + $0x8] sm:$0xff]
        %937 = vrot.lane.b32.xlu0 %v935, 72
        %v938 = vpop.permute.xlu0 %937
        %940 = vst.msk [vmem:[#allocation2 + $0x68] sm:$0xff] %vm246, %v938
        %v941 = vld [vmem:[%s217 + $0x8] sm:$0xff]
        %943 = vrot.lane.b32.xlu0 %v941, 70
        %v944 = vpop.permute.xlu0 %943
        %946 = vst.msk [vmem:[#allocation2 + $0x68] sm:$0xff] %vm253, %v944
        %v947 = vld [vmem:[%s217 + $0x8] sm:$0xff]
        %v948 = vld [vmem:[%s217 + $0x10] sm:$0xff]
        %951 = vrot.lane.b32.xlu0 %v947, 68
        %v952 = vpop.permute.xlu0 %951
        %953 = vrot.lane.b32.xlu0 %v948, 68
        %v954 = vpop.permute.xlu0 %953
        %vm955 = vcmask 556032
        %v956 = vsel %vm955, %v952, %v954
        %958 = vst.msk [vmem:[#allocation2 + $0x68] sm:$0xff] %vm260, %v956
        %v959 = vld [vmem:[%s217 + $0x10] sm:$0xff]
        %961 = vrot.lane.b32.xlu0 %v959, 66
        %v962 = vpop.permute.xlu0 %961
        %964 = vst.msk [vmem:[#allocation2 + $0x68] sm:$0xff] %vm267, %v962
        %v965 = vld [vmem:[%s217 + $0x10] sm:$0xff]
        %967 = vrot.lane.b32.xlu0 %v965, 64
        %v968 = vpop.permute.xlu0 %967
        %970 = vst.msk [vmem:[#allocation2 + $0x68] sm:$0xff] %vm274, %v968
        %v971 = vld [vmem:[%s217 + $0x10] sm:$0xff]
        %973 = vrot.lane.b32.xlu0 %v971, 62
        %v974 = vpop.permute.xlu0 %973
        %976 = vst.msk [vmem:[#allocation2 + $0x68] sm:$0xff] %vm287, %v974
        %v977 = vld [vmem:[%s217] sm:$0xff]
        %979 = vrot.lane.b32.xlu0 %v977, 91
        %v980 = vpop.permute.xlu0 %979
        %982 = vst.msk [vmem:[#allocation2 + $0x70] sm:$0xff] %vm232, %v980
        %v983 = vld [vmem:[%s217] sm:$0xff]
        %985 = vrot.lane.b32.xlu0 %v983, 89
        %v986 = vpop.permute.xlu0 %985
        %988 = vst.msk [vmem:[#allocation2 + $0x70] sm:$0xff] %vm239, %v986
        %v989 = vld [vmem:[%s217] sm:$0xff]
        %991 = vrot.lane.b32.xlu0 %v989, 87
        %v992 = vpop.permute.xlu0 %991
        %994 = vst.msk [vmem:[#allocation2 + $0x70] sm:$0xff] %vm246, %v992
        %v995 = vld [vmem:[%s217] sm:$0xff]
        %997 = vrot.lane.b32.xlu0 %v995, 85
        %v998 = vpop.permute.xlu0 %997
        %1000 = vst.msk [vmem:[#allocation2 + $0x70] sm:$0xff] %vm253, %v998
        %v1001 = vld [vmem:[%s217] sm:$0xff]
        %1003 = vrot.lane.b32.xlu0 %v1001, 83
        %v1004 = vpop.permute.xlu0 %1003
        %1006 = vst.msk [vmem:[#allocation2 + $0x70] sm:$0xff] %vm260, %v1004
        %v1007 = vld [vmem:[%s217] sm:$0xff]
        %v1008 = vld [vmem:[%s217 + $0x8] sm:$0xff]
        %1011 = vrot.lane.b32.xlu0 %v1007, 81
        %v1012 = vpop.permute.xlu0 %1011
        %1013 = vrot.lane.b32.xlu0 %v1008, 81
        %v1014 = vpop.permute.xlu0 %1013
        %vm1015 = vcmask 662528
        %v1016 = vsel %vm1015, %v1012, %v1014
        %1018 = vst.msk [vmem:[#allocation2 + $0x70] sm:$0xff] %vm267, %v1016
        %v1019 = vld [vmem:[%s217 + $0x8] sm:$0xff]
        %1021 = vrot.lane.b32.xlu0 %v1019, 79
        %v1022 = vpop.permute.xlu0 %1021
        %1024 = vst.msk [vmem:[#allocation2 + $0x70] sm:$0xff] %vm274, %v1022
        %v1025 = vld [vmem:[%s217 + $0x8] sm:$0xff]
        %1027 = vrot.lane.b32.xlu0 %v1025, 77
        %v1028 = vpop.permute.xlu0 %1027
        %1030 = vst.msk [vmem:[#allocation2 + $0x70] sm:$0xff] %vm287, %v1028
        %v1031 = vld [vmem:[%s217 + $0x8] sm:$0xff]
        %1033 = vrot.lane.b32.xlu0 %v1031, 75
        %v1034 = vpop.permute.xlu0 %1033
        %1036 = vst.msk [vmem:[#allocation2 + $0x78] sm:$0xff] %vm232, %v1034
        %v1037 = vld [vmem:[%s217 + $0x8] sm:$0xff]
        %1039 = vrot.lane.b32.xlu0 %v1037, 73
        %v1040 = vpop.permute.xlu0 %1039
        %1042 = vst.msk [vmem:[#allocation2 + $0x78] sm:$0xff] %vm239, %v1040
        %v1043 = vld [vmem:[%s217 + $0x8] sm:$0xff]
        %1045 = vrot.lane.b32.xlu0 %v1043, 71
        %v1046 = vpop.permute.xlu0 %1045
        %1048 = vst.msk [vmem:[#allocation2 + $0x78] sm:$0xff] %vm246, %v1046
        %v1049 = vld [vmem:[%s217 + $0x8] sm:$0xff]
        %1051 = vrot.lane.b32.xlu0 %v1049, 69
        %v1052 = vpop.permute.xlu0 %1051
        %1054 = vst.msk [vmem:[#allocation2 + $0x78] sm:$0xff] %vm253, %v1052
        %v1055 = vld [vmem:[%s217 + $0x8] sm:$0xff]
        %v1056 = vld [vmem:[%s217 + $0x10] sm:$0xff]
        %1059 = vrot.lane.b32.xlu0 %v1055, 67
        %v1060 = vpop.permute.xlu0 %1059
        %1061 = vrot.lane.b32.xlu0 %v1056, 67
        %v1062 = vpop.permute.xlu0 %1061
        %vm1063 = vcmask 547840
        %v1064 = vsel %vm1063, %v1060, %v1062
        %1066 = vst.msk [vmem:[#allocation2 + $0x78] sm:$0xff] %vm260, %v1064
        %v1067 = vld [vmem:[%s217 + $0x10] sm:$0xff]
        %1069 = vrot.lane.b32.xlu0 %v1067, 65
        %v1070 = vpop.permute.xlu0 %1069
        %1072 = vst.msk [vmem:[#allocation2 + $0x78] sm:$0xff] %vm267, %v1070
        %v1073 = vld [vmem:[%s217 + $0x10] sm:$0xff]
        %1075 = vrot.lane.b32.xlu0 %v1073, 63
        %v1076 = vpop.permute.xlu0 %1075
        %1078 = vst.msk [vmem:[#allocation2 + $0x78] sm:$0xff] %vm274, %v1076
        %v1079 = vld [vmem:[%s217 + $0x10] sm:$0xff]
        %1081 = vrot.lane.b32.xlu0 %v1079, 61
        %v1082 = vpop.permute.xlu0 %1081
        %1084 = vst.msk [vmem:[#allocation2 + $0x78] sm:$0xff] %vm287, %v1082
        %v1085 = vld [vmem:[%s217] sm:$0xff]
        %1087 = vrot.lane.b32.xlu0 %v1085, 90
        %v1088 = vpop.permute.xlu0 %1087
        %1090 = vst.msk [vmem:[#allocation2 + $0x80] sm:$0xff] %vm232, %v1088
        %v1091 = vld [vmem:[%s217] sm:$0xff]
        %1093 = vrot.lane.b32.xlu0 %v1091, 88
        %v1094 = vpop.permute.xlu0 %1093
        %1096 = vst.msk [vmem:[#allocation2 + $0x80] sm:$0xff] %vm239, %v1094
        %v1097 = vld [vmem:[%s217] sm:$0xff]
        %1099 = vrot.lane.b32.xlu0 %v1097, 86
        %v1100 = vpop.permute.xlu0 %1099
        %1102 = vst.msk [vmem:[#allocation2 + $0x80] sm:$0xff] %vm246, %v1100
        %v1103 = vld [vmem:[%s217] sm:$0xff]
        %1105 = vrot.lane.b32.xlu0 %v1103, 84
        %v1106 = vpop.permute.xlu0 %1105
        %1108 = vst.msk [vmem:[#allocation2 + $0x80] sm:$0xff] %vm253, %v1106
        %v1109 = vld [vmem:[%s217] sm:$0xff]
        %1111 = vrot.lane.b32.xlu0 %v1109, 82
        %v1112 = vpop.permute.xlu0 %1111
        %1114 = vst.msk [vmem:[#allocation2 + $0x80] sm:$0xff] %vm260, %v1112
        %v1115 = vld [vmem:[%s217 + $0x8] sm:$0xff]
        %1117 = vrot.lane.b32.xlu0 %v1115, 80
        %v1118 = vpop.permute.xlu0 %1117
        %1120 = vst.msk [vmem:[#allocation2 + $0x80] sm:$0xff] %vm267, %v1118
        %v1121 = vld [vmem:[%s217 + $0x8] sm:$0xff]
        %1123 = vrot.lane.b32.xlu0 %v1121, 78
        %v1124 = vpop.permute.xlu0 %1123
        %1126 = vst.msk [vmem:[#allocation2 + $0x80] sm:$0xff] %vm274, %v1124
        %v1127 = vld [vmem:[%s217 + $0x8] sm:$0xff]
        %1129 = vrot.lane.b32.xlu0 %v1127, 76
        %v1130 = vpop.permute.xlu0 %1129
        %1132 = vst.msk [vmem:[#allocation2 + $0x80] sm:$0xff] %vm287, %v1130
        %v1133 = vld [vmem:[%s217 + $0x8] sm:$0xff]
        %1135 = vrot.lane.b32.xlu0 %v1133, 74
        %v1136 = vpop.permute.xlu0 %1135
        %1138 = vst.msk [vmem:[#allocation2 + $0x88] sm:$0xff] %vm232, %v1136
        %v1139 = vld [vmem:[%s217 + $0x8] sm:$0xff]
        %1141 = vrot.lane.b32.xlu0 %v1139, 72
        %v1142 = vpop.permute.xlu0 %1141
        %1144 = vst.msk [vmem:[#allocation2 + $0x88] sm:$0xff] %vm239, %v1142
        %v1145 = vld [vmem:[%s217 + $0x8] sm:$0xff]
        %1147 = vrot.lane.b32.xlu0 %v1145, 70
        %v1148 = vpop.permute.xlu0 %1147
        %1150 = vst.msk [vmem:[#allocation2 + $0x88] sm:$0xff] %vm246, %v1148
        %v1151 = vld [vmem:[%s217 + $0x8] sm:$0xff]
        %1153 = vrot.lane.b32.xlu0 %v1151, 68
        %v1154 = vpop.permute.xlu0 %1153
        %1156 = vst.msk [vmem:[#allocation2 + $0x88] sm:$0xff] %vm253, %v1154
        %v1157 = vld [vmem:[%s217 + $0x8] sm:$0xff]
        %v1158 = vld [vmem:[%s217 + $0x10] sm:$0xff]
        %1161 = vrot.lane.b32.xlu0 %v1157, 66
        %v1162 = vpop.permute.xlu0 %1161
        %1163 = vrot.lane.b32.xlu0 %v1158, 66
        %v1164 = vpop.permute.xlu0 %1163
        %vm1165 = vcmask 539648
        %v1166 = vsel %vm1165, %v1162, %v1164
        %1168 = vst.msk [vmem:[#allocation2 + $0x88] sm:$0xff] %vm260, %v1166
        %v1169 = vld [vmem:[%s217 + $0x10] sm:$0xff]
        %1171 = vrot.lane.b32.xlu0 %v1169, 64
        %v1172 = vpop.permute.xlu0 %1171
        %1174 = vst.msk [vmem:[#allocation2 + $0x88] sm:$0xff] %vm267, %v1172
        %v1175 = vld [vmem:[%s217 + $0x10] sm:$0xff]
        %1177 = vrot.lane.b32.xlu0 %v1175, 62
        %v1178 = vpop.permute.xlu0 %1177
        %1180 = vst.msk [vmem:[#allocation2 + $0x88] sm:$0xff] %vm274, %v1178
        %v1181 = vld [vmem:[%s217 + $0x10] sm:$0xff]
        %1183 = vrot.lane.b32.xlu0 %v1181, 60
        %v1184 = vpop.permute.xlu0 %1183
        %1186 = vst.msk [vmem:[#allocation2 + $0x88] sm:$0xff] %vm287, %v1184
        %v1187 = vlaneseq
        %vm1188 = vcmp.ge.s32.totalorder %v1187, 0
        %vm1189 = vcmp.lt.s32.totalorder %v1187, 256
        %vm1190 = vmand %vm1188, %vm1189
        %s1191 = scalar_lea.vmem [#allocation2], 3
        %1192 = vst.msk [vmem:[%s1191] ss:$8 sm:$0x3] %vm1190, 1.0
        %1193 = vst.msk [vmem:[%s1191] ss:$8 sm:$0x0] %vm1190, 1.0
      $region36: #{film.1} parent=31 // pred_fallthru
        _
      %s1194 = smul.u32 %s19, 8
      %s1195 = scalar_lea.vmem %s2, %s1194
      %v1196 = vld [vmem:[%s1195] sm:$0xff]
      %v1197 = vld [vmem:[#allocation2] sm:$0xff]
      %v1198 = vld [vmem:[#allocation2 + $0x8] sm:$0xff]
      %v1199 = vld [vmem:[#allocation2 + $0x10] sm:$0xff]
      %v1200 = vld [vmem:[#allocation2 + $0x18] sm:$0xff]
      %v1201 = vld [vmem:[#allocation2 + $0x20] sm:$0xff]
      %v1202 = vld [vmem:[#allocation2 + $0x28] sm:$0xff]
      %v1203 = vld [vmem:[#allocation2 + $0x30] sm:$0xff]
      %v1204 = vld [vmem:[#allocation2 + $0x38] sm:$0xff]
      %v1205 = vld [vmem:[#allocation2 + $0x40] sm:$0xff]
      %v1206 = vld [vmem:[#allocation2 + $0x48] sm:$0xff]
      %v1207 = vld [vmem:[#allocation2 + $0x50] sm:$0xff]
      %v1208 = vld [vmem:[#allocation2 + $0x58] sm:$0xff]
      %v1209 = vld [vmem:[#allocation2 + $0x60] sm:$0xff]
      %v1210 = vld [vmem:[#allocation2 + $0x68] sm:$0xff]
      %v1211 = vld [vmem:[#allocation2 + $0x70] sm:$0xff]
      %v1212 = vld [vmem:[#allocation2 + $0x78] sm:$0xff]
      %v1213 = vld [vmem:[#allocation2 + $0x80] sm:$0xff]
      %v1214 = vld [vmem:[#allocation2 + $0x88] sm:$0xff]
      %vm1215 = vcmask 588800
      %v1217 = vsel %vm1215, %v1196, 0
      %1219 = vmatpush.msra.mxu0 0.0
      %1220 = vmatpush.msra.mxu0 0.0
      %1221 = vmatpush.msra.mxu0 0.0
      %1222 = vmatpush.msra.mxu0 0.0
      %1223 = vmatpush.msra.mxu0 0.0
      %1224 = vmatpush.msra.mxu0 0.0
      %1225 = vmatpush.msra.mxu0 0.0
      %1226 = vmatpush.msra.mxu0 %v1213
      %1227 = vmatpush.msra.mxu0 %v1211
      %1228 = vmatpush.msra.mxu0 %v1209
      %1229 = vmatpush.msra.mxu0 %v1207
      %1230 = vmatpush.msra.mxu0 %v1205
      %1231 = vmatpush.msra.mxu0 %v1203
      %1232 = vmatpush.msra.mxu0 %v1201
      %1233 = vmatpush.msra.mxu0 %v1199
      %1234 = vmatpush.msra.mxu0 %v1197
      %1235 = vmatmul.f32.gmra.mxu0 %v1217
      %v1236 = vpop.f32.mrf.mxu0
      %v1237 = vadd.f32 0.0, %v1236
      %1238 = vdwg.mxu0
      %1239 = vmatpush.msra.mxu0 0.0
      %1240 = vmatpush.msra.mxu0 0.0
      %1241 = vmatpush.msra.mxu0 0.0
      %1242 = vmatpush.msra.mxu0 0.0
      %1243 = vmatpush.msra.mxu0 0.0
      %1244 = vmatpush.msra.mxu0 0.0
      %1245 = vmatpush.msra.mxu0 0.0
      %1246 = vmatpush.msra.mxu0 %v1214
      %1247 = vmatpush.msra.mxu0 %v1212
      %1248 = vmatpush.msra.mxu0 %v1210
      %1249 = vmatpush.msra.mxu0 %v1208
      %1250 = vmatpush.msra.mxu0 %v1206
      %1251 = vmatpush.msra.mxu0 %v1204
      %1252 = vmatpush.msra.mxu0 %v1202
      %1253 = vmatpush.msra.mxu0 %v1200
      %1254 = vmatpush.msra.mxu0 %v1198
      %1255 = vmatmul.f32.gmra.mxu0 %v1217
      %v1256 = vpop.f32.mrf.mxu0
      %v1257 = vadd.f32 0.0, %v1256
      %1258 = vdwg.mxu0
      %v1259 = vld [vmem:[%s212] sm:$0xff]
      %v1262 = vrot.slane %v1257, 4
      %vm1263 = vcmask 1043456
      %v1264 = vsel %vm1263, %v1237, %v1262
      %v1266 = vmul.f32 %v1259, %v1264
      %1267 = vst.sshfl [vmem:[#allocation1] sm:$0xff pattern:$0x75316420] %v1237
      %1268 = vst.sshfl [vmem:[#allocation1 + $0x8] sm:$0xff pattern:$0x75316420] %v1257
      %s1269 = scalar_lea.vmem [#allocation1], 1
      %v1270 = vld [vmem:[%s1269] ss:$2 sm:$0xff]
      %v1272 = vadd.f32 %v1266, %v1270
      %1273 = vst [vmem:[%s226] sm:$0xff] %v1272
      %p1274 = scmp.lt.s32.totalorder %s18, 1
      %s1275 = scalar_select %p1274, %s18, 1
      %p1276 = scmp.lt.s32.totalorder %s19, 0
      %s1277 = scalar_select %p1276, %s19, 0
      %s1278 = smul.addr %s1277, 2
      %s1279 = smul.addr %s1275, 2
      %s1280 = sadd.s32 %s1278, %s1279
      %s1281 = smul.addr %s1280, 4
      %s1282 = scalar_lea.vmem %s3, %s1281
      // Predicated region
      $region37: #{film.1} parent=31 // pred_check
        %p1283 = pneg %p121
      $region38: #{film.1} parent=31 // pred_check_branch
        %1285 = sbr.rel (%p1283) target = $region40
      $region39: #{film.1} parent=31 // pred_region
        _
      $region40: #{film.1} parent=31 // pred_fallthru
        _
    $region32: #{film.1} parent=5 // pred_fallthru
      _
    %p1286 = scmp.le.s32.totalorder 2, %s9
    // Predicated region
    $region41: #{film.1} parent=5 // pred_check
      %p1287 = pneg %p1286
    $region42: #{film.1} parent=5 // pred_check_branch
      %1289 = sbr.rel (%p1287) target = $region44
    $region43: #{film.1} parent=5 // pred_region
      %s1290 = ssub.s32 %s9, 2
      // Predicated region
      $region45: #{film.1} parent=43 // pred_check
        %p1291 = pneg %p127
      $region46: #{film.1} parent=43 // pred_check_branch
        %1293 = sbr.rel (%p1291) target = $region48
      $region47: #{film.1} parent=43 // pred_region
        %p1294 = scmp.lt.s32.totalorder %s20, 1
        %s1295 = scalar_select %p1294, %s20, 1
        %p1296 = scmp.lt.s32.totalorder %s21, 0
        %s1297 = scalar_select %p1296, %s21, 0
        %s1298 = smul.addr %s1297, 2
        %s1299 = smul.addr %s1295, 2
        %s1300 = sadd.s32 %s1298, %s1299
        %s1301 = smul.addr %s1300, 4
        %s1302 = scalar_lea.vmem %s3, %s1301
      $region48: #{film.1} parent=43 // pred_fallthru
        _
    $region44: #{film.1} parent=5 // pred_fallthru
      _
  $region6: #{film.1} parent=0 // loop_footer
    %s13 = sadd.s32 1, %s9
  $region7: #{film.1} parent=0 // loop_footer_branch
    %8 = sbr.rel target = $region3
  $region8: #{film.1} parent=0 // loop_exit
    _

</llo_original>
